<compile_context>
chip_gen: v7x
topology: tpu7x:2x2x1
jax: 0.10.0
libtpu: 0.0.40
codegen_flags: <defaults>
</compile_context>

<pallas_src>
import functools

import jax
import jax.numpy as jnp
from jax.experimental import pallas as pl
from jax.experimental.pallas import tpu as pltpu

_LANE = 128


def _round_up(x, m):
    return (x + m - 1) // m * m


# ---------------------------------------------------------------------------
# kernel
# ---------------------------------------------------------------------------
def _conv_shift_output(src_ref, w_ref, out_rows, out_w, n_out):
    """3x3 conv as ONE matmul: kh-stacked LHS (K = 3*C) x kw-concatenated
    weights (N = 3*n_out); the three n_out column groups of the f32 result
    are combined with +0/+1/+2 width shifts ("shift the output")."""
    bt, _, wcols, c = src_ref.shape
    # kh slices are along a major axis -> cheap; channel concat is at
    # 128-aligned lane offsets -> free.
    lhs = jnp.concatenate(
        [src_ref[:, kh:kh + out_rows, :, :] for kh in range(3)], axis=-1)
    lhs = lhs.reshape(bt * out_rows * wcols, 3 * c)
    z = jnp.dot(lhs, w_ref[...], preferred_element_type=jnp.float32)
    z = z.reshape(bt, out_rows, wcols, 3 * n_out)
    return (z[:, :, 0:out_w, 0:n_out]
            + z[:, :, 1:out_w + 1, n_out:2 * n_out]
            + z[:, :, 2:out_w + 2, 2 * n_out:3 * n_out])


def _double_conv_kernel(x1_ref, w1_ref, s1_ref, b1_ref, w2_ref, s2_ref,
                        b2_ref, o_ref, mid_ref, *, conv1_mode, n_row_tiles):
    # x1_ref : conv1 input slab for this (batch tile, row tile)
    #          im2col mode : (bt, Ht+2, W1p, K1p)   bf16, 9 taps packed in K
    #          khstack mode: (bt, Ht+4, W2p, cin_p) bf16, spatially padded
    # w1_ref : (K1p, cout_p) or (3*cin_p, 3*cout_p) bf16
    # s1/b1  : (1, cout_p) f32 folded BN1 scale/bias (conv1 bias folded in)
    # w2_ref : (3*cout_p, 3*cout_p) bf16
    # s2/b2  : (1, cout_p) f32 folded BN2 scale/bias
    # o_ref  : (bt, Ht, W, cout_p) bf16, lane-dense
    # mid_ref: (bt, Ht+2, W2p, cout_p) bf16 scratch (padded intermediate)
    bt, ht, out_w, cout_p = o_ref.shape
    w2p = mid_ref.shape[2]
    r = pl.program_id(1)

    # ---- conv1 -> BN1 (eval, folded) -> ReLU ------------------------------
    if conv1_mode == "im2col":
        _, rows1, w1p, k1p = x1_ref.shape
        lhs = x1_ref[...].reshape(bt * rows1 * w1p, k1p)
        z = jnp.dot(lhs, w1_ref[...], preferred_element_type=jnp.float32)
        y1 = z.reshape(bt, rows1, w1p, cout_p)[:, :, 0:out_w, :]
    else:
        y1 = _conv_shift_output(x1_ref, w1_ref, ht + 2, out_w, cout_p)
    y1 = jnp.maximum(y1 * s1_ref[...] + b1_ref[...], 0.0)

    # Padded intermediate: interior + 1-px zero border (= conv2's padding=1).
    mid_ref[:, :, 1:out_w + 1, :] = y1.astype(mid_ref.dtype)
    # TODO(synk): the column zeroing is re-done every step; a once-per-core
    #             guard needs a reliably initialized flag (scratch is not
    #             zero-initialized), so keep the cheap per-step stores.
    mid_ref[:, :, 0:1, :] = jnp.zeros((bt, ht + 2, 1, cout_p), mid_ref.dtype)
    mid_ref[:, :, out_w + 1:w2p, :] = jnp.zeros(
        (bt, ht + 2, w2p - out_w - 1, cout_p), mid_ref.dtype)

    # Halo rows that fall outside the image are conv2's zero padding.
    @pl.when(r == 0)
    def _zero_top():
        mid_ref[:, 0:1, :, :] = jnp.zeros((bt, 1, w2p, cout_p), mid_ref.dtype)

    @pl.when(r == n_row_tiles - 1)
    def _zero_bottom():
        mid_ref[:, ht + 1:ht + 2, :, :] = jnp.zeros(
            (bt, 1, w2p, cout_p), mid_ref.dtype)

    # ---- conv2 -> BN2 (eval, folded) -> ReLU ------------------------------
    y2 = _conv_shift_output(mid_ref, w2_ref, ht, out_w, cout_p)
    y2 = jnp.maximum(y2 * s2_ref[...] + b2_ref[...], 0.0)
    o_ref[...] = y2.astype(o_ref.dtype)


# ---------------------------------------------------------------------------
# wrapper-side parameter / input preparation
# ---------------------------------------------------------------------------
def _fold_bn(conv_bias, gamma, beta, mean, var, cout_p, eps=1e-5):
    scale = gamma / jnp.sqrt(var + eps)
    bias = (conv_bias - mean) * scale + beta
    pad = cout_p - scale.shape[0]
    scale = jnp.pad(scale, (0, pad)).reshape(1, cout_p).astype(jnp.float32)
    bias = jnp.pad(bias, (0, pad)).reshape(1, cout_p).astype(jnp.float32)
    return scale, bias


def _prep_w_khstack(w_oihw, cin_p, cout_p):
    """(Cout, Cin, 3, 3) -> (3*cin_p, 3*cout_p); row = kh*cin_p + c,
    col = kw*cout_p + n (kh-stacked K, kw-concatenated N)."""
    cout, cin = w_oihw.shape[0], w_oihw.shape[1]
    w = jnp.transpose(w_oihw, (2, 1, 3, 0))            # (kh, Cin, kw, Cout)
    w = jnp.pad(w, ((0, 0), (0, cin_p - cin), (0, 0), (0, cout_p - cout)))
    return w.reshape(3 * cin_p, 3 * cout_p).astype(jnp.bfloat16)


def _prep_w_im2col(w_oihw, k1p, cout_p):
    """(Cout, Cin, 3, 3) -> (K1p, cout_p); row = (3*kh + kw)*Cin + c."""
    cout, cin = w_oihw.shape[0], w_oihw.shape[1]
    w = jnp.transpose(w_oihw, (2, 3, 1, 0)).reshape(9 * cin, cout)
    w = jnp.pad(w, ((0, k1p - 9 * cin), (0, cout_p - cout)))
    return w.astype(jnp.bfloat16)


def _vmem_limit_bytes():
    """Generation-aware VMEM limit: physical capacity minus headroom
    (~56 MiB on v7x's 64 MiB, ~112 MiB on v5e/v6e's 128 MiB)."""
    cap = 64 * 1024 * 1024                      # conservative default (v7x)
    try:
        info = pltpu.get_tpu_info()
        cap = int(getattr(info, "vmem_capacity_bytes", cap) or cap)
    except Exception:
        pass
    limit = cap - max(8 * 1024 * 1024, cap // 8)
    return max(limit, 32 * 1024 * 1024)


def _footprint(bt, ht, W, W1p, W2p, cin_p, k1p, cout_p, conv1_mode):
    """Per-grid-step VMEM estimate incl. weight blocks and matmul temps."""
    n3 = 3 * cout_p
    if conv1_mode == "im2col":
        in_blk = bt * (ht + 2) * W1p * k1p * 2
        c1_tmp = in_blk + bt * (ht + 2) * W1p * cout_p * 4
        w1_b = k1p * cout_p * 2
    else:
        in_blk = bt * (ht + 4) * W2p * cin_p * 2
        c1_tmp = bt * (ht + 2) * W2p * (3 * cin_p * 2 + n3 * 4)
        w1_b = 3 * cin_p * n3 * 2
    out_blk = bt * ht * W * cout_p * 2                  # bf16 output block
    mid = bt * (ht + 2) * W2p * cout_p * 2              # bf16 intermediate
    c2_tmp = bt * ht * W2p * (n3 * 2 + n3 * 4)          # conv2 LHS + result
    w_blocks = 2 * (w1_b + n3 * n3 * 2 + 4 * cout_p * 4)
    return 2 * in_blk + 2 * out_blk + mid + w_blocks + max(c1_tmp, c2_tmp)


def _pick_tiles(N, H, W, W1p, W2p, cin_p, k1p, cout_p, conv1_mode, budget):
    foot = functools.partial(_footprint, W=W, W1p=W1p, W2p=W2p, cin_p=cin_p,
                             k1p=k1p, cout_p=cout_p, conv1_mode=conv1_mode)
    h_divs = [d for d in range(H, 0, -1) if H % d == 0]
    ht = next((d for d in h_divs if foot(1, d) <= budget), h_divs[-1])
    n_divs = [d for d in range(N, 0, -1) if N % d == 0]
    bt = next((d for d in n_divs if foot(d, ht) <= budget), 1)
    # Make sure there are >= 2 grid steps so both TensorCores (v7x megacore)
    # get work; harmless elsewhere.
    if (N // bt) * (H // ht) < 2:
        smaller = [d for d in h_divs if d < ht]
        if smaller:
            ht = smaller[0]
    return bt, ht


# ---------------------------------------------------------------------------
# public entry point
# ---------------------------------------------------------------------------
def double_conv_pallas(x_nchw, params, *, return_padded_nhwc=False):
    """Pallas DoubleConv forward. x_nchw: (N, Cin, H, W) float32 (NCHW, as in
    the PyTorch module). return_padded_nhwc=True returns the kernel's native
    lane-dense (N, H, W, cout_p) bf16 output for chaining into more kernels."""
    N, Cin, H, W = x_nchw.shape
    Cout = params["w1"].shape[0]
    cin_p = _round_up(Cin, _LANE)
    cout_p = _round_up(Cout, _LANE)
    k1p = _round_up(9 * Cin, _LANE)
    # Small-Cin stem: pack all 9 taps along K (padded once to 128) instead of
    # padding Cin itself to 128.
    conv1_mode = "im2col" if k1p < 3 * cin_p else "khstack"
    W1p = _round_up(W, 8)            # keep reshapes (8,128)-tile aligned
    W2p = _round_up(W + 2, 8)

    vmem_limit = _vmem_limit_bytes()
    budget = vmem_limit // 2         # slack for Mosaic scratch / spills
    bt, ht = _pick_tiles(N, H, W, W1p, W2p, cin_p, k1p, cout_p, conv1_mode,
                         budget)
    nrt = H // ht

    # ---- input prep: NCHW -> NHWC, halo'd row-tile windows -----------------
    x = jnp.transpose(x_nchw, (0, 2, 3, 1))            # NHWC
    if conv1_mode == "im2col":
        xp = jnp.pad(x, ((0, 0), (2, 2), (1, 1), (0, 0)))
        taps = [xp[:, kh:kh + H + 2, kw:kw + W, :]
                for kh in range(3) for kw in range(3)]
        im = jnp.concatenate(taps, axis=-1)             # (N, H+2, W, 9*Cin)
        im = jnp.pad(im, ((0, 0), (0, 0), (0, W1p - W), (0, k1p - 9 * Cin)))
        x1 = jnp.stack([im[:, r * ht:r * ht + ht + 2] for r in range(nrt)],
                       axis=0).astype(jnp.bfloat16)     # (nrt,N,ht+2,W1p,k1p)
        w1 = _prep_w_im2col(params["w1"], k1p, cout_p)
    else:
        xp = jnp.pad(x, ((0, 0), (2, 2), (1, 1), (0, cin_p - Cin)))
        xp = jnp.pad(xp, ((0, 0), (0, 0), (0, W2p - (W + 2)), (0, 0)))
        x1 = jnp.stack([xp[:, r * ht:r * ht + ht + 4] for r in range(nrt)],
                       axis=0).astype(jnp.bfloat16)     # (nrt,N,ht+4,W2p,cin_p)
        w1 = _prep_w_khstack(params["w1"], cin_p, cout_p)

    w2 = _prep_w_khstack(params["w2"], cout_p, cout_p)
    s1, b1 = _fold_bn(params["b1"], params["bn1_gamma"], params["bn1_beta"],
                      params["bn1_mean"], params["bn1_var"], cout_p)
    s2, b2 = _fold_bn(params["b2"], params["bn2_gamma"], params["bn2_beta"],
                      params["bn2_mean"], params["bn2_var"], cout_p)

    x1_blk = (None, bt) + tuple(x1.shape[2:])
    kernel = functools.partial(_double_conv_kernel, conv1_mode=conv1_mode,
                               n_row_tiles=nrt)

    out_nhwc = pl.pallas_call(
        kernel,
        out_shape=jax.ShapeDtypeStruct((N, H, W, cout_p), jnp.bfloat16),
        grid=(N // bt, nrt),
        in_specs=[
            pl.BlockSpec(x1_blk, lambda n, r: (r, n, 0, 0, 0)),
            pl.BlockSpec(w1.shape, lambda n, r: (0, 0)),
            pl.BlockSpec((1, cout_p), lambda n, r: (0, 0)),
            pl.BlockSpec((1, cout_p), lambda n, r: (0, 0)),
            pl.BlockSpec(w2.shape, lambda n, r: (0, 0)),
            pl.BlockSpec((1, cout_p), lambda n, r: (0, 0)),
            pl.BlockSpec((1, cout_p), lambda n, r: (0, 0)),
        ],
        out_specs=pl.BlockSpec((bt, ht, W, cout_p), lambda n, r: (n, r, 0, 0)),
        scratch_shapes=[pltpu.VMEM((bt, ht + 2, W2p, cout_p), jnp.bfloat16)],
        compiler_params=pltpu.CompilerParams(
            dimension_semantics=("parallel", "parallel"),
            vmem_limit_bytes=vmem_limit),
    )(x1, w1, s1, b1, w2, s2, b2)

    if return_padded_nhwc:
        return out_nhwc
    # NCHW / f32 compatibility path (matches the PyTorch module's layout).
    return jnp.transpose(out_nhwc[..., :Cout], (0, 3, 1, 2)).astype(jnp.float32)


# ---------------------------------------------------------------------------
# pure-JAX reference + test
# ---------------------------------------------------------------------------
def double_conv_reference(x_nchw, params):
    """Pure-JAX f32 reference (same math, NHWC conv) for correctness."""
    x = jnp.transpose(x_nchw, (0, 2, 3, 1)).astype(jnp.float32)

    def conv_bn_relu(x, w_oihw, b, gamma, beta, mean, var):
        w_hwio = jnp.transpose(w_oihw, (2, 3, 1, 0))
        y = jax.lax.conv_general_dilated(
            x, w_hwio, window_strides=(1, 1), padding=((1, 1), (1, 1)),
            dimension_numbers=("NHWC", "HWIO", "NHWC"))
        y = y + b
        y = (y - mean) / jnp.sqrt(var + 1e-5) * gamma + beta
        return jnp.maximum(y, 0.0)

    y = conv_bn_relu(x, params["w1"], params["b1"], params["bn1_gamma"],
                     params["bn1_beta"], params["bn1_mean"], params["bn1_var"])
    y = conv_bn_relu(y, params["w2"], params["b2"], params["bn2_gamma"],
                     params["bn2_beta"], params["bn2_mean"], params["bn2_var"])
    return jnp.transpose(y, (0, 3, 1, 2))


def make_params(key, in_channels, out_channels):
    ks = jax.random.split(key, 4)
    f32 = jnp.float32
    co = out_channels
    return {
        "w1": 0.1 * jax.random.normal(ks[0], (co, in_channels, 3, 3), f32),
        "b1": 0.05 * jax.random.normal(ks[1], (co,), f32),
        "bn1_gamma": 0.8 + 0.05 * jnp.arange(co, dtype=f32),
        "bn1_beta": 0.01 * jnp.arange(co, dtype=f32),
        "bn1_mean": 0.02 * jnp.arange(co, dtype=f32),
        "bn1_var": 1.0 + 0.1 * jnp.arange(co, dtype=f32),
        "w2": 0.1 * jax.random.normal(ks[2], (co, co, 3, 3), f32),
        "b2": 0.05 * jax.random.normal(ks[3], (co,), f32),
        "bn2_gamma": 1.0 + 0.03 * jnp.arange(co, dtype=f32),
        "bn2_beta": -0.01 * jnp.arange(co, dtype=f32),
        "bn2_mean": 0.01 * jnp.arange(co, dtype=f32),
        "bn2_var": 0.9 + 0.05 * jnp.arange(co, dtype=f32),
    }


if __name__ == "__main__":
    key = jax.random.PRNGKey(0)
    k_x, k_p = jax.random.split(key)

    N, Cin, Cout, H, W = 2, 4, 8, 16, 16
    x = jax.random.normal(k_x, (N, Cin, H, W), jnp.float32)
    params = make_params(k_p, Cin, Cout)

    out = jax.block_until_ready(double_conv_pallas(x, params))
    ref = jax.block_until_ready(double_conv_reference(x, params))

    assert out.shape == (N, Cout, H, W), out.shape
    # bf16 matmul inputs / intermediate / output -> ~1e-2-level deviation.
    max_err = float(jnp.max(jnp.abs(out - ref)))
    assert jnp.allclose(out, ref, rtol=3e-2, atol=3e-2), max_err

    print("KERNEL_OK")
</pallas_src>

<mosaic_0001>
module attributes {stable_mosaic.version = 11 : i64} {
  func.func @_double_conv_kernel(%arg0: i32, %arg1: i32, %arg2: memref<1x2x10x16x128xbf16, #tpu.memory_space<vmem>>, %arg3: memref<128x128xbf16, #tpu.memory_space<vmem>>, %arg4: memref<1x128xf32, #tpu.memory_space<vmem>>, %arg5: memref<1x128xf32, #tpu.memory_space<vmem>>, %arg6: memref<384x384xbf16, #tpu.memory_space<vmem>>, %arg7: memref<1x128xf32, #tpu.memory_space<vmem>>, %arg8: memref<1x128xf32, #tpu.memory_space<vmem>>, %arg9: memref<2x8x16x128xbf16, #tpu.memory_space<vmem>>, %arg10: memref<2x10x24x128xbf16, #tpu.memory_space<vmem>>) attributes {dimension_semantics = [#tpu.dimension_semantics<parallel>, #tpu.dimension_semantics<parallel>], iteration_bounds = array<i64: 1, 2>, scalar_prefetch = 0 : i64, scratch_operands = 1 : i64, tpu.core_type = #tpu.core_type<tc>, window_params = [{transform_indices = @transform_0, window_bounds = array<i64: 1, 2, 10, 16, 128>}, {pipeline_mode = #tpu.pipeline_mode<synchronous>, transform_indices = @transform_1, window_bounds = array<i64: 128, 128>}, {pipeline_mode = #tpu.pipeline_mode<synchronous>, transform_indices = @transform_2, window_bounds = array<i64: 1, 128>}, {pipeline_mode = #tpu.pipeline_mode<synchronous>, transform_indices = @transform_3, window_bounds = array<i64: 1, 128>}, {pipeline_mode = #tpu.pipeline_mode<synchronous>, transform_indices = @transform_4, window_bounds = array<i64: 384, 384>}, {pipeline_mode = #tpu.pipeline_mode<synchronous>, transform_indices = @transform_5, window_bounds = array<i64: 1, 128>}, {pipeline_mode = #tpu.pipeline_mode<synchronous>, transform_indices = @transform_6, window_bounds = array<i64: 1, 128>}, {transform_indices = @transform_7, window_bounds = array<i64: 2, 8, 16, 128>}]} {
    %c0 = arith.constant 0 : index
    %c0_0 = arith.constant 0 : index
    %c0_1 = arith.constant 0 : index
    %c0_2 = arith.constant 0 : index
    %c0_3 = arith.constant 0 : index
    %0 = vector.load %arg2[%c0, %c0_0, %c0_1, %c0_2, %c0_3] : memref<1x2x10x16x128xbf16, #tpu.memory_space<vmem>>, vector<1x2x10x16x128xbf16>
    %1 = vector.shape_cast %0 : vector<1x2x10x16x128xbf16> to vector<2x10x16x128xbf16>
    %2 = vector.shape_cast %1 : vector<2x10x16x128xbf16> to vector<320x128xbf16>
    %c0_4 = arith.constant 0 : index
    %c0_5 = arith.constant 0 : index
    %3 = vector.load %arg3[%c0_4, %c0_5] : memref<128x128xbf16, #tpu.memory_space<vmem>>, vector<128x128xbf16>
    %cst = arith.constant dense<0.000000e+00> : vector<320x128xf32>
    %4 = tpu.matmul %2, %3, %cst {dimension_numbers = #tpu.dot_dimension_numbers<[1], [0], [0], [1], [0, 0, 1, 1], [], []>} : vector<320x128xbf16>, vector<128x128xbf16>, vector<320x128xf32> -> vector<320x128xf32>
    %5 = vector.shape_cast %4 : vector<320x128xf32> to vector<2x10x16x128xf32>
    %c0_6 = arith.constant 0 : index
    %c0_7 = arith.constant 0 : index
    %6 = vector.load %arg4[%c0_6, %c0_7] : memref<1x128xf32, #tpu.memory_space<vmem>>, vector<1x128xf32>
    %7 = vector.shape_cast %6 : vector<1x128xf32> to vector<1x1x1x128xf32>
    %8 = vector.broadcast %7 : vector<1x1x1x128xf32> to vector<2x10x16x128xf32>
    %9 = arith.mulf %5, %8 : vector<2x10x16x128xf32>
    %c0_8 = arith.constant 0 : index
    %c0_9 = arith.constant 0 : index
    %10 = vector.load %arg5[%c0_8, %c0_9] : memref<1x128xf32, #tpu.memory_space<vmem>>, vector<1x128xf32>
    %11 = vector.shape_cast %10 : vector<1x128xf32> to vector<1x1x1x128xf32>
    %12 = vector.broadcast %11 : vector<1x1x1x128xf32> to vector<2x10x16x128xf32>
    %13 = arith.addf %9, %12 : vector<2x10x16x128xf32>
    %cst_10 = arith.constant 0.000000e+00 : f32
    %14 = vector.broadcast %cst_10 : f32 to vector<2x10x16x128xf32>
    %15 = arith.maximumf %13, %14 : vector<2x10x16x128xf32>
    %16 = arith.truncf %15 : vector<2x10x16x128xf32> to vector<2x10x16x128xbf16>
    %c0_11 = arith.constant 0 : index
    %c0_12 = arith.constant 0 : index
    %c1 = arith.constant 1 : index
    %c0_13 = arith.constant 0 : index
    %17 = vector.load %arg10[%c0_11, %c0_12, %c1, %c0_13] : memref<2x10x24x128xbf16, #tpu.memory_space<vmem>>, vector<2x10x16x128xbf16>
    tpu.vector_store %arg10[%c0_11, %c0_12, %c1, %c0_13], %16 {strides = array<i32>} : memref<2x10x24x128xbf16, #tpu.memory_space<vmem>>, vector<2x10x16x128xbf16>,
    %cst_14 = arith.constant 0.000000e+00 : bf16
    %18 = vector.broadcast %cst_14 : bf16 to vector<2x10x1x128xbf16>
    %c0_15 = arith.constant 0 : index
    %c0_16 = arith.constant 0 : index
    %c0_17 = arith.constant 0 : index
    %c0_18 = arith.constant 0 : index
    %19 = vector.load %arg10[%c0_15, %c0_16, %c0_17, %c0_18] : memref<2x10x24x128xbf16, #tpu.memory_space<vmem>>, vector<2x10x1x128xbf16>
    tpu.vector_store %arg10[%c0_15, %c0_16, %c0_17, %c0_18], %18 {strides = array<i32>} : memref<2x10x24x128xbf16, #tpu.memory_space<vmem>>, vector<2x10x1x128xbf16>,
    %cst_19 = arith.constant 0.000000e+00 : bf16
    %20 = vector.broadcast %cst_19 : bf16 to vector<2x10x7x128xbf16>
    %c0_20 = arith.constant 0 : index
    %c0_21 = arith.constant 0 : index
    %c17 = arith.constant 17 : index
    %c0_22 = arith.constant 0 : index
    %21 = vector.load %arg10[%c0_20, %c0_21, %c17, %c0_22] : memref<2x10x24x128xbf16, #tpu.memory_space<vmem>>, vector<2x10x7x128xbf16>
    tpu.vector_store %arg10[%c0_20, %c0_21, %c17, %c0_22], %20 {strides = array<i32>} : memref<2x10x24x128xbf16, #tpu.memory_space<vmem>>, vector<2x10x7x128xbf16>,
    %c0_i32 = arith.constant 0 : i32
    %22 = arith.cmpi eq, %arg1, %c0_i32 : i32
    %23 = arith.extui %22 : i1 to i32
    %c0_i32_23 = arith.constant 0 : i32
    %24 = arith.cmpi ne, %23, %c0_i32_23 : i32
    scf.if %24 {
      %cst_48 = arith.constant 0.000000e+00 : bf16
      %53 = vector.broadcast %cst_48 : bf16 to vector<2x1x24x128xbf16>
      %c0_49 = arith.constant 0 : index
      %c0_50 = arith.constant 0 : index
      %c0_51 = arith.constant 0 : index
      %c0_52 = arith.constant 0 : index
      %54 = vector.load %arg10[%c0_49, %c0_50, %c0_51, %c0_52] : memref<2x10x24x128xbf16, #tpu.memory_space<vmem>>, vector<2x1x24x128xbf16>
      tpu.vector_store %arg10[%c0_49, %c0_50, %c0_51, %c0_52], %53 {strides = array<i32>} : memref<2x10x24x128xbf16, #tpu.memory_space<vmem>>, vector<2x1x24x128xbf16>,
    } else {
    }
    %c1_i32 = arith.constant 1 : i32
    %25 = arith.cmpi eq, %arg1, %c1_i32 : i32
    %26 = arith.extui %25 : i1 to i32
    %c0_i32_24 = arith.constant 0 : i32
    %27 = arith.cmpi ne, %26, %c0_i32_24 : i32
    scf.if %27 {
      %cst_48 = arith.constant 0.000000e+00 : bf16
      %53 = vector.broadcast %cst_48 : bf16 to vector<2x1x24x128xbf16>
      %c0_49 = arith.constant 0 : index
      %c9 = arith.constant 9 : index
      %c0_50 = arith.constant 0 : index
      %c0_51 = arith.constant 0 : index
      %54 = vector.load %arg10[%c0_49, %c9, %c0_50, %c0_51] : memref<2x10x24x128xbf16, #tpu.memory_space<vmem>>, vector<2x1x24x128xbf16>
      tpu.vector_store %arg10[%c0_49, %c9, %c0_50, %c0_51], %53 {strides = array<i32>} : memref<2x10x24x128xbf16, #tpu.memory_space<vmem>>, vector<2x1x24x128xbf16>,
    } else {
    }
    %c0_25 = arith.constant 0 : index
    %c0_26 = arith.constant 0 : index
    %c0_27 = arith.constant 0 : index
    %c0_28 = arith.constant 0 : index
    %28 = vector.load %arg10[%c0_25, %c0_26, %c0_27, %c0_28] : memref<2x10x24x128xbf16, #tpu.memory_space<vmem>>, vector<2x8x24x128xbf16>
    %c0_29 = arith.constant 0 : index
    %c1_30 = arith.constant 1 : index
    %c0_31 = arith.constant 0 : index
    %c0_32 = arith.constant 0 : index
    %29 = vector.load %arg10[%c0_29, %c1_30, %c0_31, %c0_32] : memref<2x10x24x128xbf16, #tpu.memory_space<vmem>>, vector<2x8x24x128xbf16>
    %c0_33 = arith.constant 0 : index
    %c2 = arith.constant 2 : index
    %c0_34 = arith.constant 0 : index
    %c0_35 = arith.constant 0 : index
    %30 = vector.load %arg10[%c0_33, %c2, %c0_34, %c0_35] : memref<2x10x24x128xbf16, #tpu.memory_space<vmem>>, vector<2x8x24x128xbf16>
    %31 = tpu.concatenate %28, %29, %30 in 3 : vector<2x8x24x128xbf16>, vector<2x8x24x128xbf16>, vector<2x8x24x128xbf16> -> vector<2x8x24x384xbf16>
    %32 = vector.shape_cast %31 : vector<2x8x24x384xbf16> to vector<384x384xbf16>
    %c0_36 = arith.constant 0 : index
    %c0_37 = arith.constant 0 : index
    %33 = vector.load %arg6[%c0_36, %c0_37] : memref<384x384xbf16, #tpu.memory_space<vmem>>, vector<384x384xbf16>
    %cst_38 = arith.constant dense<0.000000e+00> : vector<384x384xf32>
    %34 = tpu.matmul %32, %33, %cst_38 {dimension_numbers = #tpu.dot_dimension_numbers<[1], [0], [0], [1], [0, 0, 1, 1], [], []>} : vector<384x384xbf16>, vector<384x384xbf16>, vector<384x384xf32> -> vector<384x384xf32>
    %35 = vector.shape_cast %34 : vector<384x384xf32> to vector<2x8x24x384xf32>
    %36 = vector.extract_strided_slice %35 {offsets = [0, 0, 0, 0], sizes = [2, 8, 16, 128], strides = [1, 1, 1, 1]} : vector<2x8x24x384xf32> to vector<2x8x16x128xf32>
    %37 = vector.extract_strided_slice %35 {offsets = [0, 0, 1, 128], sizes = [2, 8, 16, 128], strides = [1, 1, 1, 1]} : vector<2x8x24x384xf32> to vector<2x8x16x128xf32>
    %38 = arith.addf %36, %37 : vector<2x8x16x128xf32>
    %39 = vector.extract_strided_slice %35 {offsets = [0, 0, 2, 256], sizes = [2, 8, 16, 128], strides = [1, 1, 1, 1]} : vector<2x8x24x384xf32> to vector<2x8x16x128xf32>
    %40 = arith.addf %38, %39 : vector<2x8x16x128xf32>
    %c0_39 = arith.constant 0 : index
    %c0_40 = arith.constant 0 : index
    %41 = vector.load %arg7[%c0_39, %c0_40] : memref<1x128xf32, #tpu.memory_space<vmem>>, vector<1x128xf32>
    %42 = vector.shape_cast %41 : vector<1x128xf32> to vector<1x1x1x128xf32>
    %43 = vector.broadcast %42 : vector<1x1x1x128xf32> to vector<2x8x16x128xf32>
    %44 = arith.mulf %40, %43 : vector<2x8x16x128xf32>
    %c0_41 = arith.constant 0 : index
    %c0_42 = arith.constant 0 : index
    %45 = vector.load %arg8[%c0_41, %c0_42] : memref<1x128xf32, #tpu.memory_space<vmem>>, vector<1x128xf32>
    %46 = vector.shape_cast %45 : vector<1x128xf32> to vector<1x1x1x128xf32>
    %47 = vector.broadcast %46 : vector<1x1x1x128xf32> to vector<2x8x16x128xf32>
    %48 = arith.addf %44, %47 : vector<2x8x16x128xf32>
    %cst_43 = arith.constant 0.000000e+00 : f32
    %49 = vector.broadcast %cst_43 : f32 to vector<2x8x16x128xf32>
    %50 = arith.maximumf %48, %49 : vector<2x8x16x128xf32>
    %51 = arith.truncf %50 : vector<2x8x16x128xf32> to vector<2x8x16x128xbf16>
    %c0_44 = arith.constant 0 : index
    %c0_45 = arith.constant 0 : index
    %c0_46 = arith.constant 0 : index
    %c0_47 = arith.constant 0 : index
    %52 = vector.load %arg9[%c0_44, %c0_45, %c0_46, %c0_47] : memref<2x8x16x128xbf16, #tpu.memory_space<vmem>>, vector<2x8x16x128xbf16>
    tpu.vector_store %arg9[%c0_44, %c0_45, %c0_46, %c0_47], %51 {strides = array<i32>} : memref<2x8x16x128xbf16, #tpu.memory_space<vmem>>, vector<2x8x16x128xbf16>,
    return
  }
  func.func @transform_0(%arg0: i32, %arg1: i32) -> (i32, i32, i32, i32, i32) {
    %c0_i32 = arith.constant 0 : i32
    %c0_i32_0 = arith.constant 0 : i32
    %c0_i32_1 = arith.constant 0 : i32
    %c0_i32_2 = arith.constant 0 : i32
    return %arg1, %arg0, %c0_i32, %c0_i32_0, %c0_i32_1 : i32, i32, i32, i32, i32
  }
  func.func @transform_1(%arg0: i32, %arg1: i32) -> (i32, i32) {
    %c0_i32 = arith.constant 0 : i32
    %c0_i32_0 = arith.constant 0 : i32
    %c0_i32_1 = arith.constant 0 : i32
    return %c0_i32, %c0_i32_0 : i32, i32
  }
  func.func @transform_2(%arg0: i32, %arg1: i32) -> (i32, i32) {
    %c0_i32 = arith.constant 0 : i32
    %c0_i32_0 = arith.constant 0 : i32
    %c0_i32_1 = arith.constant 0 : i32
    return %c0_i32, %c0_i32_0 : i32, i32
  }
  func.func @transform_3(%arg0: i32, %arg1: i32) -> (i32, i32) {
    %c0_i32 = arith.constant 0 : i32
    %c0_i32_0 = arith.constant 0 : i32
    %c0_i32_1 = arith.constant 0 : i32
    return %c0_i32, %c0_i32_0 : i32, i32
  }
  func.func @transform_4(%arg0: i32, %arg1: i32) -> (i32, i32) {
    %c0_i32 = arith.constant 0 : i32
    %c0_i32_0 = arith.constant 0 : i32
    %c0_i32_1 = arith.constant 0 : i32
    return %c0_i32, %c0_i32_0 : i32, i32
  }
  func.func @transform_5(%arg0: i32, %arg1: i32) -> (i32, i32) {
    %c0_i32 = arith.constant 0 : i32
    %c0_i32_0 = arith.constant 0 : i32
    %c0_i32_1 = arith.constant 0 : i32
    return %c0_i32, %c0_i32_0 : i32, i32
  }
  func.func @transform_6(%arg0: i32, %arg1: i32) -> (i32, i32) {
    %c0_i32 = arith.constant 0 : i32
    %c0_i32_0 = arith.constant 0 : i32
    %c0_i32_1 = arith.constant 0 : i32
    return %c0_i32, %c0_i32_0 : i32, i32
  }
  func.func @transform_7(%arg0: i32, %arg1: i32) -> (i32, i32, i32, i32) {
    %c0_i32 = arith.constant 0 : i32
    %c0_i32_0 = arith.constant 0 : i32
    %c0_i32_1 = arith.constant 0 : i32
    return %arg0, %arg1, %c0_i32, %c0_i32_0 : i32, i32, i32, i32
  }
}

</mosaic_0001>

<llo_original>
// kernel: tpu_custom_call.1
$region0: #{tpu_custom_call.1}
  #allocation0 [shape = 'u32[]', space=smem, size = 0x4, offset = 0x4, fixed_abs, tag = 'smem constant byte address 0x4 - core index']
  #allocation1 [shape = 'u32[144,128]{1,0:T(1,128)}', space=vmem, size = 0x12000, scoped, tag = 'internal scratch']
  #allocation2 [shape = 'bf16[2,10,24,128]{3,2,1,0:T(8,128)(2,1)}', space=vmem, size = 0x1e000, scoped, tag = 'scratch operand']
  #allocation10 [shape = 's32[]', space=sflag, size = 0x4, offset = 0, fixed_abs, tag = 'sflag constant byte address 0x0 - dummy sync flag']
  %s0 = inlined_call_operand.hbm [shape: bf16[2,2,10,16,128], index: 0, kind: input, shape index: {}]
  %s1 = inlined_call_operand.hbm [shape: bf16[128,128], index: 1, kind: input, shape index: {}]
  %s2 = inlined_call_operand.vmem [shape: f32[1,128], index: 2, kind: input, shape index: {}]
  %s3 = inlined_call_operand.vmem [shape: f32[1,128], index: 3, kind: input, shape index: {}]
  %s4 = inlined_call_operand.hbm [shape: bf16[384,384], index: 4, kind: input, shape index: {}]
  %s5 = inlined_call_operand.vmem [shape: f32[1,128], index: 5, kind: input, shape index: {}]
  %s6 = inlined_call_operand.vmem [shape: f32[1,128], index: 6, kind: input, shape index: {}]
  %s7 = inlined_call_operand.hbm [shape: bf16[2,16,16,128], index: 7, kind: output, shape index: {}]
  %s8 = sld [smem:[#allocation0]]
  $region81: #{tpu_custom_call.1} parent=0
    _
  %s10 = ssub.s32 1, %s8
  %s11 = scalar_select 0, %s10, %s8
  $region1: #{tpu_custom_call.1} parent=0
    #allocation3 [shape = 'u8[163840]{0}', space=vmem, size = 0x28000, scoped, tag = 'input window, operand 0']
    #allocation4 [shape = 's32[2]{0}', space=sflag, size = 0x8, scoped, tag = 'scoped memory for tpu_custom_call.1']
    #allocation5 [shape = 's32[2]{0}', space=sflag, size = 0x8, scoped, tag = 'scoped memory for tpu_custom_call.1']
    #allocation6 [shape = 'u8[32768]{0}', space=vmem, size = 0x8000, scoped, tag = 'input window, operand 1, single buffered']
    #allocation7 [shape = 's32[1]{0}', space=sflag, size = 0x4, scoped, tag = 'scoped memory for tpu_custom_call.1']
    #allocation8 [shape = 'u8[294912]{0}', space=vmem, size = 0x48000, scoped, tag = 'input window, operand 4, single buffered']
    #allocation9 [shape = 'u8[131072]{0}', space=vmem, size = 0x20000, scoped, tag = 'output window, operand 0']
    %12 = vsyncpa [#allocation4], 0
    %s13 = scalar_lea.sflag [#allocation4], 1
    %14 = vsyncpa %s13, 0
    %15 = vsyncpa [#allocation7], 0
    %16 = vsyncpa [#allocation5], 0
    %s17 = scalar_lea.sflag [#allocation5], 1
    %18 = vsyncpa %s17, 0
    loop: start=0, step=1, limit=4
    $region2: #{tpu_custom_call.1} parent=1 // loop_pre_header
      _
    $region3: #{tpu_custom_call.1} parent=1 // loop_header
      %s20 = sphi 0, %s24
      %p21 = scmp.ge.s32.totalorder %s20, 4
      %s27 = sphi 0, %s39
      %s28 = sphi 0, %s35
      %s29 = sphi 0, %s27
      %s30 = sphi 0, %s28
      %s31 = sphi 0, %s29
      %s32 = sphi 0, %s30
      %s44 = sphi 0, %s46
      %s47 = sphi 0, %s44
      %s48 = sphi 0, %s47
      %s64 = sphi 0, %s48
      %s68 = sphi 0, %s68
      %s70 = sphi 0, %s68
      %s71 = sphi 0, %s70
      %s85 = sphi 0, %s71
      %s89 = sphi 0, %s89
      %s91 = sphi 0, %s89
      %s92 = sphi 0, %s91
      %s106 = sphi 0, %s92
      %s110 = sphi 0, %s110
      %s112 = sphi 0, %s110
      %s113 = sphi 0, %s112
      %s127 = sphi 0, %s113
      %s131 = sphi 0, %s131
      %s133 = sphi 0, %s131
      %s134 = sphi 0, %s133
      %s148 = sphi 0, %s134
      %s152 = sphi 0, %s152
      %s154 = sphi 0, %s152
      %s155 = sphi 0, %s154
      %s169 = sphi 0, %s155
      %s173 = sphi 0, %s173
      %s175 = sphi 0, %s173
      %s176 = sphi 0, %s175
      %s190 = sphi 0, %s176
      %s198 = sphi 0, %s200
      %s201 = sphi 0, %s198
      %s202 = sphi 0, %s201
      %s218 = sphi 0, %s202
    $region4: #{tpu_custom_call.1} parent=1 // loop_header_branch
      %23 = sbr.rel (%p21) target = $region8
    $region5: #{tpu_custom_call.1} parent=1 // loop_body
      %s25 = ssub.s32 %s20, 1
      %s26 = ssub.s32 %s20, 2
      %s33 = sadd.s32 1, %s28
      %p34 = scmp.ge.s32.totalorder %s33, 2
      %s35 = scalar_select %p34, 0, %s33
      %s36 = sadd.s32 1, %s27
      %s37 = scalar_select %p34, %s36, %s27
      %p38 = scmp.ge.s32.totalorder %s37, 1
      %s39 = scalar_select %p38, 0, %s37
      %s40 = ssub.s32 %s28, %s35
      %s41 = ssub.s32 %s27, %s39
      %s42 = sor.u32 %s40, %s41
      %p43 = scmp.eq.s32.totalorder %s42, 0
      %s45 = sadd.s32 %s44, 1
      %s46 = scalar_select %p43, %s44, %s45
      %p49 = pneg %p43
      %p50 = scmp.eq.s32.totalorder %s20, 1
      %p51 = por %p49, %p50
      %p52 = scmp.ne.s32.totalorder %s44, %s47
      %p53 = scmp.eq.s32.totalorder %s20, 0
      %p54 = por %p52, %p53
      %p55 = scmp.ne.s32.totalorder %s44, %s47
      %p56 = scmp.eq.s32.totalorder %s25, 1
      %p57 = por %p55, %p56
      %p58 = scmp.ne.s32.totalorder %s47, %s48
      %p59 = scmp.eq.s32.totalorder %s25, 0
      %p60 = por %p58, %p59
      %p61 = scmp.ne.s32.totalorder %s47, %s48
      %p62 = scmp.eq.s32.totalorder %s26, 1
      %p63 = por %p61, %p62
      %p65 = scmp.ne.s32.totalorder %s48, %s64
      %p66 = scmp.eq.s32.totalorder %s26, 0
      %p67 = por %p65, %p66
      %s69 = sadd.s32 %s68, 1
      %p72 = scmp.eq.s32.totalorder %s20, 1
      %p73 = scmp.ne.s32.totalorder %s68, %s70
      %p74 = scmp.eq.s32.totalorder %s20, 0
      %p75 = por %p73, %p74
      %p76 = scmp.ne.s32.totalorder %s68, %s70
      %p77 = scmp.eq.s32.totalorder %s25, 1
      %p78 = por %p76, %p77
      %p79 = scmp.ne.s32.totalorder %s70, %s71
      %p80 = scmp.eq.s32.totalorder %s25, 0
      %p81 = por %p79, %p80
      %p82 = scmp.ne.s32.totalorder %s70, %s71
      %p83 = scmp.eq.s32.totalorder %s26, 1
      %p84 = por %p82, %p83
      %p86 = scmp.ne.s32.totalorder %s71, %s85
      %p87 = scmp.eq.s32.totalorder %s26, 0
      %p88 = por %p86, %p87
      %s90 = sadd.s32 %s89, 1
      %p93 = scmp.eq.s32.totalorder %s20, 1
      %p94 = scmp.ne.s32.totalorder %s89, %s91
      %p95 = scmp.eq.s32.totalorder %s20, 0
      %p96 = por %p94, %p95
      %p97 = scmp.ne.s32.totalorder %s89, %s91
      %p98 = scmp.eq.s32.totalorder %s25, 1
      %p99 = por %p97, %p98
      %p100 = scmp.ne.s32.totalorder %s91, %s92
      %p101 = scmp.eq.s32.totalorder %s25, 0
      %p102 = por %p100, %p101
      %p103 = scmp.ne.s32.totalorder %s91, %s92
      %p104 = scmp.eq.s32.totalorder %s26, 1
      %p105 = por %p103, %p104
      %p107 = scmp.ne.s32.totalorder %s92, %s106
      %p108 = scmp.eq.s32.totalorder %s26, 0
      %p109 = por %p107, %p108
      %s111 = sadd.s32 %s110, 1
      %p114 = scmp.eq.s32.totalorder %s20, 1
      %p115 = scmp.ne.s32.totalorder %s110, %s112
      %p116 = scmp.eq.s32.totalorder %s20, 0
      %p117 = por %p115, %p116
      %p118 = scmp.ne.s32.totalorder %s110, %s112
      %p119 = scmp.eq.s32.totalorder %s25, 1
      %p120 = por %p118, %p119
      %p121 = scmp.ne.s32.totalorder %s112, %s113
      %p122 = scmp.eq.s32.totalorder %s25, 0
      %p123 = por %p121, %p122
      %p124 = scmp.ne.s32.totalorder %s112, %s113
      %p125 = scmp.eq.s32.totalorder %s26, 1
      %p126 = por %p124, %p125
      %p128 = scmp.ne.s32.totalorder %s113, %s127
      %p129 = scmp.eq.s32.totalorder %s26, 0
      %p130 = por %p128, %p129
      %s132 = sadd.s32 %s131, 1
      %p135 = scmp.eq.s32.totalorder %s20, 1
      %p136 = scmp.ne.s32.totalorder %s131, %s133
      %p137 = scmp.eq.s32.totalorder %s20, 0
      %p138 = por %p136, %p137
      %p139 = scmp.ne.s32.totalorder %s131, %s133
      %p140 = scmp.eq.s32.totalorder %s25, 1
      %p141 = por %p139, %p140
      %p142 = scmp.ne.s32.totalorder %s133, %s134
      %p143 = scmp.eq.s32.totalorder %s25, 0
      %p144 = por %p142, %p143
      %p145 = scmp.ne.s32.totalorder %s133, %s134
      %p146 = scmp.eq.s32.totalorder %s26, 1
      %p147 = por %p145, %p146
      %p149 = scmp.ne.s32.totalorder %s134, %s148
      %p150 = scmp.eq.s32.totalorder %s26, 0
      %p151 = por %p149, %p150
      %s153 = sadd.s32 %s152, 1
      %p156 = scmp.eq.s32.totalorder %s20, 1
      %p157 = scmp.ne.s32.totalorder %s152, %s154
      %p158 = scmp.eq.s32.totalorder %s20, 0
      %p159 = por %p157, %p158
      %p160 = scmp.ne.s32.totalorder %s152, %s154
      %p161 = scmp.eq.s32.totalorder %s25, 1
      %p162 = por %p160, %p161
      %p163 = scmp.ne.s32.totalorder %s154, %s155
      %p164 = scmp.eq.s32.totalorder %s25, 0
      %p165 = por %p163, %p164
      %p166 = scmp.ne.s32.totalorder %s154, %s155
      %p167 = scmp.eq.s32.totalorder %s26, 1
      %p168 = por %p166, %p167
      %p170 = scmp.ne.s32.totalorder %s155, %s169
      %p171 = scmp.eq.s32.totalorder %s26, 0
      %p172 = por %p170, %p171
      %s174 = sadd.s32 %s173, 1
      %p177 = scmp.eq.s32.totalorder %s20, 1
      %p178 = scmp.ne.s32.totalorder %s173, %s175
      %p179 = scmp.eq.s32.totalorder %s20, 0
      %p180 = por %p178, %p179
      %p181 = scmp.ne.s32.totalorder %s173, %s175
      %p182 = scmp.eq.s32.totalorder %s25, 1
      %p183 = por %p181, %p182
      %p184 = scmp.ne.s32.totalorder %s175, %s176
      %p185 = scmp.eq.s32.totalorder %s25, 0
      %p186 = por %p184, %p185
      %p187 = scmp.ne.s32.totalorder %s175, %s176
      %p188 = scmp.eq.s32.totalorder %s26, 1
      %p189 = por %p187, %p188
      %p191 = scmp.ne.s32.totalorder %s176, %s190
      %p192 = scmp.eq.s32.totalorder %s26, 0
      %p193 = por %p191, %p192
      %s194 = ssub.s32 %s27, %s39
      %s195 = ssub.s32 %s28, %s35
      %s196 = sor.u32 %s194, %s195
      %p197 = scmp.eq.s32.totalorder %s196, 0
      %s199 = sadd.s32 %s198, 1
      %s200 = scalar_select %p197, %s198, %s199
      %p203 = pneg %p197
      %p204 = scmp.eq.s32.totalorder %s20, 1
      %p205 = por %p203, %p204
      %p206 = scmp.ne.s32.totalorder %s198, %s201
      %p207 = scmp.eq.s32.totalorder %s20, 0
      %p208 = por %p206, %p207
      %p209 = scmp.ne.s32.totalorder %s198, %s201
      %p210 = scmp.eq.s32.totalorder %s25, 1
      %p211 = por %p209, %p210
      %p212 = scmp.ne.s32.totalorder %s201, %s202
      %p213 = scmp.eq.s32.totalorder %s25, 0
      %p214 = por %p212, %p213
      %p215 = scmp.ne.s32.totalorder %s201, %s202
      %p216 = scmp.eq.s32.totalorder %s26, 1
      %p217 = por %p215, %p216
      %p219 = scmp.ne.s32.totalorder %s202, %s218
      %p220 = scmp.eq.s32.totalorder %s26, 0
      %p221 = por %p219, %p220
      %p222 = scmp.le.s32.totalorder 1, %s20
      %p223 = scmp.lt.s32.totalorder %s20, 3
      %p224 = pnand %p222, %p223
      %p225 = pneg %p224
      // Predicated region
      $region9: #{tpu_custom_call.1} parent=5 // pred_check
        _
      $region10: #{tpu_custom_call.1} parent=5 // pred_check_branch
        %227 = sbr.rel (%p224) target = $region12
      $region11: #{tpu_custom_call.1} parent=5 // pred_region
        %s228 = ssub.s32 %s20, 1
        // Predicated region
        $region13: #{tpu_custom_call.1} parent=11 // pred_check
          %p229 = pneg %p81
        $region14: #{tpu_custom_call.1} parent=11 // pred_check_branch
          %231 = sbr.rel (%p229) target = $region16
        $region15: #{tpu_custom_call.1} parent=11 // pred_region
          %s233 = ssub.s32 1024, 1024
          %234 = vsyncadd [#allocation7], %s233
          %s235 = sshll.u32 [#allocation6], 4
          %s236 = int_to_ptr.vmem [resolvable:$true] %s235
          %241 = dma.hbm_to_vmem [thread:$0]  %s1, 1024, %s236, [#allocation7], 64, 64, 4
        $region16: #{tpu_custom_call.1} parent=11 // pred_fallthru
          _
        // Predicated region
        $region17: #{tpu_custom_call.1} parent=11 // pred_check
          %p242 = pneg %p102
        $region18: #{tpu_custom_call.1} parent=11 // pred_check_branch
          %244 = sbr.rel (%p242) target = $region20
        $region19: #{tpu_custom_call.1} parent=11 // pred_region
          _
        $region20: #{tpu_custom_call.1} parent=11 // pred_fallthru
          _
        // Predicated region
        $region21: #{tpu_custom_call.1} parent=11 // pred_check
          %p245 = pneg %p123
        $region22: #{tpu_custom_call.1} parent=11 // pred_check_branch
          %247 = sbr.rel (%p245) target = $region24
        $region23: #{tpu_custom_call.1} parent=11 // pred_region
          _
        $region24: #{tpu_custom_call.1} parent=11 // pred_fallthru
          _
        // Predicated region
        $region25: #{tpu_custom_call.1} parent=11 // pred_check
          %p248 = pneg %p144
        $region26: #{tpu_custom_call.1} parent=11 // pred_check_branch
          %250 = sbr.rel (%p248) target = $region28
        $region27: #{tpu_custom_call.1} parent=11 // pred_region
          %s252 = ssub.s32 9216, 9216
          %253 = vsyncadd [#allocation7], %s252
          %s254 = sshll.u32 [#allocation8], 4
          %s255 = int_to_ptr.vmem [resolvable:$true] %s254
          %260 = dma.hbm_to_vmem [thread:$0]  %s4, 9216, %s255, [#allocation7], 192, 192, 12
        $region28: #{tpu_custom_call.1} parent=11 // pred_fallthru
          _
        // Predicated region
        $region29: #{tpu_custom_call.1} parent=11 // pred_check
          %p261 = pneg %p165
        $region30: #{tpu_custom_call.1} parent=11 // pred_check_branch
          %263 = sbr.rel (%p261) target = $region32
        $region31: #{tpu_custom_call.1} parent=11 // pred_region
          _
        $region32: #{tpu_custom_call.1} parent=11 // pred_fallthru
          _
        // Predicated region
        $region33: #{tpu_custom_call.1} parent=11 // pred_check
          %p264 = pneg %p186
        $region34: #{tpu_custom_call.1} parent=11 // pred_check_branch
          %266 = sbr.rel (%p264) target = $region36
        $region35: #{tpu_custom_call.1} parent=11 // pred_region
          _
        $region36: #{tpu_custom_call.1} parent=11 // pred_fallthru
          _
      $region12: #{tpu_custom_call.1} parent=5 // pred_fallthru
        _
      %p267 = scmp.lt.s32.totalorder %s20, 2
      // Predicated region
      $region37: #{tpu_custom_call.1} parent=5 // pred_check
        %p268 = pneg %p267
      $region38: #{tpu_custom_call.1} parent=5 // pred_check_branch
        %270 = sbr.rel (%p268) target = $region40
      $region39: #{tpu_custom_call.1} parent=5 // pred_region
        // Predicated region
        $region41: #{tpu_custom_call.1} parent=39 // pred_check
          %p271 = pneg %p54
        $region42: #{tpu_custom_call.1} parent=39 // pred_check_branch
          %273 = sbr.rel (%p271) target = $region44
        $region43: #{tpu_custom_call.1} parent=39 // pred_region
          %s274 = sand.u32 %s44, 1
          %s275 = scalar_lea.sflag [#allocation4], %s274
          %s276 = sand.u32 %s44, 1
          %s277 = smul.addr %s276, 160
          %s278 = scalar_lea.vmem [#allocation3], %s277
          %s279 = smul.u32 2, %s27
          %s281 = ssub.s32 2560, 2560
          %282 = vsyncadd %s275, %s281
          %s283 = smul.addr %s279, 20
          %s284 = smul.addr %s28, 40
          %s285 = sadd.s32 %s283, %s284
          %s286 = smul.addr %s285, 64
          %s287 = scalar_lea.hbm %s0, %s286
          %s288 = sshll.u32 %s278, 4
          %s289 = int_to_ptr.vmem [resolvable:$true] %s288
          %294 = dma.hbm_to_vmem [thread:$0]  %s287, 2560, %s289, %s275, 64, 64, 4
        $region44: #{tpu_custom_call.1} parent=39 // pred_fallthru
          _
      $region40: #{tpu_custom_call.1} parent=5 // pred_fallthru
        _
      %p295 = scmp.le.s32.totalorder 1, %s20
      %p296 = scmp.lt.s32.totalorder %s20, 3
      %p297 = pnand %p295, %p296
      %p298 = pneg %p297
      // Predicated region
      $region45: #{tpu_custom_call.1} parent=5 // pred_check
        _
      $region46: #{tpu_custom_call.1} parent=5 // pred_check_branch
        %300 = sbr.rel (%p297) target = $region48
      $region47: #{tpu_custom_call.1} parent=5 // pred_region
        %s301 = ssub.s32 %s20, 1
        %s302 = sand.u32 %s47, 1
        %s303 = scalar_lea.sflag [#allocation4], %s302
        %s304 = sand.u32 %s47, 1
        %s305 = smul.addr %s304, 160
        %s306 = scalar_lea.vmem [#allocation3], %s305
        // Predicated region
        $region49: #{tpu_custom_call.1} parent=47 // pred_check
          %p307 = pneg %p60
        $region50: #{tpu_custom_call.1} parent=47 // pred_check_branch
          %309 = sbr.rel (%p307) target = $region52
        $region51: #{tpu_custom_call.1} parent=47 // pred_region
          %310 = dma.done %s303, 2560
        $region52: #{tpu_custom_call.1} parent=47 // pred_fallthru
          _
        // Predicated region
        $region53: #{tpu_custom_call.1} parent=47 // pred_check
          %p311 = pneg %p81
        $region54: #{tpu_custom_call.1} parent=47 // pred_check_branch
          %313 = sbr.rel (%p311) target = $region56
        $region55: #{tpu_custom_call.1} parent=47 // pred_region
          %314 = dma.done [#allocation7], 1024
        $region56: #{tpu_custom_call.1} parent=47 // pred_fallthru
          _
        // Predicated region
        $region57: #{tpu_custom_call.1} parent=47 // pred_check
          %p315 = pneg %p144
        $region58: #{tpu_custom_call.1} parent=47 // pred_check_branch
          %317 = sbr.rel (%p315) target = $region60
        $region59: #{tpu_custom_call.1} parent=47 // pred_region
          %318 = dma.done [#allocation7], 9216
        $region60: #{tpu_custom_call.1} parent=47 // pred_fallthru
          _
        %s319 = sand.u32 %s47, 1
        %s320 = scalar_lea.sflag [#allocation4], %s319
        %s321 = sand.u32 %s47, 1
        %s322 = smul.addr %s321, 160
        %s323 = scalar_lea.vmem [#allocation3], %s322
        %p324 = pneg %p60
        %p325 = pneg %p57
        %p326 = pneg %p81
        %p327 = pneg %p78
        %p328 = pneg %p102
        %p329 = pneg %p99
        %p330 = pneg %p123
        %p331 = pneg %p120
        %p332 = pneg %p144
        %p333 = pneg %p141
        %p334 = pneg %p165
        %p335 = pneg %p162
        %p336 = pneg %p186
        %p337 = pneg %p183
        %p338 = pneg %p214
        %p339 = pneg %p211
        %s340 = sand.u32 %s201, 1
        %s341 = scalar_lea.sflag [#allocation5], %s340
        %s342 = sand.u32 %s201, 1
        %s343 = smul.addr %s342, 128
        %s344 = scalar_lea.vmem [#allocation9], %s343
        %s345 = smul.u32 2, %s29
        %s346 = smul.u32 2, %s29
        %s347 = smul.u32 8, %s30
        %v349 = vld [vmem:[%s306] sm:$0xf]
        %v350 = vld [vmem:[%s306 + $0x4] sm:$0xf]
        %v351 = vld [vmem:[%s306 + $0x8] sm:$0xf]
        %v352 = vld [vmem:[%s306 + $0xc] sm:$0xf]
        %v353 = vld [vmem:[%s306 + $0x10] sm:$0xf]
        %v354 = vld [vmem:[%s306 + $0x14] sm:$0xf]
        %v355 = vld [vmem:[%s306 + $0x18] sm:$0xf]
        %v356 = vld [vmem:[%s306 + $0x1c] sm:$0xf]
        %v357 = vld [vmem:[%s306 + $0x20] sm:$0xf]
        %v358 = vld [vmem:[%s306 + $0x24] sm:$0xf]
        %v359 = vld [vmem:[%s306 + $0x28] sm:$0xf]
        %v360 = vld [vmem:[%s306 + $0x2c] sm:$0xf]
        %v361 = vld [vmem:[%s306 + $0x30] sm:$0xf]
        %v362 = vld [vmem:[%s306 + $0x34] sm:$0xf]
        %v363 = vld [vmem:[%s306 + $0x38] sm:$0xf]
        %v364 = vld [vmem:[%s306 + $0x3c] sm:$0xf]
        %v365 = vld [vmem:[%s306 + $0x40] sm:$0xf]
        %v366 = vld [vmem:[%s306 + $0x44] sm:$0xf]
        %v367 = vld [vmem:[%s306 + $0x48] sm:$0xf]
        %v368 = vld [vmem:[%s306 + $0x4c] sm:$0xf]
        %v369 = vld [vmem:[%s306 + $0x50] sm:$0xf]
        %v370 = vld [vmem:[%s306 + $0x54] sm:$0xf]
        %v371 = vld [vmem:[%s306 + $0x58] sm:$0xf]
        %v372 = vld [vmem:[%s306 + $0x5c] sm:$0xf]
        %v373 = vld [vmem:[%s306 + $0x60] sm:$0xf]
        %v374 = vld [vmem:[%s306 + $0x64] sm:$0xf]
        %v375 = vld [vmem:[%s306 + $0x68] sm:$0xf]
        %v376 = vld [vmem:[%s306 + $0x6c] sm:$0xf]
        %v377 = vld [vmem:[%s306 + $0x70] sm:$0xf]
        %v378 = vld [vmem:[%s306 + $0x74] sm:$0xf]
        %v379 = vld [vmem:[%s306 + $0x78] sm:$0xf]
        %v380 = vld [vmem:[%s306 + $0x7c] sm:$0xf]
        %v381 = vld [vmem:[%s306 + $0x80] sm:$0xf]
        %v382 = vld [vmem:[%s306 + $0x84] sm:$0xf]
        %v383 = vld [vmem:[%s306 + $0x88] sm:$0xf]
        %v384 = vld [vmem:[%s306 + $0x8c] sm:$0xf]
        %v385 = vld [vmem:[%s306 + $0x90] sm:$0xf]
        %v386 = vld [vmem:[%s306 + $0x94] sm:$0xf]
        %v387 = vld [vmem:[%s306 + $0x98] sm:$0xf]
        %v388 = vld [vmem:[%s306 + $0x9c] sm:$0xf]
        %v389 = vld [vmem:[#allocation6] sm:$0xf]
        %v390 = vld [vmem:[#allocation6 + $0x4] sm:$0xf]
        %v391 = vld [vmem:[#allocation6 + $0x8] sm:$0xf]
        %v392 = vld [vmem:[#allocation6 + $0xc] sm:$0xf]
        %v393 = vld [vmem:[#allocation6 + $0x10] sm:$0xf]
        %v394 = vld [vmem:[#allocation6 + $0x14] sm:$0xf]
        %v395 = vld [vmem:[#allocation6 + $0x18] sm:$0xf]
        %v396 = vld [vmem:[#allocation6 + $0x1c] sm:$0xf]
        %v397 = vld [vmem:[#allocation6 + $0x20] sm:$0xf]
        %v398 = vld [vmem:[#allocation6 + $0x24] sm:$0xf]
        %v399 = vld [vmem:[#allocation6 + $0x28] sm:$0xf]
        %v400 = vld [vmem:[#allocation6 + $0x2c] sm:$0xf]
        %v401 = vld [vmem:[#allocation6 + $0x30] sm:$0xf]
        %v402 = vld [vmem:[#allocation6 + $0x34] sm:$0xf]
        %v403 = vld [vmem:[#allocation6 + $0x38] sm:$0xf]
        %v404 = vld [vmem:[#allocation6 + $0x3c] sm:$0xf]
        %v445 = vunpack.c.l.b16 %v349
        %v446 = vunpack.c.l.b16 %v350
        %v447 = vunpack.c.l.b16 %v351
        %v448 = vunpack.c.l.b16 %v352
        %v449 = vunpack.c.l.b16 %v353
        %v450 = vunpack.c.l.b16 %v354
        %v451 = vunpack.c.l.b16 %v355
        %v452 = vunpack.c.l.b16 %v356
        %v453 = vunpack.c.l.b16 %v357
        %v454 = vunpack.c.l.b16 %v358
        %v455 = vunpack.c.l.b16 %v359
        %v456 = vunpack.c.l.b16 %v360
        %v457 = vunpack.c.l.b16 %v361
        %v458 = vunpack.c.l.b16 %v362
        %v459 = vunpack.c.l.b16 %v363
        %v460 = vunpack.c.l.b16 %v364
        %v461 = vunpack.c.l.b16 %v365
        %v462 = vunpack.c.l.b16 %v366
        %v463 = vunpack.c.l.b16 %v367
        %v464 = vunpack.c.l.b16 %v368
        %v465 = vunpack.c.l.b16 %v369
        %v466 = vunpack.c.l.b16 %v370
        %v467 = vunpack.c.l.b16 %v371
        %v468 = vunpack.c.l.b16 %v372
        %v469 = vunpack.c.l.b16 %v373
        %v470 = vunpack.c.l.b16 %v374
        %v471 = vunpack.c.l.b16 %v375
        %v472 = vunpack.c.l.b16 %v376
        %v473 = vunpack.c.l.b16 %v377
        %v474 = vunpack.c.l.b16 %v378
        %v475 = vunpack.c.l.b16 %v379
        %v476 = vunpack.c.l.b16 %v380
        %v477 = vunpack.c.l.b16 %v381
        %v478 = vunpack.c.l.b16 %v382
        %v479 = vunpack.c.l.b16 %v383
        %v480 = vunpack.c.l.b16 %v384
        %v481 = vunpack.c.l.b16 %v385
        %v482 = vunpack.c.l.b16 %v386
        %v483 = vunpack.c.l.b16 %v387
        %v484 = vunpack.c.l.b16 %v388
        %v485 = vpack.c.b16 %v446, %v445
        %v486 = vpack.c.b16 %v448, %v447
        %v487 = vpack.c.b16 %v450, %v449
        %v488 = vpack.c.b16 %v452, %v451
        %v489 = vpack.c.b16 %v454, %v453
        %v490 = vpack.c.b16 %v456, %v455
        %v491 = vpack.c.b16 %v458, %v457
        %v492 = vpack.c.b16 %v460, %v459
        %v493 = vpack.c.b16 %v462, %v461
        %v494 = vpack.c.b16 %v464, %v463
        %v495 = vpack.c.b16 %v466, %v465
        %v496 = vpack.c.b16 %v468, %v467
        %v497 = vpack.c.b16 %v470, %v469
        %v498 = vpack.c.b16 %v472, %v471
        %v499 = vpack.c.b16 %v474, %v473
        %v500 = vpack.c.b16 %v476, %v475
        %v501 = vpack.c.b16 %v478, %v477
        %v502 = vpack.c.b16 %v480, %v479
        %v503 = vpack.c.b16 %v482, %v481
        %v504 = vpack.c.b16 %v484, %v483
        %v541 = vunpack.c.l.b16 %v389
        %v542 = vunpack.c.l.b16 %v390
        %v543 = vunpack.c.l.b16 %v391
        %v544 = vunpack.c.l.b16 %v392
        %v545 = vunpack.c.l.b16 %v393
        %v546 = vunpack.c.l.b16 %v394
        %v547 = vunpack.c.l.b16 %v395
        %v548 = vunpack.c.l.b16 %v396
        %v549 = vunpack.c.l.b16 %v397
        %v550 = vunpack.c.l.b16 %v398
        %v551 = vunpack.c.l.b16 %v399
        %v552 = vunpack.c.l.b16 %v400
        %v553 = vunpack.c.l.b16 %v401
        %v554 = vunpack.c.l.b16 %v402
        %v555 = vunpack.c.l.b16 %v403
        %v556 = vunpack.c.l.b16 %v404
        %v557 = vpack.c.b16 %v542, %v541
        %v558 = vpack.c.b16 %v544, %v543
        %v559 = vpack.c.b16 %v546, %v545
        %v560 = vpack.c.b16 %v548, %v547
        %v561 = vpack.c.b16 %v550, %v549
        %v562 = vpack.c.b16 %v552, %v551
        %v563 = vpack.c.b16 %v554, %v553
        %v564 = vpack.c.b16 %v556, %v555
        %573 = vmatprep.subr.bf16.mxu0 0
        %574 = vmatpush1.bf16.msra.mxu0 %v557
        %575 = vmatprep.subr.bf16.mxu0 0
        %576 = vmatpush1.bf16.msra.mxu0 %v558
        %577 = vmatprep.subr.bf16.mxu0 0
        %578 = vmatpush1.bf16.msra.mxu0 %v559
        %579 = vmatprep.subr.bf16.mxu0 0
        %580 = vmatpush1.bf16.msra.mxu0 %v560
        %581 = vmatprep.subr.bf16.mxu0 0
        %582 = vmatpush1.bf16.msra.mxu0 %v561
        %583 = vmatprep.subr.bf16.mxu0 0
        %584 = vmatpush1.bf16.msra.mxu0 %v562
        %585 = vmatprep.subr.bf16.mxu0 0
        %586 = vmatpush1.bf16.msra.mxu0 %v563
        %587 = vmatprep.subr.bf16.mxu0 0
        %588 = vmatpush1.bf16.msra.mxu0 %v564
        %589 = vmatprep.subr.bf16.mxu0 0
        %590 = vmatpush1.bf16.msra.mxu0 0
        %591 = vmatprep.subr.bf16.mxu0 0
        %592 = vmatpush1.bf16.msra.mxu0 0
        %593 = vmatprep.subr.bf16.mxu0 0
        %594 = vmatpush1.bf16.msra.mxu0 0
        %595 = vmatprep.subr.bf16.mxu0 0
        %596 = vmatpush1.bf16.msra.mxu0 0
        %597 = vmatprep.subr.bf16.mxu0 0
        %598 = vmatpush1.bf16.msra.mxu0 0
        %599 = vmatprep.subr.bf16.mxu0 0
        %600 = vmatpush1.bf16.msra.mxu0 0
        %601 = vmatprep.subr.bf16.mxu0 0
        %602 = vmatpush1.bf16.msra.mxu0 0
        %603 = vmatprep.subr.bf16.mxu0 0
        %604 = vmatpush1.bf16.msra.mxu0 0
        %605 = vmatprep.mubr.bf16.mxu0 0
        %606 = vmatmul.mubr.bf16.gmra.mrb[0].mxu0 %v485
        %v607 = vpop.f32.mrb[0].mxu0
        %v608 = vadd.f32 0.0, %v607
        %v609 = vpop.f32.mrb[0].mxu0
        %v610 = vpop.f32.mrb[0].mxu0
        %v611 = vadd.f32 0.0, %v610
        %v612 = vpop.f32.mrb[0].mxu0
        %613 = vmatprep.mubr.bf16.mxu0 0
        %614 = vmatmul.mubr.bf16.gmra.mrb[0].mxu0 %v486
        %v615 = vpop.f32.mrb[0].mxu0
        %v616 = vadd.f32 0.0, %v615
        %v617 = vpop.f32.mrb[0].mxu0
        %v618 = vpop.f32.mrb[0].mxu0
        %v619 = vadd.f32 0.0, %v618
        %v620 = vpop.f32.mrb[0].mxu0
        %621 = vmatprep.mubr.bf16.mxu0 0
        %622 = vmatmul.mubr.bf16.gmra.mrb[0].mxu0 %v487
        %v623 = vpop.f32.mrb[0].mxu0
        %v624 = vadd.f32 0.0, %v623
        %v625 = vpop.f32.mrb[0].mxu0
        %v626 = vpop.f32.mrb[0].mxu0
        %v627 = vadd.f32 0.0, %v626
        %v628 = vpop.f32.mrb[0].mxu0
        %629 = vmatprep.mubr.bf16.mxu0 0
        %630 = vmatmul.mubr.bf16.gmra.mrb[0].mxu0 %v488
        %v631 = vpop.f32.mrb[0].mxu0
        %v632 = vadd.f32 0.0, %v631
        %v633 = vpop.f32.mrb[0].mxu0
        %v634 = vpop.f32.mrb[0].mxu0
        %v635 = vadd.f32 0.0, %v634
        %v636 = vpop.f32.mrb[0].mxu0
        %637 = vmatprep.mubr.bf16.mxu0 0
        %638 = vmatmul.mubr.bf16.gmra.mrb[0].mxu0 %v489
        %v639 = vpop.f32.mrb[0].mxu0
        %v640 = vadd.f32 0.0, %v639
        %v641 = vpop.f32.mrb[0].mxu0
        %v642 = vpop.f32.mrb[0].mxu0
        %v643 = vadd.f32 0.0, %v642
        %v644 = vpop.f32.mrb[0].mxu0
        %645 = vmatprep.mubr.bf16.mxu0 0
        %646 = vmatmul.mubr.bf16.gmra.mrb[0].mxu0 %v490
        %v647 = vpop.f32.mrb[0].mxu0
        %v648 = vadd.f32 0.0, %v647
        %v649 = vpop.f32.mrb[0].mxu0
        %v650 = vpop.f32.mrb[0].mxu0
        %v651 = vadd.f32 0.0, %v650
        %v652 = vpop.f32.mrb[0].mxu0
        %653 = vmatprep.mubr.bf16.mxu0 0
        %654 = vmatmul.mubr.bf16.gmra.mrb[0].mxu0 %v491
        %v655 = vpop.f32.mrb[0].mxu0
        %v656 = vadd.f32 0.0, %v655
        %v657 = vpop.f32.mrb[0].mxu0
        %v658 = vpop.f32.mrb[0].mxu0
        %v659 = vadd.f32 0.0, %v658
        %v660 = vpop.f32.mrb[0].mxu0
        %661 = vmatprep.mubr.bf16.mxu0 0
        %662 = vmatmul.mubr.bf16.gmra.mrb[0].mxu0 %v492
        %v663 = vpop.f32.mrb[0].mxu0
        %v664 = vadd.f32 0.0, %v663
        %v665 = vpop.f32.mrb[0].mxu0
        %v666 = vpop.f32.mrb[0].mxu0
        %v667 = vadd.f32 0.0, %v666
        %v668 = vpop.f32.mrb[0].mxu0
        %669 = vmatprep.mubr.bf16.mxu0 0
        %670 = vmatmul.mubr.bf16.gmra.mrb[0].mxu0 %v493
        %v671 = vpop.f32.mrb[0].mxu0
        %v672 = vadd.f32 0.0, %v671
        %v673 = vpop.f32.mrb[0].mxu0
        %v674 = vpop.f32.mrb[0].mxu0
        %v675 = vadd.f32 0.0, %v674
        %v676 = vpop.f32.mrb[0].mxu0
        %677 = vmatprep.mubr.bf16.mxu0 0
        %678 = vmatmul.mubr.bf16.gmra.mrb[0].mxu0 %v494
        %v679 = vpop.f32.mrb[0].mxu0
        %v680 = vadd.f32 0.0, %v679
        %v681 = vpop.f32.mrb[0].mxu0
        %v682 = vpop.f32.mrb[0].mxu0
        %v683 = vadd.f32 0.0, %v682
        %v684 = vpop.f32.mrb[0].mxu0
        %685 = vmatprep.mubr.bf16.mxu0 0
        %686 = vmatmul.mubr.bf16.gmra.mrb[0].mxu0 %v495
        %v687 = vpop.f32.mrb[0].mxu0
        %v688 = vadd.f32 0.0, %v687
        %v689 = vpop.f32.mrb[0].mxu0
        %v690 = vpop.f32.mrb[0].mxu0
        %v691 = vadd.f32 0.0, %v690
        %v692 = vpop.f32.mrb[0].mxu0
        %693 = vmatprep.mubr.bf16.mxu0 0
        %694 = vmatmul.mubr.bf16.gmra.mrb[0].mxu0 %v496
        %v695 = vpop.f32.mrb[0].mxu0
        %v696 = vadd.f32 0.0, %v695
        %v697 = vpop.f32.mrb[0].mxu0
        %v698 = vpop.f32.mrb[0].mxu0
        %v699 = vadd.f32 0.0, %v698
        %v700 = vpop.f32.mrb[0].mxu0
        %701 = vmatprep.mubr.bf16.mxu0 0
        %702 = vmatmul.mubr.bf16.gmra.mrb[0].mxu0 %v497
        %v703 = vpop.f32.mrb[0].mxu0
        %v704 = vadd.f32 0.0, %v703
        %v705 = vpop.f32.mrb[0].mxu0
        %v706 = vpop.f32.mrb[0].mxu0
        %v707 = vadd.f32 0.0, %v706
        %v708 = vpop.f32.mrb[0].mxu0
        %709 = vmatprep.mubr.bf16.mxu0 0
        %710 = vmatmul.mubr.bf16.gmra.mrb[0].mxu0 %v498
        %v711 = vpop.f32.mrb[0].mxu0
        %v712 = vadd.f32 0.0, %v711
        %v713 = vpop.f32.mrb[0].mxu0
        %v714 = vpop.f32.mrb[0].mxu0
        %v715 = vadd.f32 0.0, %v714
        %v716 = vpop.f32.mrb[0].mxu0
        %717 = vmatprep.mubr.bf16.mxu0 0
        %718 = vmatmul.mubr.bf16.gmra.mrb[0].mxu0 %v499
        %v719 = vpop.f32.mrb[0].mxu0
        %v720 = vadd.f32 0.0, %v719
        %v721 = vpop.f32.mrb[0].mxu0
        %v722 = vpop.f32.mrb[0].mxu0
        %v723 = vadd.f32 0.0, %v722
        %v724 = vpop.f32.mrb[0].mxu0
        %725 = vmatprep.mubr.bf16.mxu0 0
        %726 = vmatmul.mubr.bf16.gmra.mrb[0].mxu0 %v500
        %v727 = vpop.f32.mrb[0].mxu0
        %v728 = vadd.f32 0.0, %v727
        %v729 = vpop.f32.mrb[0].mxu0
        %v730 = vpop.f32.mrb[0].mxu0
        %v731 = vadd.f32 0.0, %v730
        %v732 = vpop.f32.mrb[0].mxu0
        %733 = vmatprep.mubr.bf16.mxu0 0
        %734 = vmatmul.mubr.bf16.gmra.mrb[0].mxu0 %v501
        %v735 = vpop.f32.mrb[0].mxu0
        %v736 = vadd.f32 0.0, %v735
        %v737 = vpop.f32.mrb[0].mxu0
        %v738 = vpop.f32.mrb[0].mxu0
        %v739 = vadd.f32 0.0, %v738
        %v740 = vpop.f32.mrb[0].mxu0
        %741 = vmatprep.mubr.bf16.mxu0 0
        %742 = vmatmul.mubr.bf16.gmra.mrb[0].mxu0 %v502
        %v743 = vpop.f32.mrb[0].mxu0
        %v744 = vadd.f32 0.0, %v743
        %v745 = vpop.f32.mrb[0].mxu0
        %v746 = vpop.f32.mrb[0].mxu0
        %v747 = vadd.f32 0.0, %v746
        %v748 = vpop.f32.mrb[0].mxu0
        %749 = vmatprep.mubr.bf16.mxu0 0
        %750 = vmatmul.mubr.bf16.gmra.mrb[0].mxu0 %v503
        %v751 = vpop.f32.mrb[0].mxu0
        %v752 = vadd.f32 0.0, %v751
        %v753 = vpop.f32.mrb[0].mxu0
        %v754 = vpop.f32.mrb[0].mxu0
        %v755 = vadd.f32 0.0, %v754
        %v756 = vpop.f32.mrb[0].mxu0
        %757 = vmatprep.mubr.bf16.mxu0 0
        %758 = vmatmul.mubr.bf16.gmra.mrb[0].mxu0 %v504
        %v759 = vpop.f32.mrb[0].mxu0
        %v760 = vadd.f32 0.0, %v759
        %v761 = vpop.f32.mrb[0].mxu0
        %v762 = vpop.f32.mrb[0].mxu0
        %v763 = vadd.f32 0.0, %v762
        %v764 = vpop.f32.mrb[0].mxu0
        %765 = vdwg.mxu0
        %v766 = vld [vmem:[%s2] sm:$0x1]
        %v768 = vlaneseq
        %v769 = vshrl.u32 %v768, 7
        %v770 = vsub.s32 0, %v769
        %v771 = vrot.slane %v766, %v770
        %v773 = vmul.f32 %v608, %v771
        %v774 = vmul.f32 %v611, %v771
        %v775 = vmul.f32 %v616, %v771
        %v776 = vmul.f32 %v619, %v771
        %v777 = vmul.f32 %v624, %v771
        %v778 = vmul.f32 %v627, %v771
        %v779 = vmul.f32 %v632, %v771
        %v780 = vmul.f32 %v635, %v771
        %v781 = vmul.f32 %v640, %v771
        %v782 = vmul.f32 %v643, %v771
        %v783 = vmul.f32 %v648, %v771
        %v784 = vmul.f32 %v651, %v771
        %v785 = vmul.f32 %v656, %v771
        %v786 = vmul.f32 %v659, %v771
        %v787 = vmul.f32 %v664, %v771
        %v788 = vmul.f32 %v667, %v771
        %v789 = vmul.f32 %v672, %v771
        %v790 = vmul.f32 %v675, %v771
        %v791 = vmul.f32 %v680, %v771
        %v792 = vmul.f32 %v683, %v771
        %v793 = vmul.f32 %v688, %v771
        %v794 = vmul.f32 %v691, %v771
        %v795 = vmul.f32 %v696, %v771
        %v796 = vmul.f32 %v699, %v771
        %v797 = vmul.f32 %v704, %v771
        %v798 = vmul.f32 %v707, %v771
        %v799 = vmul.f32 %v712, %v771
        %v800 = vmul.f32 %v715, %v771
        %v801 = vmul.f32 %v720, %v771
        %v802 = vmul.f32 %v723, %v771
        %v803 = vmul.f32 %v728, %v771
        %v804 = vmul.f32 %v731, %v771
        %v805 = vmul.f32 %v736, %v771
        %v806 = vmul.f32 %v739, %v771
        %v807 = vmul.f32 %v744, %v771
        %v808 = vmul.f32 %v747, %v771
        %v809 = vmul.f32 %v752, %v771
        %v810 = vmul.f32 %v755, %v771
        %v811 = vmul.f32 %v760, %v771
        %v812 = vmul.f32 %v763, %v771
        %v813 = vld [vmem:[%s3] sm:$0x1]
        %v815 = vlaneseq
        %v816 = vshrl.u32 %v815, 7
        %v817 = vsub.s32 0, %v816
        %v818 = vrot.slane %v813, %v817
        %v820 = vadd.f32 %v773, %v818
        %v821 = vadd.f32 %v774, %v818
        %v822 = vadd.f32 %v775, %v818
        %v823 = vadd.f32 %v776, %v818
        %v824 = vadd.f32 %v777, %v818
        %v825 = vadd.f32 %v778, %v818
        %v826 = vadd.f32 %v779, %v818
        %v827 = vadd.f32 %v780, %v818
        %v828 = vadd.f32 %v781, %v818
        %v829 = vadd.f32 %v782, %v818
        %v830 = vadd.f32 %v783, %v818
        %v831 = vadd.f32 %v784, %v818
        %v832 = vadd.f32 %v785, %v818
        %v833 = vadd.f32 %v786, %v818
        %v834 = vadd.f32 %v787, %v818
        %v835 = vadd.f32 %v788, %v818
        %v836 = vadd.f32 %v789, %v818
        %v837 = vadd.f32 %v790, %v818
        %v838 = vadd.f32 %v791, %v818
        %v839 = vadd.f32 %v792, %v818
        %v840 = vadd.f32 %v793, %v818
        %v841 = vadd.f32 %v794, %v818
        %v842 = vadd.f32 %v795, %v818
        %v843 = vadd.f32 %v796, %v818
        %v844 = vadd.f32 %v797, %v818
        %v845 = vadd.f32 %v798, %v818
        %v846 = vadd.f32 %v799, %v818
        %v847 = vadd.f32 %v800, %v818
        %v848 = vadd.f32 %v801, %v818
        %v849 = vadd.f32 %v802, %v818
        %v850 = vadd.f32 %v803, %v818
        %v851 = vadd.f32 %v804, %v818
        %v852 = vadd.f32 %v805, %v818
        %v853 = vadd.f32 %v806, %v818
        %v854 = vadd.f32 %v807, %v818
        %v855 = vadd.f32 %v808, %v818
        %v856 = vadd.f32 %v809, %v818
        %v857 = vadd.f32 %v810, %v818
        %v858 = vadd.f32 %v811, %v818
        %v859 = vadd.f32 %v812, %v818
        %v860 = vmax.f32 %v820, 0.0
        %v861 = vmax.f32 %v821, 0.0
        %v862 = vmax.f32 %v822, 0.0
        %v863 = vmax.f32 %v823, 0.0
        %v864 = vmax.f32 %v824, 0.0
        %v865 = vmax.f32 %v825, 0.0
        %v866 = vmax.f32 %v826, 0.0
        %v867 = vmax.f32 %v827, 0.0
        %v868 = vmax.f32 %v828, 0.0
        %v869 = vmax.f32 %v829, 0.0
        %v870 = vmax.f32 %v830, 0.0
        %v871 = vmax.f32 %v831, 0.0
        %v872 = vmax.f32 %v832, 0.0
        %v873 = vmax.f32 %v833, 0.0
        %v874 = vmax.f32 %v834, 0.0
        %v875 = vmax.f32 %v835, 0.0
        %v876 = vmax.f32 %v836, 0.0
        %v877 = vmax.f32 %v837, 0.0
        %v878 = vmax.f32 %v838, 0.0
        %v879 = vmax.f32 %v839, 0.0
        %v880 = vmax.f32 %v840, 0.0
        %v881 = vmax.f32 %v841, 0.0
        %v882 = vmax.f32 %v842, 0.0
        %v883 = vmax.f32 %v843, 0.0
        %v884 = vmax.f32 %v844, 0.0
        %v885 = vmax.f32 %v845, 0.0
        %v886 = vmax.f32 %v846, 0.0
        %v887 = vmax.f32 %v847, 0.0
        %v888 = vmax.f32 %v848, 0.0
        %v889 = vmax.f32 %v849, 0.0
        %v890 = vmax.f32 %v850, 0.0
        %v891 = vmax.f32 %v851, 0.0
        %v892 = vmax.f32 %v852, 0.0
        %v893 = vmax.f32 %v853, 0.0
        %v894 = vmax.f32 %v854, 0.0
        %v895 = vmax.f32 %v855, 0.0
        %v896 = vmax.f32 %v856, 0.0
        %v897 = vmax.f32 %v857, 0.0
        %v898 = vmax.f32 %v858, 0.0
        %v899 = vmax.f32 %v859, 0.0
        %v900 = vpack.c.bf16 %v861, %v860
        %v901 = vpack.c.bf16 %v863, %v862
        %v902 = vpack.c.bf16 %v865, %v864
        %v903 = vpack.c.bf16 %v867, %v866
        %v904 = vpack.c.bf16 %v869, %v868
        %v905 = vpack.c.bf16 %v871, %v870
        %v906 = vpack.c.bf16 %v873, %v872
        %v907 = vpack.c.bf16 %v875, %v874
        %v908 = vpack.c.bf16 %v877, %v876
        %v909 = vpack.c.bf16 %v879, %v878
        %v910 = vpack.c.bf16 %v881, %v880
        %v911 = vpack.c.bf16 %v883, %v882
        %v912 = vpack.c.bf16 %v885, %v884
        %v913 = vpack.c.bf16 %v887, %v886
        %v914 = vpack.c.bf16 %v889, %v888
        %v915 = vpack.c.bf16 %v891, %v890
        %v916 = vpack.c.bf16 %v893, %v892
        %v917 = vpack.c.bf16 %v895, %v894
        %v918 = vpack.c.bf16 %v897, %v896
        %v919 = vpack.c.bf16 %v899, %v898
        %v940 = vunpack.c.l.b16 %v900
        %v941 = vunpack.c.h.b16 %v900
        %v942 = vunpack.c.l.b16 %v901
        %v943 = vunpack.c.h.b16 %v901
        %v944 = vunpack.c.l.b16 %v902
        %v945 = vunpack.c.h.b16 %v902
        %v946 = vunpack.c.l.b16 %v903
        %v947 = vunpack.c.h.b16 %v903
        %v948 = vunpack.c.l.b16 %v904
        %v949 = vunpack.c.h.b16 %v904
        %v950 = vunpack.c.l.b16 %v905
        %v951 = vunpack.c.h.b16 %v905
        %v952 = vunpack.c.l.b16 %v906
        %v953 = vunpack.c.h.b16 %v906
        %v954 = vunpack.c.l.b16 %v907
        %v955 = vunpack.c.h.b16 %v907
        %v956 = vunpack.c.l.b16 %v908
        %v957 = vunpack.c.h.b16 %v908
        %v958 = vunpack.c.l.b16 %v909
        %v959 = vunpack.c.h.b16 %v909
        %v960 = vunpack.c.l.b16 %v910
        %v961 = vunpack.c.h.b16 %v910
        %v962 = vunpack.c.l.b16 %v911
        %v963 = vunpack.c.h.b16 %v911
        %v964 = vunpack.c.l.b16 %v912
        %v965 = vunpack.c.h.b16 %v912
        %v966 = vunpack.c.l.b16 %v913
        %v967 = vunpack.c.h.b16 %v913
        %v968 = vunpack.c.l.b16 %v914
        %v969 = vunpack.c.h.b16 %v914
        %v970 = vunpack.c.l.b16 %v915
        %v971 = vunpack.c.h.b16 %v915
        %v972 = vunpack.c.l.b16 %v916
        %v973 = vunpack.c.h.b16 %v916
        %v974 = vunpack.c.l.b16 %v917
        %v975 = vunpack.c.h.b16 %v917
        %v976 = vunpack.c.l.b16 %v918
        %v977 = vunpack.c.h.b16 %v918
        %v978 = vunpack.c.l.b16 %v919
        %v979 = vunpack.c.h.b16 %v919
        %v980 = vpack.c.b16 %v940, %v940
        %v981 = vpack.c.b16 %v941, %v941
        %v982 = vpack.c.b16 %v942, %v942
        %v983 = vpack.c.b16 %v943, %v943
        %v984 = vpack.c.b16 %v944, %v944
        %v985 = vpack.c.b16 %v945, %v945
        %v986 = vpack.c.b16 %v946, %v946
        %v987 = vpack.c.b16 %v947, %v947
        %v988 = vpack.c.b16 %v948, %v948
        %v989 = vpack.c.b16 %v949, %v949
        %v990 = vpack.c.b16 %v950, %v950
        %v991 = vpack.c.b16 %v951, %v951
        %v992 = vpack.c.b16 %v952, %v952
        %v993 = vpack.c.b16 %v953, %v953
        %v994 = vpack.c.b16 %v954, %v954
        %v995 = vpack.c.b16 %v955, %v955
        %v996 = vpack.c.b16 %v956, %v956
        %v997 = vpack.c.b16 %v957, %v957
        %v998 = vpack.c.b16 %v958, %v958
        %v999 = vpack.c.b16 %v959, %v959
        %v1000 = vpack.c.b16 %v960, %v960
        %v1001 = vpack.c.b16 %v961, %v961
        %v1002 = vpack.c.b16 %v962, %v962
        %v1003 = vpack.c.b16 %v963, %v963
        %v1004 = vpack.c.b16 %v964, %v964
        %v1005 = vpack.c.b16 %v965, %v965
        %v1006 = vpack.c.b16 %v966, %v966
        %v1007 = vpack.c.b16 %v967, %v967
        %v1008 = vpack.c.b16 %v968, %v968
        %v1009 = vpack.c.b16 %v969, %v969
        %v1010 = vpack.c.b16 %v970, %v970
        %v1011 = vpack.c.b16 %v971, %v971
        %v1012 = vpack.c.b16 %v972, %v972
        %v1013 = vpack.c.b16 %v973, %v973
        %v1014 = vpack.c.b16 %v974, %v974
        %v1015 = vpack.c.b16 %v975, %v975
        %v1016 = vpack.c.b16 %v976, %v976
        %v1017 = vpack.c.b16 %v977, %v977
        %v1018 = vpack.c.b16 %v978, %v978
        %v1019 = vpack.c.b16 %v979, %v979
        %vm1020 = vsmask.f32 256
        %vm1021 = vsmask.f32 4368
        %vm1022 = vmor %vm1020, %vm1021
        %v1024 = vshrl.u32 %v980, 16
        %v1026 = vrot.slane %v1024, 7
        %v1027 = vshll.u32 %v980, 16
        %v1029 = vor.u32 %v1026, %v1027
        %v1030 = vrot.slane %v1026, 4
        %v1032 = vshrl.u32 %v981, 16
        %v1034 = vrot.slane %v1032, 7
        %v1035 = vshll.u32 %v981, 16
        %v1037 = vor.u32 %v1034, %v1035
        %v1038 = vsel %vm1022, %v1030, %v1037
        %v1039 = vrot.slane %v1034, 4
        %v1041 = vshrl.u32 %v982, 16
        %v1043 = vrot.slane %v1041, 7
        %v1044 = vshll.u32 %v982, 16
        %v1046 = vor.u32 %v1043, %v1044
        %v1047 = vrot.slane %v1043, 4
        %v1049 = vshrl.u32 %v983, 16
        %v1051 = vrot.slane %v1049, 7
        %v1052 = vshll.u32 %v983, 16
        %v1054 = vor.u32 %v1051, %v1052
        %v1055 = vsel %vm1022, %v1047, %v1054
        %v1056 = vrot.slane %v1051, 4
        %v1058 = vshrl.u32 %v984, 16
        %v1060 = vrot.slane %v1058, 7
        %v1061 = vshll.u32 %v984, 16
        %v1063 = vor.u32 %v1060, %v1061
        %v1064 = vrot.slane %v1060, 4
        %v1066 = vshrl.u32 %v985, 16
        %v1068 = vrot.slane %v1066, 7
        %v1069 = vshll.u32 %v985, 16
        %v1071 = vor.u32 %v1068, %v1069
        %v1072 = vsel %vm1022, %v1064, %v1071
        %v1073 = vrot.slane %v1068, 4
        %v1075 = vshrl.u32 %v986, 16
        %v1077 = vrot.slane %v1075, 7
        %v1078 = vshll.u32 %v986, 16
        %v1080 = vor.u32 %v1077, %v1078
        %v1081 = vrot.slane %v1077, 4
        %v1083 = vshrl.u32 %v987, 16
        %v1085 = vrot.slane %v1083, 7
        %v1086 = vshll.u32 %v987, 16
        %v1088 = vor.u32 %v1085, %v1086
        %v1089 = vsel %vm1022, %v1081, %v1088
        %v1090 = vrot.slane %v1085, 4
        %v1092 = vshrl.u32 %v988, 16
        %v1094 = vrot.slane %v1092, 7
        %v1095 = vshll.u32 %v988, 16
        %v1097 = vor.u32 %v1094, %v1095
        %v1098 = vrot.slane %v1094, 4
        %v1100 = vshrl.u32 %v989, 16
        %v1102 = vrot.slane %v1100, 7
        %v1103 = vshll.u32 %v989, 16
        %v1105 = vor.u32 %v1102, %v1103
        %v1106 = vsel %vm1022, %v1098, %v1105
        %v1107 = vrot.slane %v1102, 4
        %v1109 = vshrl.u32 %v990, 16
        %v1111 = vrot.slane %v1109, 7
        %v1112 = vshll.u32 %v990, 16
        %v1114 = vor.u32 %v1111, %v1112
        %v1115 = vrot.slane %v1111, 4
        %v1117 = vshrl.u32 %v991, 16
        %v1119 = vrot.slane %v1117, 7
        %v1120 = vshll.u32 %v991, 16
        %v1122 = vor.u32 %v1119, %v1120
        %v1123 = vsel %vm1022, %v1115, %v1122
        %v1124 = vrot.slane %v1119, 4
        %v1126 = vshrl.u32 %v992, 16
        %v1128 = vrot.slane %v1126, 7
        %v1129 = vshll.u32 %v992, 16
        %v1131 = vor.u32 %v1128, %v1129
        %v1132 = vrot.slane %v1128, 4
        %v1134 = vshrl.u32 %v993, 16
        %v1136 = vrot.slane %v1134, 7
        %v1137 = vshll.u32 %v993, 16
        %v1139 = vor.u32 %v1136, %v1137
        %v1140 = vsel %vm1022, %v1132, %v1139
        %v1141 = vrot.slane %v1136, 4
        %v1143 = vshrl.u32 %v994, 16
        %v1145 = vrot.slane %v1143, 7
        %v1146 = vshll.u32 %v994, 16
        %v1148 = vor.u32 %v1145, %v1146
        %v1149 = vrot.slane %v1145, 4
        %v1151 = vshrl.u32 %v995, 16
        %v1153 = vrot.slane %v1151, 7
        %v1154 = vshll.u32 %v995, 16
        %v1156 = vor.u32 %v1153, %v1154
        %v1157 = vsel %vm1022, %v1149, %v1156
        %v1158 = vrot.slane %v1153, 4
        %v1160 = vshrl.u32 %v996, 16
        %v1162 = vrot.slane %v1160, 7
        %v1163 = vshll.u32 %v996, 16
        %v1165 = vor.u32 %v1162, %v1163
        %v1166 = vrot.slane %v1162, 4
        %v1168 = vshrl.u32 %v997, 16
        %v1170 = vrot.slane %v1168, 7
        %v1171 = vshll.u32 %v997, 16
        %v1173 = vor.u32 %v1170, %v1171
        %v1174 = vsel %vm1022, %v1166, %v1173
        %v1175 = vrot.slane %v1170, 4
        %v1177 = vshrl.u32 %v998, 16
        %v1179 = vrot.slane %v1177, 7
        %v1180 = vshll.u32 %v998, 16
        %v1182 = vor.u32 %v1179, %v1180
        %v1183 = vrot.slane %v1179, 4
        %v1185 = vshrl.u32 %v999, 16
        %v1187 = vrot.slane %v1185, 7
        %v1188 = vshll.u32 %v999, 16
        %v1190 = vor.u32 %v1187, %v1188
        %v1191 = vsel %vm1022, %v1183, %v1190
        %v1192 = vrot.slane %v1187, 4
        %v1194 = vshrl.u32 %v1000, 16
        %v1196 = vrot.slane %v1194, 7
        %v1197 = vshll.u32 %v1000, 16
        %v1199 = vor.u32 %v1196, %v1197
        %v1200 = vrot.slane %v1196, 4
        %v1202 = vshrl.u32 %v1001, 16
        %v1204 = vrot.slane %v1202, 7
        %v1205 = vshll.u32 %v1001, 16
        %v1207 = vor.u32 %v1204, %v1205
        %v1208 = vsel %vm1022, %v1200, %v1207
        %v1209 = vrot.slane %v1204, 4
        %v1211 = vshrl.u32 %v1002, 16
        %v1213 = vrot.slane %v1211, 7
        %v1214 = vshll.u32 %v1002, 16
        %v1216 = vor.u32 %v1213, %v1214
        %v1217 = vrot.slane %v1213, 4
        %v1219 = vshrl.u32 %v1003, 16
        %v1221 = vrot.slane %v1219, 7
        %v1222 = vshll.u32 %v1003, 16
        %v1224 = vor.u32 %v1221, %v1222
        %v1225 = vsel %vm1022, %v1217, %v1224
        %v1226 = vrot.slane %v1221, 4
        %v1228 = vshrl.u32 %v1004, 16
        %v1230 = vrot.slane %v1228, 7
        %v1231 = vshll.u32 %v1004, 16
        %v1233 = vor.u32 %v1230, %v1231
        %v1234 = vrot.slane %v1230, 4
        %v1236 = vshrl.u32 %v1005, 16
        %v1238 = vrot.slane %v1236, 7
        %v1239 = vshll.u32 %v1005, 16
        %v1241 = vor.u32 %v1238, %v1239
        %v1242 = vsel %vm1022, %v1234, %v1241
        %v1243 = vrot.slane %v1238, 4
        %v1245 = vshrl.u32 %v1006, 16
        %v1247 = vrot.slane %v1245, 7
        %v1248 = vshll.u32 %v1006, 16
        %v1250 = vor.u32 %v1247, %v1248
        %v1251 = vrot.slane %v1247, 4
        %v1253 = vshrl.u32 %v1007, 16
        %v1255 = vrot.slane %v1253, 7
        %v1256 = vshll.u32 %v1007, 16
        %v1258 = vor.u32 %v1255, %v1256
        %v1259 = vsel %vm1022, %v1251, %v1258
        %v1260 = vrot.slane %v1255, 4
        %v1262 = vshrl.u32 %v1008, 16
        %v1264 = vrot.slane %v1262, 7
        %v1265 = vshll.u32 %v1008, 16
        %v1267 = vor.u32 %v1264, %v1265
        %v1268 = vrot.slane %v1264, 4
        %v1270 = vshrl.u32 %v1009, 16
        %v1272 = vrot.slane %v1270, 7
        %v1273 = vshll.u32 %v1009, 16
        %v1275 = vor.u32 %v1272, %v1273
        %v1276 = vsel %vm1022, %v1268, %v1275
        %v1277 = vrot.slane %v1272, 4
        %v1279 = vshrl.u32 %v1010, 16
        %v1281 = vrot.slane %v1279, 7
        %v1282 = vshll.u32 %v1010, 16
        %v1284 = vor.u32 %v1281, %v1282
        %v1285 = vrot.slane %v1281, 4
        %v1287 = vshrl.u32 %v1011, 16
        %v1289 = vrot.slane %v1287, 7
        %v1290 = vshll.u32 %v1011, 16
        %v1292 = vor.u32 %v1289, %v1290
        %v1293 = vsel %vm1022, %v1285, %v1292
        %v1294 = vrot.slane %v1289, 4
        %v1296 = vshrl.u32 %v1012, 16
        %v1298 = vrot.slane %v1296, 7
        %v1299 = vshll.u32 %v1012, 16
        %v1301 = vor.u32 %v1298, %v1299
        %v1302 = vrot.slane %v1298, 4
        %v1304 = vshrl.u32 %v1013, 16
        %v1306 = vrot.slane %v1304, 7
        %v1307 = vshll.u32 %v1013, 16
        %v1309 = vor.u32 %v1306, %v1307
        %v1310 = vsel %vm1022, %v1302, %v1309
        %v1311 = vrot.slane %v1306, 4
        %v1313 = vshrl.u32 %v1014, 16
        %v1315 = vrot.slane %v1313, 7
        %v1316 = vshll.u32 %v1014, 16
        %v1318 = vor.u32 %v1315, %v1316
        %v1319 = vrot.slane %v1315, 4
        %v1321 = vshrl.u32 %v1015, 16
        %v1323 = vrot.slane %v1321, 7
        %v1324 = vshll.u32 %v1015, 16
        %v1326 = vor.u32 %v1323, %v1324
        %v1327 = vsel %vm1022, %v1319, %v1326
        %v1328 = vrot.slane %v1323, 4
        %v1330 = vshrl.u32 %v1016, 16
        %v1332 = vrot.slane %v1330, 7
        %v1333 = vshll.u32 %v1016, 16
        %v1335 = vor.u32 %v1332, %v1333
        %v1336 = vrot.slane %v1332, 4
        %v1338 = vshrl.u32 %v1017, 16
        %v1340 = vrot.slane %v1338, 7
        %v1341 = vshll.u32 %v1017, 16
        %v1343 = vor.u32 %v1340, %v1341
        %v1344 = vsel %vm1022, %v1336, %v1343
        %v1345 = vrot.slane %v1340, 4
        %v1347 = vshrl.u32 %v1018, 16
        %v1349 = vrot.slane %v1347, 7
        %v1350 = vshll.u32 %v1018, 16
        %v1352 = vor.u32 %v1349, %v1350
        %v1353 = vrot.slane %v1349, 4
        %v1355 = vshrl.u32 %v1019, 16
        %v1357 = vrot.slane %v1355, 7
        %v1358 = vshll.u32 %v1019, 16
        %v1360 = vor.u32 %v1357, %v1358
        %v1361 = vsel %vm1022, %v1353, %v1360
        %v1362 = vrot.slane %v1357, 4
        %vm1423 = vcmask 1043456
        %vm1424 = vsmask.f32 7938
        %vm1425 = vmand %vm1423, %vm1424
        %v1426 = vld [vmem:[#allocation2] sm:$0xf]
        %v1427 = vsel %vm1425, %v1029, %v1426
        %1428 = vst [vmem:[#allocation2] sm:$0xf] %v1427
        %1429 = vst [vmem:[#allocation2 + $0x4] sm:$0xf] %v1038
        %vm1430 = vcmask 1040384
        %vm1431 = vmand %vm1430, %vm1020
        %v1432 = vld [vmem:[#allocation2 + $0x8] sm:$0x1]
        %v1433 = vsel %vm1431, %v1039, %v1432
        %1434 = vst [vmem:[#allocation2 + $0x8] sm:$0x1] %v1433
        %v1435 = vld [vmem:[#allocation2 + $0xc] sm:$0xf]
        %v1436 = vsel %vm1425, %v1046, %v1435
        %1437 = vst [vmem:[#allocation2 + $0xc] sm:$0xf] %v1436
        %1438 = vst [vmem:[#allocation2 + $0x10] sm:$0xf] %v1055
        %v1439 = vld [vmem:[#allocation2 + $0x14] sm:$0x1]
        %v1440 = vsel %vm1431, %v1056, %v1439
        %1441 = vst [vmem:[#allocation2 + $0x14] sm:$0x1] %v1440
        %v1442 = vld [vmem:[#allocation2 + $0x18] sm:$0xf]
        %v1443 = vsel %vm1425, %v1063, %v1442
        %1444 = vst [vmem:[#allocation2 + $0x18] sm:$0xf] %v1443
        %1445 = vst [vmem:[#allocation2 + $0x1c] sm:$0xf] %v1072
        %v1446 = vld [vmem:[#allocation2 + $0x20] sm:$0x1]
        %v1447 = vsel %vm1431, %v1073, %v1446
        %1448 = vst [vmem:[#allocation2 + $0x20] sm:$0x1] %v1447
        %v1449 = vld [vmem:[#allocation2 + $0x24] sm:$0xf]
        %v1450 = vsel %vm1425, %v1080, %v1449
        %1451 = vst [vmem:[#allocation2 + $0x24] sm:$0xf] %v1450
        %1452 = vst [vmem:[#allocation2 + $0x28] sm:$0xf] %v1089
        %v1453 = vld [vmem:[#allocation2 + $0x2c] sm:$0x1]
        %v1454 = vsel %vm1431, %v1090, %v1453
        %1455 = vst [vmem:[#allocation2 + $0x2c] sm:$0x1] %v1454
        %v1456 = vld [vmem:[#allocation2 + $0x30] sm:$0xf]
        %v1457 = vsel %vm1425, %v1097, %v1456
        %1458 = vst [vmem:[#allocation2 + $0x30] sm:$0xf] %v1457
        %1459 = vst [vmem:[#allocation2 + $0x34] sm:$0xf] %v1106
        %v1460 = vld [vmem:[#allocation2 + $0x38] sm:$0x1]
        %v1461 = vsel %vm1431, %v1107, %v1460
        %1462 = vst [vmem:[#allocation2 + $0x38] sm:$0x1] %v1461
        %v1463 = vld [vmem:[#allocation2 + $0x3c] sm:$0xf]
        %v1464 = vsel %vm1425, %v1114, %v1463
        %1465 = vst [vmem:[#allocation2 + $0x3c] sm:$0xf] %v1464
        %1466 = vst [vmem:[#allocation2 + $0x40] sm:$0xf] %v1123
        %v1467 = vld [vmem:[#allocation2 + $0x44] sm:$0x1]
        %v1468 = vsel %vm1431, %v1124, %v1467
        %1469 = vst [vmem:[#allocation2 + $0x44] sm:$0x1] %v1468
        %v1470 = vld [vmem:[#allocation2 + $0x48] sm:$0xf]
        %v1471 = vsel %vm1425, %v1131, %v1470
        %1472 = vst [vmem:[#allocation2 + $0x48] sm:$0xf] %v1471
        %1473 = vst [vmem:[#allocation2 + $0x4c] sm:$0xf] %v1140
        %v1474 = vld [vmem:[#allocation2 + $0x50] sm:$0x1]
        %v1475 = vsel %vm1431, %v1141, %v1474
        %1476 = vst [vmem:[#allocation2 + $0x50] sm:$0x1] %v1475
        %v1477 = vld [vmem:[#allocation2 + $0x54] sm:$0xf]
        %v1478 = vsel %vm1425, %v1148, %v1477
        %1479 = vst [vmem:[#allocation2 + $0x54] sm:$0xf] %v1478
        %1480 = vst [vmem:[#allocation2 + $0x58] sm:$0xf] %v1157
        %v1481 = vld [vmem:[#allocation2 + $0x5c] sm:$0x1]
        %v1482 = vsel %vm1431, %v1158, %v1481
        %1483 = vst [vmem:[#allocation2 + $0x5c] sm:$0x1] %v1482
        %v1484 = vld [vmem:[#allocation2 + $0x60] sm:$0xf]
        %v1485 = vsel %vm1425, %v1165, %v1484
        %1486 = vst [vmem:[#allocation2 + $0x60] sm:$0xf] %v1485
        %1487 = vst [vmem:[#allocation2 + $0x64] sm:$0xf] %v1174
        %v1488 = vld [vmem:[#allocation2 + $0x68] sm:$0x1]
        %v1489 = vsel %vm1431, %v1175, %v1488
        %1490 = vst [vmem:[#allocation2 + $0x68] sm:$0x1] %v1489
        %v1491 = vld [vmem:[#allocation2 + $0x6c] sm:$0xf]
        %v1492 = vsel %vm1425, %v1182, %v1491
        %1493 = vst [vmem:[#allocation2 + $0x6c] sm:$0xf] %v1492
        %1494 = vst [vmem:[#allocation2 + $0x70] sm:$0xf] %v1191
        %v1495 = vld [vmem:[#allocation2 + $0x74] sm:$0x1]
        %v1496 = vsel %vm1431, %v1192, %v1495
        %1497 = vst [vmem:[#allocation2 + $0x74] sm:$0x1] %v1496
        %v1498 = vld [vmem:[#allocation2 + $0x78] sm:$0xf]
        %v1499 = vsel %vm1425, %v1199, %v1498
        %1500 = vst [vmem:[#allocation2 + $0x78] sm:$0xf] %v1499
        %1501 = vst [vmem:[#allocation2 + $0x7c] sm:$0xf] %v1208
        %v1502 = vld [vmem:[#allocation2 + $0x80] sm:$0x1]
        %v1503 = vsel %vm1431, %v1209, %v1502
        %1504 = vst [vmem:[#allocation2 + $0x80] sm:$0x1] %v1503
        %v1505 = vld [vmem:[#allocation2 + $0x84] sm:$0xf]
        %v1506 = vsel %vm1425, %v1216, %v1505
        %1507 = vst [vmem:[#allocation2 + $0x84] sm:$0xf] %v1506
        %1508 = vst [vmem:[#allocation2 + $0x88] sm:$0xf] %v1225
        %v1509 = vld [vmem:[#allocation2 + $0x8c] sm:$0x1]
        %v1510 = vsel %vm1431, %v1226, %v1509
        %1511 = vst [vmem:[#allocation2 + $0x8c] sm:$0x1] %v1510
        %v1512 = vld [vmem:[#allocation2 + $0x90] sm:$0xf]
        %v1513 = vsel %vm1425, %v1233, %v1512
        %1514 = vst [vmem:[#allocation2 + $0x90] sm:$0xf] %v1513
        %1515 = vst [vmem:[#allocation2 + $0x94] sm:$0xf] %v1242
        %v1516 = vld [vmem:[#allocation2 + $0x98] sm:$0x1]
        %v1517 = vsel %vm1431, %v1243, %v1516
        %1518 = vst [vmem:[#allocation2 + $0x98] sm:$0x1] %v1517
        %v1519 = vld [vmem:[#allocation2 + $0x9c] sm:$0xf]
        %v1520 = vsel %vm1425, %v1250, %v1519
        %1521 = vst [vmem:[#allocation2 + $0x9c] sm:$0xf] %v1520
        %1522 = vst [vmem:[#allocation2 + $0xa0] sm:$0xf] %v1259
        %v1523 = vld [vmem:[#allocation2 + $0xa4] sm:$0x1]
        %v1524 = vsel %vm1431, %v1260, %v1523
        %1525 = vst [vmem:[#allocation2 + $0xa4] sm:$0x1] %v1524
        %v1526 = vld [vmem:[#allocation2 + $0xa8] sm:$0xf]
        %v1527 = vsel %vm1425, %v1267, %v1526
        %1528 = vst [vmem:[#allocation2 + $0xa8] sm:$0xf] %v1527
        %1529 = vst [vmem:[#allocation2 + $0xac] sm:$0xf] %v1276
        %v1530 = vld [vmem:[#allocation2 + $0xb0] sm:$0x1]
        %v1531 = vsel %vm1431, %v1277, %v1530
        %1532 = vst [vmem:[#allocation2 + $0xb0] sm:$0x1] %v1531
        %v1533 = vld [vmem:[#allocation2 + $0xb4] sm:$0xf]
        %v1534 = vsel %vm1425, %v1284, %v1533
        %1535 = vst [vmem:[#allocation2 + $0xb4] sm:$0xf] %v1534
        %1536 = vst [vmem:[#allocation2 + $0xb8] sm:$0xf] %v1293
        %v1537 = vld [vmem:[#allocation2 + $0xbc] sm:$0x1]
        %v1538 = vsel %vm1431, %v1294, %v1537
        %1539 = vst [vmem:[#allocation2 + $0xbc] sm:$0x1] %v1538
        %v1540 = vld [vmem:[#allocation2 + $0xc0] sm:$0xf]
        %v1541 = vsel %vm1425, %v1301, %v1540
        %1542 = vst [vmem:[#allocation2 + $0xc0] sm:$0xf] %v1541
        %1543 = vst [vmem:[#allocation2 + $0xc4] sm:$0xf] %v1310
        %v1544 = vld [vmem:[#allocation2 + $0xc8] sm:$0x1]
        %v1545 = vsel %vm1431, %v1311, %v1544
        %1546 = vst [vmem:[#allocation2 + $0xc8] sm:$0x1] %v1545
        %v1547 = vld [vmem:[#allocation2 + $0xcc] sm:$0xf]
        %v1548 = vsel %vm1425, %v1318, %v1547
        %1549 = vst [vmem:[#allocation2 + $0xcc] sm:$0xf] %v1548
        %1550 = vst [vmem:[#allocation2 + $0xd0] sm:$0xf] %v1327
        %v1551 = vld [vmem:[#allocation2 + $0xd4] sm:$0x1]
        %v1552 = vsel %vm1431, %v1328, %v1551
        %1553 = vst [vmem:[#allocation2 + $0xd4] sm:$0x1] %v1552
        %v1554 = vld [vmem:[#allocation2 + $0xd8] sm:$0xf]
        %v1555 = vsel %vm1425, %v1335, %v1554
        %1556 = vst [vmem:[#allocation2 + $0xd8] sm:$0xf] %v1555
        %1557 = vst [vmem:[#allocation2 + $0xdc] sm:$0xf] %v1344
        %v1558 = vld [vmem:[#allocation2 + $0xe0] sm:$0x1]
        %v1559 = vsel %vm1431, %v1345, %v1558
        %1560 = vst [vmem:[#allocation2 + $0xe0] sm:$0x1] %v1559
        %v1561 = vld [vmem:[#allocation2 + $0xe4] sm:$0xf]
        %v1562 = vsel %vm1425, %v1352, %v1561
        %1563 = vst [vmem:[#allocation2 + $0xe4] sm:$0xf] %v1562
        %1564 = vst [vmem:[#allocation2 + $0xe8] sm:$0xf] %v1361
        %v1565 = vld [vmem:[#allocation2 + $0xec] sm:$0x1]
        %v1566 = vsel %vm1431, %v1362, %v1565
        %1567 = vst [vmem:[#allocation2 + $0xec] sm:$0x1] %v1566
        %v1568 = vld [vmem:[#allocation2] sm:$0x1]
        %v1569 = vsel %vm1431, 0, %v1568
        %1570 = vst [vmem:[#allocation2] sm:$0x1] %v1569
        %v1571 = vld [vmem:[#allocation2 + $0xc] sm:$0x1]
        %v1572 = vsel %vm1431, 0, %v1571
        %1573 = vst [vmem:[#allocation2 + $0xc] sm:$0x1] %v1572
        %v1574 = vld [vmem:[#allocation2 + $0x18] sm:$0x1]
        %v1575 = vsel %vm1431, 0, %v1574
        %1576 = vst [vmem:[#allocation2 + $0x18] sm:$0x1] %v1575
        %v1577 = vld [vmem:[#allocation2 + $0x24] sm:$0x1]
        %v1578 = vsel %vm1431, 0, %v1577
        %1579 = vst [vmem:[#allocation2 + $0x24] sm:$0x1] %v1578
        %v1580 = vld [vmem:[#allocation2 + $0x30] sm:$0x1]
        %v1581 = vsel %vm1431, 0, %v1580
        %1582 = vst [vmem:[#allocation2 + $0x30] sm:$0x1] %v1581
        %v1583 = vld [vmem:[#allocation2 + $0x3c] sm:$0x1]
        %v1584 = vsel %vm1431, 0, %v1583
        %1585 = vst [vmem:[#allocation2 + $0x3c] sm:$0x1] %v1584
        %v1586 = vld [vmem:[#allocation2 + $0x48] sm:$0x1]
        %v1587 = vsel %vm1431, 0, %v1586
        %1588 = vst [vmem:[#allocation2 + $0x48] sm:$0x1] %v1587
        %v1589 = vld [vmem:[#allocation2 + $0x54] sm:$0x1]
        %v1590 = vsel %vm1431, 0, %v1589
        %1591 = vst [vmem:[#allocation2 + $0x54] sm:$0x1] %v1590
        %v1592 = vld [vmem:[#allocation2 + $0x60] sm:$0x1]
        %v1593 = vsel %vm1431, 0, %v1592
        %1594 = vst [vmem:[#allocation2 + $0x60] sm:$0x1] %v1593
        %v1595 = vld [vmem:[#allocation2 + $0x6c] sm:$0x1]
        %v1596 = vsel %vm1431, 0, %v1595
        %1597 = vst [vmem:[#allocation2 + $0x6c] sm:$0x1] %v1596
        %v1598 = vld [vmem:[#allocation2 + $0x78] sm:$0x1]
        %v1599 = vsel %vm1431, 0, %v1598
        %1600 = vst [vmem:[#allocation2 + $0x78] sm:$0x1] %v1599
        %v1601 = vld [vmem:[#allocation2 + $0x84] sm:$0x1]
        %v1602 = vsel %vm1431, 0, %v1601
        %1603 = vst [vmem:[#allocation2 + $0x84] sm:$0x1] %v1602
        %v1604 = vld [vmem:[#allocation2 + $0x90] sm:$0x1]
        %v1605 = vsel %vm1431, 0, %v1604
        %1606 = vst [vmem:[#allocation2 + $0x90] sm:$0x1] %v1605
        %v1607 = vld [vmem:[#allocation2 + $0x9c] sm:$0x1]
        %v1608 = vsel %vm1431, 0, %v1607
        %1609 = vst [vmem:[#allocation2 + $0x9c] sm:$0x1] %v1608
        %v1610 = vld [vmem:[#allocation2 + $0xa8] sm:$0x1]
        %v1611 = vsel %vm1431, 0, %v1610
        %1612 = vst [vmem:[#allocation2 + $0xa8] sm:$0x1] %v1611
        %v1613 = vld [vmem:[#allocation2 + $0xb4] sm:$0x1]
        %v1614 = vsel %vm1431, 0, %v1613
        %1615 = vst [vmem:[#allocation2 + $0xb4] sm:$0x1] %v1614
        %v1616 = vld [vmem:[#allocation2 + $0xc0] sm:$0x1]
        %v1617 = vsel %vm1431, 0, %v1616
        %1618 = vst [vmem:[#allocation2 + $0xc0] sm:$0x1] %v1617
        %v1619 = vld [vmem:[#allocation2 + $0xcc] sm:$0x1]
        %v1620 = vsel %vm1431, 0, %v1619
        %1621 = vst [vmem:[#allocation2 + $0xcc] sm:$0x1] %v1620
        %v1622 = vld [vmem:[#allocation2 + $0xd8] sm:$0x1]
        %v1623 = vsel %vm1431, 0, %v1622
        %1624 = vst [vmem:[#allocation2 + $0xd8] sm:$0x1] %v1623
        %v1625 = vld [vmem:[#allocation2 + $0xe4] sm:$0x1]
        %v1626 = vsel %vm1431, 0, %v1625
        %1627 = vst [vmem:[#allocation2 + $0xe4] sm:$0x1] %v1626
        %v1628 = vld [vmem:[#allocation2 + $0x8] sm:$0xf]
        %v1629 = vsel %vm1425, 0, %v1628
        %1630 = vst [vmem:[#allocation2 + $0x8] sm:$0xf] %v1629
        %v1631 = vld [vmem:[#allocation2 + $0x14] sm:$0xf]
        %v1632 = vsel %vm1425, 0, %v1631
        %1633 = vst [vmem:[#allocation2 + $0x14] sm:$0xf] %v1632
        %v1634 = vld [vmem:[#allocation2 + $0x20] sm:$0xf]
        %v1635 = vsel %vm1425, 0, %v1634
        %1636 = vst [vmem:[#allocation2 + $0x20] sm:$0xf] %v1635
        %v1637 = vld [vmem:[#allocation2 + $0x2c] sm:$0xf]
        %v1638 = vsel %vm1425, 0, %v1637
        %1639 = vst [vmem:[#allocation2 + $0x2c] sm:$0xf] %v1638
        %v1640 = vld [vmem:[#allocation2 + $0x38] sm:$0xf]
        %v1641 = vsel %vm1425, 0, %v1640
        %1642 = vst [vmem:[#allocation2 + $0x38] sm:$0xf] %v1641
        %v1643 = vld [vmem:[#allocation2 + $0x44] sm:$0xf]
        %v1644 = vsel %vm1425, 0, %v1643
        %1645 = vst [vmem:[#allocation2 + $0x44] sm:$0xf] %v1644
        %v1646 = vld [vmem:[#allocation2 + $0x50] sm:$0xf]
        %v1647 = vsel %vm1425, 0, %v1646
        %1648 = vst [vmem:[#allocation2 + $0x50] sm:$0xf] %v1647
        %v1649 = vld [vmem:[#allocation2 + $0x5c] sm:$0xf]
        %v1650 = vsel %vm1425, 0, %v1649
        %1651 = vst [vmem:[#allocation2 + $0x5c] sm:$0xf] %v1650
        %v1652 = vld [vmem:[#allocation2 + $0x68] sm:$0xf]
        %v1653 = vsel %vm1425, 0, %v1652
        %1654 = vst [vmem:[#allocation2 + $0x68] sm:$0xf] %v1653
        %v1655 = vld [vmem:[#allocation2 + $0x74] sm:$0xf]
        %v1656 = vsel %vm1425, 0, %v1655
        %1657 = vst [vmem:[#allocation2 + $0x74] sm:$0xf] %v1656
        %v1658 = vld [vmem:[#allocation2 + $0x80] sm:$0xf]
        %v1659 = vsel %vm1425, 0, %v1658
        %1660 = vst [vmem:[#allocation2 + $0x80] sm:$0xf] %v1659
        %v1661 = vld [vmem:[#allocation2 + $0x8c] sm:$0xf]
        %v1662 = vsel %vm1425, 0, %v1661
        %1663 = vst [vmem:[#allocation2 + $0x8c] sm:$0xf] %v1662
        %v1664 = vld [vmem:[#allocation2 + $0x98] sm:$0xf]
        %v1665 = vsel %vm1425, 0, %v1664
        %1666 = vst [vmem:[#allocation2 + $0x98] sm:$0xf] %v1665
        %v1667 = vld [vmem:[#allocation2 + $0xa4] sm:$0xf]
        %v1668 = vsel %vm1425, 0, %v1667
        %1669 = vst [vmem:[#allocation2 + $0xa4] sm:$0xf] %v1668
        %v1670 = vld [vmem:[#allocation2 + $0xb0] sm:$0xf]
        %v1671 = vsel %vm1425, 0, %v1670
        %1672 = vst [vmem:[#allocation2 + $0xb0] sm:$0xf] %v1671
        %v1673 = vld [vmem:[#allocation2 + $0xbc] sm:$0xf]
        %v1674 = vsel %vm1425, 0, %v1673
        %1675 = vst [vmem:[#allocation2 + $0xbc] sm:$0xf] %v1674
        %v1676 = vld [vmem:[#allocation2 + $0xc8] sm:$0xf]
        %v1677 = vsel %vm1425, 0, %v1676
        %1678 = vst [vmem:[#allocation2 + $0xc8] sm:$0xf] %v1677
        %v1679 = vld [vmem:[#allocation2 + $0xd4] sm:$0xf]
        %v1680 = vsel %vm1425, 0, %v1679
        %1681 = vst [vmem:[#allocation2 + $0xd4] sm:$0xf] %v1680
        %v1682 = vld [vmem:[#allocation2 + $0xe0] sm:$0xf]
        %v1683 = vsel %vm1425, 0, %v1682
        %1684 = vst [vmem:[#allocation2 + $0xe0] sm:$0xf] %v1683
        %v1685 = vld [vmem:[#allocation2 + $0xec] sm:$0xf]
        %v1686 = vsel %vm1425, 0, %v1685
        %1687 = vst [vmem:[#allocation2 + $0xec] sm:$0xf] %v1686
        %p1688 = scmp.eq.s32.totalorder %s30, 0
        // Predicated region
        $region61: #{tpu_custom_call.1} parent=47 // pred_check
          %p1689 = pneg %p1688
        $region62: #{tpu_custom_call.1} parent=47 // pred_check_branch
          %1691 = sbr.rel (%p1689) target = $region64
        $region63: #{tpu_custom_call.1} parent=47 // pred_region
          %1692 = vst [vmem:[#allocation2] sm:$0xf] 0
          %1693 = vst [vmem:[#allocation2 + $0x4] sm:$0xf] 0
          %1694 = vst [vmem:[#allocation2 + $0x8] sm:$0xf] 0
          %1695 = vst [vmem:[#allocation2 + $0x78] sm:$0xf] 0
          %1696 = vst [vmem:[#allocation2 + $0x7c] sm:$0xf] 0
          %1697 = vst [vmem:[#allocation2 + $0x80] sm:$0xf] 0
        $region64: #{tpu_custom_call.1} parent=47 // pred_fallthru
          _
        %p1698 = scmp.eq.s32.totalorder %s30, 1
        // Predicated region
        $region65: #{tpu_custom_call.1} parent=47 // pred_check
          %p1699 = pneg %p1698
        $region66: #{tpu_custom_call.1} parent=47 // pred_check_branch
          %1701 = sbr.rel (%p1699) target = $region68
        $region67: #{tpu_custom_call.1} parent=47 // pred_region
          %s1702 = scalar_lea.vmem [#allocation2], 108
          %1703 = vst [vmem:[%s1702] sm:$0xf] 0
          %1704 = vst [vmem:[%s1702 + $0x4] sm:$0xf] 0
          %1705 = vst [vmem:[%s1702 + $0x8] sm:$0xf] 0
          %1706 = vst [vmem:[%s1702 + $0x78] sm:$0xf] 0
          %1707 = vst [vmem:[%s1702 + $0x7c] sm:$0xf] 0
          %1708 = vst [vmem:[%s1702 + $0x80] sm:$0xf] 0
        $region68: #{tpu_custom_call.1} parent=47 // pred_fallthru
          _
        %v1709 = vld [vmem:[#allocation2] sm:$0xf]
        %v1710 = vld [vmem:[#allocation2 + $0x4] sm:$0xf]
        %v1711 = vld [vmem:[#allocation2 + $0x8] sm:$0xf]
        %v1712 = vld [vmem:[#allocation2 + $0xc] sm:$0xf]
        %v1713 = vld [vmem:[#allocation2 + $0x10] sm:$0xf]
        %v1714 = vld [vmem:[#allocation2 + $0x14] sm:$0xf]
        %v1715 = vld [vmem:[#allocation2 + $0x18] sm:$0xf]
        %v1716 = vld [vmem:[#allocation2 + $0x1c] sm:$0xf]
        %v1717 = vld [vmem:[#allocation2 + $0x20] sm:$0xf]
        %v1718 = vld [vmem:[#allocation2 + $0x24] sm:$0xf]
        %v1719 = vld [vmem:[#allocation2 + $0x28] sm:$0xf]
        %v1720 = vld [vmem:[#allocation2 + $0x2c] sm:$0xf]
        %v1721 = vld [vmem:[#allocation2 + $0x30] sm:$0xf]
        %v1722 = vld [vmem:[#allocation2 + $0x34] sm:$0xf]
        %v1723 = vld [vmem:[#allocation2 + $0x38] sm:$0xf]
        %v1724 = vld [vmem:[#allocation2 + $0x3c] sm:$0xf]
        %v1725 = vld [vmem:[#allocation2 + $0x40] sm:$0xf]
        %v1726 = vld [vmem:[#allocation2 + $0x44] sm:$0xf]
        %v1727 = vld [vmem:[#allocation2 + $0x48] sm:$0xf]
        %v1728 = vld [vmem:[#allocation2 + $0x4c] sm:$0xf]
        %v1729 = vld [vmem:[#allocation2 + $0x50] sm:$0xf]
        %v1730 = vld [vmem:[#allocation2 + $0x54] sm:$0xf]
        %v1731 = vld [vmem:[#allocation2 + $0x58] sm:$0xf]
        %v1732 = vld [vmem:[#allocation2 + $0x5c] sm:$0xf]
        %v1733 = vld [vmem:[#allocation2 + $0x78] sm:$0xf]
        %v1734 = vld [vmem:[#allocation2 + $0x7c] sm:$0xf]
        %v1735 = vld [vmem:[#allocation2 + $0x80] sm:$0xf]
        %v1736 = vld [vmem:[#allocation2 + $0x84] sm:$0xf]
        %v1737 = vld [vmem:[#allocation2 + $0x88] sm:$0xf]
        %v1738 = vld [vmem:[#allocation2 + $0x8c] sm:$0xf]
        %v1739 = vld [vmem:[#allocation2 + $0x90] sm:$0xf]
        %v1740 = vld [vmem:[#allocation2 + $0x94] sm:$0xf]
        %v1741 = vld [vmem:[#allocation2 + $0x98] sm:$0xf]
        %v1742 = vld [vmem:[#allocation2 + $0x9c] sm:$0xf]
        %v1743 = vld [vmem:[#allocation2 + $0xa0] sm:$0xf]
        %v1744 = vld [vmem:[#allocation2 + $0xa4] sm:$0xf]
        %v1745 = vld [vmem:[#allocation2 + $0xa8] sm:$0xf]
        %v1746 = vld [vmem:[#allocation2 + $0xac] sm:$0xf]
        %v1747 = vld [vmem:[#allocation2 + $0xb0] sm:$0xf]
        %v1748 = vld [vmem:[#allocation2 + $0xb4] sm:$0xf]
        %v1749 = vld [vmem:[#allocation2 + $0xb8] sm:$0xf]
        %v1750 = vld [vmem:[#allocation2 + $0xbc] sm:$0xf]
        %v1751 = vld [vmem:[#allocation2 + $0xc0] sm:$0xf]
        %v1752 = vld [vmem:[#allocation2 + $0xc4] sm:$0xf]
        %v1753 = vld [vmem:[#allocation2 + $0xc8] sm:$0xf]
        %v1754 = vld [vmem:[#allocation2 + $0xcc] sm:$0xf]
        %v1755 = vld [vmem:[#allocation2 + $0xd0] sm:$0xf]
        %v1756 = vld [vmem:[#allocation2 + $0xd4] sm:$0xf]
        %s1757 = scalar_lea.vmem [#allocation2], 12
        %v1758 = vld [vmem:[%s1757] sm:$0xf]
        %v1759 = vld [vmem:[%s1757 + $0x4] sm:$0xf]
        %v1760 = vld [vmem:[%s1757 + $0x8] sm:$0xf]
        %v1761 = vld [vmem:[%s1757 + $0xc] sm:$0xf]
        %v1762 = vld [vmem:[%s1757 + $0x10] sm:$0xf]
        %v1763 = vld [vmem:[%s1757 + $0x14] sm:$0xf]
        %v1764 = vld [vmem:[%s1757 + $0x18] sm:$0xf]
        %v1765 = vld [vmem:[%s1757 + $0x1c] sm:$0xf]
        %v1766 = vld [vmem:[%s1757 + $0x20] sm:$0xf]
        %v1767 = vld [vmem:[%s1757 + $0x24] sm:$0xf]
        %v1768 = vld [vmem:[%s1757 + $0x28] sm:$0xf]
        %v1769 = vld [vmem:[%s1757 + $0x2c] sm:$0xf]
        %v1770 = vld [vmem:[%s1757 + $0x30] sm:$0xf]
        %v1771 = vld [vmem:[%s1757 + $0x34] sm:$0xf]
        %v1772 = vld [vmem:[%s1757 + $0x38] sm:$0xf]
        %v1773 = vld [vmem:[%s1757 + $0x3c] sm:$0xf]
        %v1774 = vld [vmem:[%s1757 + $0x40] sm:$0xf]
        %v1775 = vld [vmem:[%s1757 + $0x44] sm:$0xf]
        %v1776 = vld [vmem:[%s1757 + $0x48] sm:$0xf]
        %v1777 = vld [vmem:[%s1757 + $0x4c] sm:$0xf]
        %v1778 = vld [vmem:[%s1757 + $0x50] sm:$0xf]
        %v1779 = vld [vmem:[%s1757 + $0x54] sm:$0xf]
        %v1780 = vld [vmem:[%s1757 + $0x58] sm:$0xf]
        %v1781 = vld [vmem:[%s1757 + $0x5c] sm:$0xf]
        %v1782 = vld [vmem:[%s1757 + $0x78] sm:$0xf]
        %v1783 = vld [vmem:[%s1757 + $0x7c] sm:$0xf]
        %v1784 = vld [vmem:[%s1757 + $0x80] sm:$0xf]
        %v1785 = vld [vmem:[%s1757 + $0x84] sm:$0xf]
        %v1786 = vld [vmem:[%s1757 + $0x88] sm:$0xf]
        %v1787 = vld [vmem:[%s1757 + $0x8c] sm:$0xf]
        %v1788 = vld [vmem:[%s1757 + $0x90] sm:$0xf]
        %v1789 = vld [vmem:[%s1757 + $0x94] sm:$0xf]
        %v1790 = vld [vmem:[%s1757 + $0x98] sm:$0xf]
        %v1791 = vld [vmem:[%s1757 + $0x9c] sm:$0xf]
        %v1792 = vld [vmem:[%s1757 + $0xa0] sm:$0xf]
        %v1793 = vld [vmem:[%s1757 + $0xa4] sm:$0xf]
        %v1794 = vld [vmem:[%s1757 + $0xa8] sm:$0xf]
        %v1795 = vld [vmem:[%s1757 + $0xac] sm:$0xf]
        %v1796 = vld [vmem:[%s1757 + $0xb0] sm:$0xf]
        %v1797 = vld [vmem:[%s1757 + $0xb4] sm:$0xf]
        %v1798 = vld [vmem:[%s1757 + $0xb8] sm:$0xf]
        %v1799 = vld [vmem:[%s1757 + $0xbc] sm:$0xf]
        %v1800 = vld [vmem:[%s1757 + $0xc0] sm:$0xf]
        %v1801 = vld [vmem:[%s1757 + $0xc4] sm:$0xf]
        %v1802 = vld [vmem:[%s1757 + $0xc8] sm:$0xf]
        %v1803 = vld [vmem:[%s1757 + $0xcc] sm:$0xf]
        %v1804 = vld [vmem:[%s1757 + $0xd0] sm:$0xf]
        %v1805 = vld [vmem:[%s1757 + $0xd4] sm:$0xf]
        %s1806 = scalar_lea.vmem [#allocation2], 24
        %v1807 = vld [vmem:[%s1806] sm:$0xf]
        %v1808 = vld [vmem:[%s1806 + $0x4] sm:$0xf]
        %v1809 = vld [vmem:[%s1806 + $0x8] sm:$0xf]
        %v1810 = vld [vmem:[%s1806 + $0xc] sm:$0xf]
        %v1811 = vld [vmem:[%s1806 + $0x10] sm:$0xf]
        %v1812 = vld [vmem:[%s1806 + $0x14] sm:$0xf]
        %v1813 = vld [vmem:[%s1806 + $0x18] sm:$0xf]
        %v1814 = vld [vmem:[%s1806 + $0x1c] sm:$0xf]
        %v1815 = vld [vmem:[%s1806 + $0x20] sm:$0xf]
        %v1816 = vld [vmem:[%s1806 + $0x24] sm:$0xf]
        %v1817 = vld [vmem:[%s1806 + $0x28] sm:$0xf]
        %v1818 = vld [vmem:[%s1806 + $0x2c] sm:$0xf]
        %v1819 = vld [vmem:[%s1806 + $0x30] sm:$0xf]
        %v1820 = vld [vmem:[%s1806 + $0x34] sm:$0xf]
        %v1821 = vld [vmem:[%s1806 + $0x38] sm:$0xf]
        %v1822 = vld [vmem:[%s1806 + $0x3c] sm:$0xf]
        %v1823 = vld [vmem:[%s1806 + $0x40] sm:$0xf]
        %v1824 = vld [vmem:[%s1806 + $0x44] sm:$0xf]
        %v1825 = vld [vmem:[%s1806 + $0x48] sm:$0xf]
        %v1826 = vld [vmem:[%s1806 + $0x4c] sm:$0xf]
        %v1827 = vld [vmem:[%s1806 + $0x50] sm:$0xf]
        %v1828 = vld [vmem:[%s1806 + $0x54] sm:$0xf]
        %v1829 = vld [vmem:[%s1806 + $0x58] sm:$0xf]
        %v1830 = vld [vmem:[%s1806 + $0x5c] sm:$0xf]
        %v1831 = vld [vmem:[%s1806 + $0x78] sm:$0xf]
        %v1832 = vld [vmem:[%s1806 + $0x7c] sm:$0xf]
        %v1833 = vld [vmem:[%s1806 + $0x80] sm:$0xf]
        %v1834 = vld [vmem:[%s1806 + $0x84] sm:$0xf]
        %v1835 = vld [vmem:[%s1806 + $0x88] sm:$0xf]
        %v1836 = vld [vmem:[%s1806 + $0x8c] sm:$0xf]
        %v1837 = vld [vmem:[%s1806 + $0x90] sm:$0xf]
        %v1838 = vld [vmem:[%s1806 + $0x94] sm:$0xf]
        %v1839 = vld [vmem:[%s1806 + $0x98] sm:$0xf]
        %v1840 = vld [vmem:[%s1806 + $0x9c] sm:$0xf]
        %v1841 = vld [vmem:[%s1806 + $0xa0] sm:$0xf]
        %v1842 = vld [vmem:[%s1806 + $0xa4] sm:$0xf]
        %v1843 = vld [vmem:[%s1806 + $0xa8] sm:$0xf]
        %v1844 = vld [vmem:[%s1806 + $0xac] sm:$0xf]
        %v1845 = vld [vmem:[%s1806 + $0xb0] sm:$0xf]
        %v1846 = vld [vmem:[%s1806 + $0xb4] sm:$0xf]
        %v1847 = vld [vmem:[%s1806 + $0xb8] sm:$0xf]
        %v1848 = vld [vmem:[%s1806 + $0xbc] sm:$0xf]
        %v1849 = vld [vmem:[%s1806 + $0xc0] sm:$0xf]
        %v1850 = vld [vmem:[%s1806 + $0xc4] sm:$0xf]
        %v1851 = vld [vmem:[%s1806 + $0xc8] sm:$0xf]
        %v1852 = vld [vmem:[%s1806 + $0xcc] sm:$0xf]
        %v1853 = vld [vmem:[%s1806 + $0xd0] sm:$0xf]
        %v1854 = vld [vmem:[%s1806 + $0xd4] sm:$0xf]
        %v1903 = vunpack.c.l.b16 %v1709
        %v1904 = vunpack.c.l.b16 %v1710
        %v1905 = vunpack.c.l.b16 %v1711
        %v1906 = vunpack.c.l.b16 %v1712
        %v1907 = vunpack.c.l.b16 %v1713
        %v1908 = vunpack.c.l.b16 %v1714
        %v1909 = vunpack.c.l.b16 %v1715
        %v1910 = vunpack.c.l.b16 %v1716
        %v1911 = vunpack.c.l.b16 %v1717
        %v1912 = vunpack.c.l.b16 %v1718
        %v1913 = vunpack.c.l.b16 %v1719
        %v1914 = vunpack.c.l.b16 %v1720
        %v1915 = vunpack.c.l.b16 %v1721
        %v1916 = vunpack.c.l.b16 %v1722
        %v1917 = vunpack.c.l.b16 %v1723
        %v1918 = vunpack.c.l.b16 %v1724
        %v1919 = vunpack.c.l.b16 %v1725
        %v1920 = vunpack.c.l.b16 %v1726
        %v1921 = vunpack.c.l.b16 %v1727
        %v1922 = vunpack.c.l.b16 %v1728
        %v1923 = vunpack.c.l.b16 %v1729
        %v1924 = vunpack.c.l.b16 %v1730
        %v1925 = vunpack.c.l.b16 %v1731
        %v1926 = vunpack.c.l.b16 %v1732
        %v1927 = vunpack.c.l.b16 %v1733
        %v1928 = vunpack.c.l.b16 %v1734
        %v1929 = vunpack.c.l.b16 %v1735
        %v1930 = vunpack.c.l.b16 %v1736
        %v1931 = vunpack.c.l.b16 %v1737
        %v1932 = vunpack.c.l.b16 %v1738
        %v1933 = vunpack.c.l.b16 %v1739
        %v1934 = vunpack.c.l.b16 %v1740
        %v1935 = vunpack.c.l.b16 %v1741
        %v1936 = vunpack.c.l.b16 %v1742
        %v1937 = vunpack.c.l.b16 %v1743
        %v1938 = vunpack.c.l.b16 %v1744
        %v1939 = vunpack.c.l.b16 %v1745
        %v1940 = vunpack.c.l.b16 %v1746
        %v1941 = vunpack.c.l.b16 %v1747
        %v1942 = vunpack.c.l.b16 %v1748
        %v1943 = vunpack.c.l.b16 %v1749
        %v1944 = vunpack.c.l.b16 %v1750
        %v1945 = vunpack.c.l.b16 %v1751
        %v1946 = vunpack.c.l.b16 %v1752
        %v1947 = vunpack.c.l.b16 %v1753
        %v1948 = vunpack.c.l.b16 %v1754
        %v1949 = vunpack.c.l.b16 %v1755
        %v1950 = vunpack.c.l.b16 %v1756
        %v1999 = vunpack.c.l.b16 %v1758
        %v2000 = vunpack.c.l.b16 %v1759
        %v2001 = vunpack.c.l.b16 %v1760
        %v2002 = vunpack.c.l.b16 %v1761
        %v2003 = vunpack.c.l.b16 %v1762
        %v2004 = vunpack.c.l.b16 %v1763
        %v2005 = vunpack.c.l.b16 %v1764
        %v2006 = vunpack.c.l.b16 %v1765
        %v2007 = vunpack.c.l.b16 %v1766
        %v2008 = vunpack.c.l.b16 %v1767
        %v2009 = vunpack.c.l.b16 %v1768
        %v2010 = vunpack.c.l.b16 %v1769
        %v2011 = vunpack.c.l.b16 %v1770
        %v2012 = vunpack.c.l.b16 %v1771
        %v2013 = vunpack.c.l.b16 %v1772
        %v2014 = vunpack.c.l.b16 %v1773
        %v2015 = vunpack.c.l.b16 %v1774
        %v2016 = vunpack.c.l.b16 %v1775
        %v2017 = vunpack.c.l.b16 %v1776
        %v2018 = vunpack.c.l.b16 %v1777
        %v2019 = vunpack.c.l.b16 %v1778
        %v2020 = vunpack.c.l.b16 %v1779
        %v2021 = vunpack.c.l.b16 %v1780
        %v2022 = vunpack.c.l.b16 %v1781
        %v2023 = vunpack.c.l.b16 %v1782
        %v2024 = vunpack.c.l.b16 %v1783
        %v2025 = vunpack.c.l.b16 %v1784
        %v2026 = vunpack.c.l.b16 %v1785
        %v2027 = vunpack.c.l.b16 %v1786
        %v2028 = vunpack.c.l.b16 %v1787
        %v2029 = vunpack.c.l.b16 %v1788
        %v2030 = vunpack.c.l.b16 %v1789
        %v2031 = vunpack.c.l.b16 %v1790
        %v2032 = vunpack.c.l.b16 %v1791
        %v2033 = vunpack.c.l.b16 %v1792
        %v2034 = vunpack.c.l.b16 %v1793
        %v2035 = vunpack.c.l.b16 %v1794
        %v2036 = vunpack.c.l.b16 %v1795
        %v2037 = vunpack.c.l.b16 %v1796
        %v2038 = vunpack.c.l.b16 %v1797
        %v2039 = vunpack.c.l.b16 %v1798
        %v2040 = vunpack.c.l.b16 %v1799
        %v2041 = vunpack.c.l.b16 %v1800
        %v2042 = vunpack.c.l.b16 %v1801
        %v2043 = vunpack.c.l.b16 %v1802
        %v2044 = vunpack.c.l.b16 %v1803
        %v2045 = vunpack.c.l.b16 %v1804
        %v2046 = vunpack.c.l.b16 %v1805
        %v2095 = vunpack.c.l.b16 %v1807
        %v2096 = vunpack.c.l.b16 %v1808
        %v2097 = vunpack.c.l.b16 %v1809
        %v2098 = vunpack.c.l.b16 %v1810
        %v2099 = vunpack.c.l.b16 %v1811
        %v2100 = vunpack.c.l.b16 %v1812
        %v2101 = vunpack.c.l.b16 %v1813
        %v2102 = vunpack.c.l.b16 %v1814
        %v2103 = vunpack.c.l.b16 %v1815
        %v2104 = vunpack.c.l.b16 %v1816
        %v2105 = vunpack.c.l.b16 %v1817
        %v2106 = vunpack.c.l.b16 %v1818
        %v2107 = vunpack.c.l.b16 %v1819
        %v2108 = vunpack.c.l.b16 %v1820
        %v2109 = vunpack.c.l.b16 %v1821
        %v2110 = vunpack.c.l.b16 %v1822
        %v2111 = vunpack.c.l.b16 %v1823
        %v2112 = vunpack.c.l.b16 %v1824
        %v2113 = vunpack.c.l.b16 %v1825
        %v2114 = vunpack.c.l.b16 %v1826
        %v2115 = vunpack.c.l.b16 %v1827
        %v2116 = vunpack.c.l.b16 %v1828
        %v2117 = vunpack.c.l.b16 %v1829
        %v2118 = vunpack.c.l.b16 %v1830
        %v2119 = vunpack.c.l.b16 %v1831
        %v2120 = vunpack.c.l.b16 %v1832
        %v2121 = vunpack.c.l.b16 %v1833
        %v2122 = vunpack.c.l.b16 %v1834
        %v2123 = vunpack.c.l.b16 %v1835
        %v2124 = vunpack.c.l.b16 %v1836
        %v2125 = vunpack.c.l.b16 %v1837
        %v2126 = vunpack.c.l.b16 %v1838
        %v2127 = vunpack.c.l.b16 %v1839
        %v2128 = vunpack.c.l.b16 %v1840
        %v2129 = vunpack.c.l.b16 %v1841
        %v2130 = vunpack.c.l.b16 %v1842
        %v2131 = vunpack.c.l.b16 %v1843
        %v2132 = vunpack.c.l.b16 %v1844
        %v2133 = vunpack.c.l.b16 %v1845
        %v2134 = vunpack.c.l.b16 %v1846
        %v2135 = vunpack.c.l.b16 %v1847
        %v2136 = vunpack.c.l.b16 %v1848
        %v2137 = vunpack.c.l.b16 %v1849
        %v2138 = vunpack.c.l.b16 %v1850
        %v2139 = vunpack.c.l.b16 %v1851
        %v2140 = vunpack.c.l.b16 %v1852
        %v2141 = vunpack.c.l.b16 %v1853
        %v2142 = vunpack.c.l.b16 %v1854
        %v2143 = vld [vmem:[#allocation8] sm:$0xff]
        %v2144 = vld [vmem:[#allocation8 + $0x8] sm:$0xf]
        %v2145 = vld [vmem:[#allocation8 + $0xc] sm:$0xff]
        %v2146 = vld [vmem:[#allocation8 + $0x14] sm:$0xf]
        %v2147 = vld [vmem:[#allocation8 + $0x18] sm:$0xff]
        %v2148 = vld [vmem:[#allocation8 + $0x20] sm:$0xf]
        %v2149 = vld [vmem:[#allocation8 + $0x24] sm:$0xff]
        %v2150 = vld [vmem:[#allocation8 + $0x2c] sm:$0xf]
        %v2151 = vld [vmem:[#allocation8 + $0x30] sm:$0xff]
        %v2152 = vld [vmem:[#allocation8 + $0x38] sm:$0xf]
        %v2153 = vld [vmem:[#allocation8 + $0x3c] sm:$0xff]
        %v2154 = vld [vmem:[#allocation8 + $0x44] sm:$0xf]
        %v2155 = vld [vmem:[#allocation8 + $0x48] sm:$0xff]
        %v2156 = vld [vmem:[#allocation8 + $0x50] sm:$0xf]
        %v2157 = vld [vmem:[#allocation8 + $0x54] sm:$0xff]
        %v2158 = vld [vmem:[#allocation8 + $0x5c] sm:$0xf]
        %v2159 = vld [vmem:[#allocation8 + $0x60] sm:$0xff]
        %v2160 = vld [vmem:[#allocation8 + $0x68] sm:$0xf]
        %v2161 = vld [vmem:[#allocation8 + $0x6c] sm:$0xff]
        %v2162 = vld [vmem:[#allocation8 + $0x74] sm:$0xf]
        %v2163 = vld [vmem:[#allocation8 + $0x78] sm:$0xff]
        %v2164 = vld [vmem:[#allocation8 + $0x80] sm:$0xf]
        %v2165 = vld [vmem:[#allocation8 + $0x84] sm:$0xff]
        %v2166 = vld [vmem:[#allocation8 + $0x8c] sm:$0xf]
        %v2167 = vld [vmem:[#allocation8 + $0x90] sm:$0xff]
        %v2168 = vld [vmem:[#allocation8 + $0x98] sm:$0xf]
        %v2169 = vld [vmem:[#allocation8 + $0x9c] sm:$0xff]
        %v2170 = vld [vmem:[#allocation8 + $0xa4] sm:$0xf]
        %v2171 = vld [vmem:[#allocation8 + $0xa8] sm:$0xff]
        %v2172 = vld [vmem:[#allocation8 + $0xb0] sm:$0xf]
        %v2173 = vld [vmem:[#allocation8 + $0xb4] sm:$0xff]
        %v2174 = vld [vmem:[#allocation8 + $0xbc] sm:$0xf]
        %v2175 = vld [vmem:[#allocation8 + $0xc0] sm:$0xff]
        %v2176 = vld [vmem:[#allocation8 + $0xc8] sm:$0xf]
        %v2177 = vld [vmem:[#allocation8 + $0xcc] sm:$0xff]
        %v2178 = vld [vmem:[#allocation8 + $0xd4] sm:$0xf]
        %v2179 = vld [vmem:[#allocation8 + $0xd8] sm:$0xff]
        %v2180 = vld [vmem:[#allocation8 + $0xe0] sm:$0xf]
        %v2181 = vld [vmem:[#allocation8 + $0xe4] sm:$0xff]
        %v2182 = vld [vmem:[#allocation8 + $0xec] sm:$0xf]
        %v2183 = vld [vmem:[#allocation8 + $0xf0] sm:$0xff]
        %v2184 = vld [vmem:[#allocation8 + $0xf8] sm:$0xf]
        %v2185 = vld [vmem:[#allocation8 + $0xfc] sm:$0xff]
        %v2186 = vld [vmem:[#allocation8 + $0x104] sm:$0xf]
        %v2187 = vld [vmem:[#allocation8 + $0x108] sm:$0xff]
        %v2188 = vld [vmem:[#allocation8 + $0x110] sm:$0xf]
        %v2189 = vld [vmem:[#allocation8 + $0x114] sm:$0xff]
        %v2190 = vld [vmem:[#allocation8 + $0x11c] sm:$0xf]
        %v2191 = vld [vmem:[#allocation8 + $0x120] sm:$0xff]
        %v2192 = vld [vmem:[#allocation8 + $0x128] sm:$0xf]
        %v2193 = vld [vmem:[#allocation8 + $0x12c] sm:$0xff]
        %v2194 = vld [vmem:[#allocation8 + $0x134] sm:$0xf]
        %v2195 = vld [vmem:[#allocation8 + $0x138] sm:$0xff]
        %v2196 = vld [vmem:[#allocation8 + $0x140] sm:$0xf]
        %v2197 = vld [vmem:[#allocation8 + $0x144] sm:$0xff]
        %v2198 = vld [vmem:[#allocation8 + $0x14c] sm:$0xf]
        %v2199 = vld [vmem:[#allocation8 + $0x150] sm:$0xff]
        %v2200 = vld [vmem:[#allocation8 + $0x158] sm:$0xf]
        %v2201 = vld [vmem:[#allocation8 + $0x15c] sm:$0xff]
        %v2202 = vld [vmem:[#allocation8 + $0x164] sm:$0xf]
        %v2203 = vld [vmem:[#allocation8 + $0x168] sm:$0xff]
        %v2204 = vld [vmem:[#allocation8 + $0x170] sm:$0xf]
        %v2205 = vld [vmem:[#allocation8 + $0x174] sm:$0xff]
        %v2206 = vld [vmem:[#allocation8 + $0x17c] sm:$0xf]
        %v2207 = vld [vmem:[#allocation8 + $0x180] sm:$0xff]
        %v2208 = vld [vmem:[#allocation8 + $0x188] sm:$0xf]
        %v2209 = vld [vmem:[#allocation8 + $0x18c] sm:$0xff]
        %v2210 = vld [vmem:[#allocation8 + $0x194] sm:$0xf]
        %v2211 = vld [vmem:[#allocation8 + $0x198] sm:$0xff]
        %v2212 = vld [vmem:[#allocation8 + $0x1a0] sm:$0xf]
        %v2213 = vld [vmem:[#allocation8 + $0x1a4] sm:$0xff]
        %v2214 = vld [vmem:[#allocation8 + $0x1ac] sm:$0xf]
        %v2215 = vld [vmem:[#allocation8 + $0x1b0] sm:$0xff]
        %v2216 = vld [vmem:[#allocation8 + $0x1b8] sm:$0xf]
        %v2217 = vld [vmem:[#allocation8 + $0x1bc] sm:$0xff]
        %v2218 = vld [vmem:[#allocation8 + $0x1c4] sm:$0xf]
        %v2219 = vld [vmem:[#allocation8 + $0x1c8] sm:$0xff]
        %v2220 = vld [vmem:[#allocation8 + $0x1d0] sm:$0xf]
        %v2221 = vld [vmem:[#allocation8 + $0x1d4] sm:$0xff]
        %v2222 = vld [vmem:[#allocation8 + $0x1dc] sm:$0xf]
        %v2223 = vld [vmem:[#allocation8 + $0x1e0] sm:$0xff]
        %v2224 = vld [vmem:[#allocation8 + $0x1e8] sm:$0xf]
        %v2225 = vld [vmem:[#allocation8 + $0x1ec] sm:$0xff]
        %v2226 = vld [vmem:[#allocation8 + $0x1f4] sm:$0xf]
        %v2227 = vld [vmem:[#allocation8 + $0x1f8] sm:$0xff]
        %v2228 = vld [vmem:[#allocation8 + $0x200] sm:$0xf]
        %v2229 = vld [vmem:[#allocation8 + $0x204] sm:$0xff]
        %v2230 = vld [vmem:[#allocation8 + $0x20c] sm:$0xf]
        %v2231 = vld [vmem:[#allocation8 + $0x210] sm:$0xff]
        %v2232 = vld [vmem:[#allocation8 + $0x218] sm:$0xf]
        %v2233 = vld [vmem:[#allocation8 + $0x21c] sm:$0xff]
        %v2234 = vld [vmem:[#allocation8 + $0x224] sm:$0xf]
        %v2235 = vld [vmem:[#allocation8 + $0x228] sm:$0xff]
        %v2236 = vld [vmem:[#allocation8 + $0x230] sm:$0xf]
        %v2237 = vld [vmem:[#allocation8 + $0x234] sm:$0xff]
        %v2238 = vld [vmem:[#allocation8 + $0x23c] sm:$0xf]
        %v2239 = vpack.c.b16 %v1904, %v1903
        %v2240 = vpack.c.b16 %v2000, %v1999
        %v2241 = vpack.c.b16 %v2096, %v2095
        %v2242 = vpack.c.b16 %v1906, %v1905
        %v2243 = vpack.c.b16 %v2002, %v2001
        %v2244 = vpack.c.b16 %v2098, %v2097
        %v2245 = vpack.c.b16 %v1908, %v1907
        %v2246 = vpack.c.b16 %v2004, %v2003
        %v2247 = vpack.c.b16 %v2100, %v2099
        %v2248 = vpack.c.b16 %v1910, %v1909
        %v2249 = vpack.c.b16 %v2006, %v2005
        %v2250 = vpack.c.b16 %v2102, %v2101
        %v2251 = vpack.c.b16 %v1912, %v1911
        %v2252 = vpack.c.b16 %v2008, %v2007
        %v2253 = vpack.c.b16 %v2104, %v2103
        %v2254 = vpack.c.b16 %v1914, %v1913
        %v2255 = vpack.c.b16 %v2010, %v2009
        %v2256 = vpack.c.b16 %v2106, %v2105
        %v2257 = vpack.c.b16 %v1916, %v1915
        %v2258 = vpack.c.b16 %v2012, %v2011
        %v2259 = vpack.c.b16 %v2108, %v2107
        %v2260 = vpack.c.b16 %v1918, %v1917
        %v2261 = vpack.c.b16 %v2014, %v2013
        %v2262 = vpack.c.b16 %v2110, %v2109
        %v2263 = vpack.c.b16 %v1920, %v1919
        %v2264 = vpack.c.b16 %v2016, %v2015
        %v2265 = vpack.c.b16 %v2112, %v2111
        %v2266 = vpack.c.b16 %v1922, %v1921
        %v2267 = vpack.c.b16 %v2018, %v2017
        %v2268 = vpack.c.b16 %v2114, %v2113
        %v2269 = vpack.c.b16 %v1924, %v1923
        %v2270 = vpack.c.b16 %v2020, %v2019
        %v2271 = vpack.c.b16 %v2116, %v2115
        %v2272 = vpack.c.b16 %v1926, %v1925
        %v2273 = vpack.c.b16 %v2022, %v2021
        %v2274 = vpack.c.b16 %v2118, %v2117
        %v2275 = vpack.c.b16 %v1928, %v1927
        %v2276 = vpack.c.b16 %v2024, %v2023
        %v2277 = vpack.c.b16 %v2120, %v2119
        %v2278 = vpack.c.b16 %v1930, %v1929
        %v2279 = vpack.c.b16 %v2026, %v2025
        %v2280 = vpack.c.b16 %v2122, %v2121
        %v2281 = vpack.c.b16 %v1932, %v1931
        %v2282 = vpack.c.b16 %v2028, %v2027
        %v2283 = vpack.c.b16 %v2124, %v2123
        %v2284 = vpack.c.b16 %v1934, %v1933
        %v2285 = vpack.c.b16 %v2030, %v2029
        %v2286 = vpack.c.b16 %v2126, %v2125
        %v2287 = vpack.c.b16 %v1936, %v1935
        %v2288 = vpack.c.b16 %v2032, %v2031
        %v2289 = vpack.c.b16 %v2128, %v2127
        %v2290 = vpack.c.b16 %v1938, %v1937
        %v2291 = vpack.c.b16 %v2034, %v2033
        %v2292 = vpack.c.b16 %v2130, %v2129
        %v2293 = vpack.c.b16 %v1940, %v1939
        %v2294 = vpack.c.b16 %v2036, %v2035
        %v2295 = vpack.c.b16 %v2132, %v2131
        %v2296 = vpack.c.b16 %v1942, %v1941
        %v2297 = vpack.c.b16 %v2038, %v2037
        %v2298 = vpack.c.b16 %v2134, %v2133
        %v2299 = vpack.c.b16 %v1944, %v1943
        %v2300 = vpack.c.b16 %v2040, %v2039
        %v2301 = vpack.c.b16 %v2136, %v2135
        %v2302 = vpack.c.b16 %v1946, %v1945
        %v2303 = vpack.c.b16 %v2042, %v2041
        %v2304 = vpack.c.b16 %v2138, %v2137
        %v2305 = vpack.c.b16 %v1948, %v1947
        %v2306 = vpack.c.b16 %v2044, %v2043
        %v2307 = vpack.c.b16 %v2140, %v2139
        %v2308 = vpack.c.b16 %v1950, %v1949
        %v2309 = vpack.c.b16 %v2046, %v2045
        %v2310 = vpack.c.b16 %v2142, %v2141
        %v2479 = vunpack.c.l.b16 %v2143
        %v2480 = vunpack.c.h.b16 %v2143
        %v2481 = vunpack.c.l.b16 %v2144
        %v2482 = vunpack.c.l.b16 %v2145
        %v2483 = vunpack.c.h.b16 %v2145
        %v2484 = vunpack.c.l.b16 %v2146
        %v2485 = vunpack.c.l.b16 %v2147
        %v2486 = vunpack.c.h.b16 %v2147
        %v2487 = vunpack.c.l.b16 %v2148
        %v2488 = vunpack.c.l.b16 %v2149
        %v2489 = vunpack.c.h.b16 %v2149
        %v2490 = vunpack.c.l.b16 %v2150
        %v2491 = vunpack.c.l.b16 %v2151
        %v2492 = vunpack.c.h.b16 %v2151
        %v2493 = vunpack.c.l.b16 %v2152
        %v2494 = vunpack.c.l.b16 %v2153
        %v2495 = vunpack.c.h.b16 %v2153
        %v2496 = vunpack.c.l.b16 %v2154
        %v2497 = vunpack.c.l.b16 %v2155
        %v2498 = vunpack.c.h.b16 %v2155
        %v2499 = vunpack.c.l.b16 %v2156
        %v2500 = vunpack.c.l.b16 %v2157
        %v2501 = vunpack.c.h.b16 %v2157
        %v2502 = vunpack.c.l.b16 %v2158
        %v2503 = vunpack.c.l.b16 %v2159
        %v2504 = vunpack.c.h.b16 %v2159
        %v2505 = vunpack.c.l.b16 %v2160
        %v2506 = vunpack.c.l.b16 %v2161
        %v2507 = vunpack.c.h.b16 %v2161
        %v2508 = vunpack.c.l.b16 %v2162
        %v2509 = vunpack.c.l.b16 %v2163
        %v2510 = vunpack.c.h.b16 %v2163
        %v2511 = vunpack.c.l.b16 %v2164
        %v2512 = vunpack.c.l.b16 %v2165
        %v2513 = vunpack.c.h.b16 %v2165
        %v2514 = vunpack.c.l.b16 %v2166
        %v2515 = vunpack.c.l.b16 %v2167
        %v2516 = vunpack.c.h.b16 %v2167
        %v2517 = vunpack.c.l.b16 %v2168
        %v2518 = vunpack.c.l.b16 %v2169
        %v2519 = vunpack.c.h.b16 %v2169
        %v2520 = vunpack.c.l.b16 %v2170
        %v2521 = vunpack.c.l.b16 %v2171
        %v2522 = vunpack.c.h.b16 %v2171
        %v2523 = vunpack.c.l.b16 %v2172
        %v2524 = vunpack.c.l.b16 %v2173
        %v2525 = vunpack.c.h.b16 %v2173
        %v2526 = vunpack.c.l.b16 %v2174
        %v2527 = vunpack.c.l.b16 %v2175
        %v2528 = vunpack.c.h.b16 %v2175
        %v2529 = vunpack.c.l.b16 %v2176
        %v2530 = vunpack.c.l.b16 %v2177
        %v2531 = vunpack.c.h.b16 %v2177
        %v2532 = vunpack.c.l.b16 %v2178
        %v2533 = vunpack.c.l.b16 %v2179
        %v2534 = vunpack.c.h.b16 %v2179
        %v2535 = vunpack.c.l.b16 %v2180
        %v2536 = vunpack.c.l.b16 %v2181
        %v2537 = vunpack.c.h.b16 %v2181
        %v2538 = vunpack.c.l.b16 %v2182
        %v2539 = vunpack.c.l.b16 %v2183
        %v2540 = vunpack.c.h.b16 %v2183
        %v2541 = vunpack.c.l.b16 %v2184
        %v2542 = vunpack.c.l.b16 %v2185
        %v2543 = vunpack.c.h.b16 %v2185
        %v2544 = vunpack.c.l.b16 %v2186
        %v2545 = vunpack.c.l.b16 %v2187
        %v2546 = vunpack.c.h.b16 %v2187
        %v2547 = vunpack.c.l.b16 %v2188
        %v2548 = vunpack.c.l.b16 %v2189
        %v2549 = vunpack.c.h.b16 %v2189
        %v2550 = vunpack.c.l.b16 %v2190
        %v2551 = vunpack.c.l.b16 %v2191
        %v2552 = vunpack.c.h.b16 %v2191
        %v2553 = vunpack.c.l.b16 %v2192
        %v2554 = vunpack.c.l.b16 %v2193
        %v2555 = vunpack.c.h.b16 %v2193
        %v2556 = vunpack.c.l.b16 %v2194
        %v2557 = vunpack.c.l.b16 %v2195
        %v2558 = vunpack.c.h.b16 %v2195
        %v2559 = vunpack.c.l.b16 %v2196
        %v2560 = vunpack.c.l.b16 %v2197
        %v2561 = vunpack.c.h.b16 %v2197
        %v2562 = vunpack.c.l.b16 %v2198
        %v2563 = vunpack.c.l.b16 %v2199
        %v2564 = vunpack.c.h.b16 %v2199
        %v2565 = vunpack.c.l.b16 %v2200
        %v2566 = vunpack.c.l.b16 %v2201
        %v2567 = vunpack.c.h.b16 %v2201
        %v2568 = vunpack.c.l.b16 %v2202
        %v2569 = vunpack.c.l.b16 %v2203
        %v2570 = vunpack.c.h.b16 %v2203
        %v2571 = vunpack.c.l.b16 %v2204
        %v2572 = vunpack.c.l.b16 %v2205
        %v2573 = vunpack.c.h.b16 %v2205
        %v2574 = vunpack.c.l.b16 %v2206
        %v2575 = vunpack.c.l.b16 %v2207
        %v2576 = vunpack.c.h.b16 %v2207
        %v2577 = vunpack.c.l.b16 %v2208
        %v2578 = vunpack.c.l.b16 %v2209
        %v2579 = vunpack.c.h.b16 %v2209
        %v2580 = vunpack.c.l.b16 %v2210
        %v2581 = vunpack.c.l.b16 %v2211
        %v2582 = vunpack.c.h.b16 %v2211
        %v2583 = vunpack.c.l.b16 %v2212
        %v2584 = vunpack.c.l.b16 %v2213
        %v2585 = vunpack.c.h.b16 %v2213
        %v2586 = vunpack.c.l.b16 %v2214
        %v2587 = vunpack.c.l.b16 %v2215
        %v2588 = vunpack.c.h.b16 %v2215
        %v2589 = vunpack.c.l.b16 %v2216
        %v2590 = vunpack.c.l.b16 %v2217
        %v2591 = vunpack.c.h.b16 %v2217
        %v2592 = vunpack.c.l.b16 %v2218
        %v2593 = vunpack.c.l.b16 %v2219
        %v2594 = vunpack.c.h.b16 %v2219
        %v2595 = vunpack.c.l.b16 %v2220
        %v2596 = vunpack.c.l.b16 %v2221
        %v2597 = vunpack.c.h.b16 %v2221
        %v2598 = vunpack.c.l.b16 %v2222
        %v2599 = vunpack.c.l.b16 %v2223
        %v2600 = vunpack.c.h.b16 %v2223
        %v2601 = vunpack.c.l.b16 %v2224
        %v2602 = vunpack.c.l.b16 %v2225
        %v2603 = vunpack.c.h.b16 %v2225
        %v2604 = vunpack.c.l.b16 %v2226
        %v2605 = vunpack.c.l.b16 %v2227
        %v2606 = vunpack.c.h.b16 %v2227
        %v2607 = vunpack.c.l.b16 %v2228
        %v2608 = vunpack.c.l.b16 %v2229
        %v2609 = vunpack.c.h.b16 %v2229
        %v2610 = vunpack.c.l.b16 %v2230
        %v2611 = vunpack.c.l.b16 %v2231
        %v2612 = vunpack.c.h.b16 %v2231
        %v2613 = vunpack.c.l.b16 %v2232
        %v2614 = vunpack.c.l.b16 %v2233
        %v2615 = vunpack.c.h.b16 %v2233
        %v2616 = vunpack.c.l.b16 %v2234
        %v2617 = vunpack.c.l.b16 %v2235
        %v2618 = vunpack.c.h.b16 %v2235
        %v2619 = vunpack.c.l.b16 %v2236
        %v2620 = vunpack.c.l.b16 %v2237
        %v2621 = vunpack.c.h.b16 %v2237
        %v2622 = vunpack.c.l.b16 %v2238
        %v2623 = vpack.c.b16 %v2482, %v2479
        %v2624 = vpack.c.b16 %v2483, %v2480
        %v2625 = vpack.c.b16 %v2484, %v2481
        %v2626 = vpack.c.b16 %v2488, %v2485
        %v2627 = vpack.c.b16 %v2489, %v2486
        %v2628 = vpack.c.b16 %v2490, %v2487
        %v2629 = vpack.c.b16 %v2494, %v2491
        %v2630 = vpack.c.b16 %v2495, %v2492
        %v2631 = vpack.c.b16 %v2496, %v2493
        %v2632 = vpack.c.b16 %v2500, %v2497
        %v2633 = vpack.c.b16 %v2501, %v2498
        %v2634 = vpack.c.b16 %v2502, %v2499
        %v2635 = vpack.c.b16 %v2506, %v2503
        %v2636 = vpack.c.b16 %v2507, %v2504
        %v2637 = vpack.c.b16 %v2508, %v2505
        %v2638 = vpack.c.b16 %v2512, %v2509
        %v2639 = vpack.c.b16 %v2513, %v2510
        %v2640 = vpack.c.b16 %v2514, %v2511
        %v2641 = vpack.c.b16 %v2518, %v2515
        %v2642 = vpack.c.b16 %v2519, %v2516
        %v2643 = vpack.c.b16 %v2520, %v2517
        %v2644 = vpack.c.b16 %v2524, %v2521
        %v2645 = vpack.c.b16 %v2525, %v2522
        %v2646 = vpack.c.b16 %v2526, %v2523
        %v2647 = vpack.c.b16 %v2530, %v2527
        %v2648 = vpack.c.b16 %v2531, %v2528
        %v2649 = vpack.c.b16 %v2532, %v2529
        %v2650 = vpack.c.b16 %v2536, %v2533
        %v2651 = vpack.c.b16 %v2537, %v2534
        %v2652 = vpack.c.b16 %v2538, %v2535
        %v2653 = vpack.c.b16 %v2542, %v2539
        %v2654 = vpack.c.b16 %v2543, %v2540
        %v2655 = vpack.c.b16 %v2544, %v2541
        %v2656 = vpack.c.b16 %v2548, %v2545
        %v2657 = vpack.c.b16 %v2549, %v2546
        %v2658 = vpack.c.b16 %v2550, %v2547
        %v2659 = vpack.c.b16 %v2554, %v2551
        %v2660 = vpack.c.b16 %v2555, %v2552
        %v2661 = vpack.c.b16 %v2556, %v2553
        %v2662 = vpack.c.b16 %v2560, %v2557
        %v2663 = vpack.c.b16 %v2561, %v2558
        %v2664 = vpack.c.b16 %v2562, %v2559
        %v2665 = vpack.c.b16 %v2566, %v2563
        %v2666 = vpack.c.b16 %v2567, %v2564
        %v2667 = vpack.c.b16 %v2568, %v2565
        %v2668 = vpack.c.b16 %v2572, %v2569
        %v2669 = vpack.c.b16 %v2573, %v2570
        %v2670 = vpack.c.b16 %v2574, %v2571
        %v2671 = vpack.c.b16 %v2578, %v2575
        %v2672 = vpack.c.b16 %v2579, %v2576
        %v2673 = vpack.c.b16 %v2580, %v2577
        %v2674 = vpack.c.b16 %v2584, %v2581
        %v2675 = vpack.c.b16 %v2585, %v2582
        %v2676 = vpack.c.b16 %v2586, %v2583
        %v2677 = vpack.c.b16 %v2590, %v2587
        %v2678 = vpack.c.b16 %v2591, %v2588
        %v2679 = vpack.c.b16 %v2592, %v2589
        %v2680 = vpack.c.b16 %v2596, %v2593
        %v2681 = vpack.c.b16 %v2597, %v2594
        %v2682 = vpack.c.b16 %v2598, %v2595
        %v2683 = vpack.c.b16 %v2602, %v2599
        %v2684 = vpack.c.b16 %v2603, %v2600
        %v2685 = vpack.c.b16 %v2604, %v2601
        %v2686 = vpack.c.b16 %v2608, %v2605
        %v2687 = vpack.c.b16 %v2609, %v2606
        %v2688 = vpack.c.b16 %v2610, %v2607
        %v2689 = vpack.c.b16 %v2614, %v2611
        %v2690 = vpack.c.b16 %v2615, %v2612
        %v2691 = vpack.c.b16 %v2616, %v2613
        %v2692 = vpack.c.b16 %v2620, %v2617
        %v2693 = vpack.c.b16 %v2621, %v2618
        %v2694 = vpack.c.b16 %v2622, %v2619
        %2767 = vmatprep.subr.bf16.mxu0 %v2624
        %2768 = vmatpush1.bf16.msra.mxu0 %v2623
        %2769 = vmatprep.subr.bf16.mxu0 %v2627
        %2770 = vmatpush1.bf16.msra.mxu0 %v2626
        %2771 = vmatprep.subr.bf16.mxu0 %v2630
        %2772 = vmatpush1.bf16.msra.mxu0 %v2629
        %2773 = vmatprep.subr.bf16.mxu0 %v2633
        %2774 = vmatpush1.bf16.msra.mxu0 %v2632
        %2775 = vmatprep.subr.bf16.mxu0 %v2636
        %2776 = vmatpush1.bf16.msra.mxu0 %v2635
        %2777 = vmatprep.subr.bf16.mxu0 %v2639
        %2778 = vmatpush1.bf16.msra.mxu0 %v2638
        %2779 = vmatprep.subr.bf16.mxu0 %v2642
        %2780 = vmatpush1.bf16.msra.mxu0 %v2641
        %2781 = vmatprep.subr.bf16.mxu0 %v2645
        %2782 = vmatpush1.bf16.msra.mxu0 %v2644
        %2783 = vmatprep.subr.bf16.mxu0 %v2648
        %2784 = vmatpush1.bf16.msra.mxu0 %v2647
        %2785 = vmatprep.subr.bf16.mxu0 %v2651
        %2786 = vmatpush1.bf16.msra.mxu0 %v2650
        %2787 = vmatprep.subr.bf16.mxu0 %v2654
        %2788 = vmatpush1.bf16.msra.mxu0 %v2653
        %2789 = vmatprep.subr.bf16.mxu0 %v2657
        %2790 = vmatpush1.bf16.msra.mxu0 %v2656
        %2791 = vmatprep.subr.bf16.mxu0 %v2660
        %2792 = vmatpush1.bf16.msra.mxu0 %v2659
        %2793 = vmatprep.subr.bf16.mxu0 %v2663
        %2794 = vmatpush1.bf16.msra.mxu0 %v2662
        %2795 = vmatprep.subr.bf16.mxu0 %v2666
        %2796 = vmatpush1.bf16.msra.mxu0 %v2665
        %2797 = vmatprep.subr.bf16.mxu0 %v2669
        %2798 = vmatpush1.bf16.msra.mxu0 %v2668
        %2799 = vmatprep.mubr.bf16.mxu0 %v2240
        %2800 = vmatmul.mubr.bf16.gmra.mrb[0].mxu0 %v2239
        %v2801 = vpop.f32.mrb[0].mxu0
        %v2802 = vadd.f32 0.0, %v2801
        %v2803 = vpop.f32.mrb[0].mxu0
        %v2804 = vadd.f32 0.0, %v2803
        %v2805 = vpop.f32.mrb[0].mxu0
        %v2806 = vadd.f32 0.0, %v2805
        %v2807 = vpop.f32.mrb[0].mxu0
        %v2808 = vadd.f32 0.0, %v2807
        %2809 = vmatprep.mubr.bf16.mxu0 %v2243
        %2810 = vmatmul.mubr.bf16.gmra.mrb[0].mxu0 %v2242
        %v2811 = vpop.f32.mrb[0].mxu0
        %v2812 = vpop.f32.mrb[0].mxu0
        %v2813 = vadd.f32 0.0, %v2812
        %v2814 = vpop.f32.mrb[0].mxu0
        %v2815 = vadd.f32 0.0, %v2814
        %v2816 = vpop.f32.mrb[0].mxu0
        %v2817 = vadd.f32 0.0, %v2816
        %2818 = vmatprep.mubr.bf16.mxu0 %v2246
        %2819 = vmatmul.mubr.bf16.gmra.mrb[0].mxu0 %v2245
        %v2820 = vpop.f32.mrb[0].mxu0
        %v2821 = vadd.f32 0.0, %v2820
        %v2822 = vpop.f32.mrb[0].mxu0
        %v2823 = vadd.f32 0.0, %v2822
        %v2824 = vpop.f32.mrb[0].mxu0
        %v2825 = vpop.f32.mrb[0].mxu0
        %v2826 = vadd.f32 0.0, %v2825
        %2827 = vmatprep.mubr.bf16.mxu0 %v2249
        %2828 = vmatmul.mubr.bf16.gmra.mrb[0].mxu0 %v2248
        %v2829 = vpop.f32.mrb[0].mxu0
        %v2830 = vadd.f32 0.0, %v2829
        %v2831 = vpop.f32.mrb[0].mxu0
        %v2832 = vadd.f32 0.0, %v2831
        %v2833 = vpop.f32.mrb[0].mxu0
        %v2834 = vadd.f32 0.0, %v2833
        %v2835 = vpop.f32.mrb[0].mxu0
        %v2836 = vadd.f32 0.0, %v2835
        %2837 = vmatprep.mubr.bf16.mxu0 %v2252
        %2838 = vmatmul.mubr.bf16.gmra.mrb[0].mxu0 %v2251
        %v2839 = vpop.f32.mrb[0].mxu0
        %v2840 = vpop.f32.mrb[0].mxu0
        %v2841 = vadd.f32 0.0, %v2840
        %v2842 = vpop.f32.mrb[0].mxu0
        %v2843 = vadd.f32 0.0, %v2842
        %v2844 = vpop.f32.mrb[0].mxu0
        %v2845 = vadd.f32 0.0, %v2844
        %2846 = vmatprep.mubr.bf16.mxu0 %v2255
        %2847 = vmatmul.mubr.bf16.gmra.mrb[0].mxu0 %v2254
        %v2848 = vpop.f32.mrb[0].mxu0
        %v2849 = vadd.f32 0.0, %v2848
        %v2850 = vpop.f32.mrb[0].mxu0
        %v2851 = vadd.f32 0.0, %v2850
        %v2852 = vpop.f32.mrb[0].mxu0
        %v2853 = vpop.f32.mrb[0].mxu0
        %v2854 = vadd.f32 0.0, %v2853
        %2855 = vmatprep.mubr.bf16.mxu0 %v2258
        %2856 = vmatmul.mubr.bf16.gmra.mrb[0].mxu0 %v2257
        %v2857 = vpop.f32.mrb[0].mxu0
        %v2858 = vadd.f32 0.0, %v2857
        %v2859 = vpop.f32.mrb[0].mxu0
        %v2860 = vadd.f32 0.0, %v2859
        %v2861 = vpop.f32.mrb[0].mxu0
        %v2862 = vadd.f32 0.0, %v2861
        %v2863 = vpop.f32.mrb[0].mxu0
        %v2864 = vadd.f32 0.0, %v2863
        %2865 = vmatprep.mubr.bf16.mxu0 %v2261
        %2866 = vmatmul.mubr.bf16.gmra.mrb[0].mxu0 %v2260
        %v2867 = vpop.f32.mrb[0].mxu0
        %v2868 = vpop.f32.mrb[0].mxu0
        %v2869 = vadd.f32 0.0, %v2868
        %v2870 = vpop.f32.mrb[0].mxu0
        %v2871 = vadd.f32 0.0, %v2870
        %v2872 = vpop.f32.mrb[0].mxu0
        %v2873 = vadd.f32 0.0, %v2872
        %2874 = vmatprep.mubr.bf16.mxu0 %v2264
        %2875 = vmatmul.mubr.bf16.gmra.mrb[0].mxu0 %v2263
        %v2876 = vpop.f32.mrb[0].mxu0
        %v2877 = vadd.f32 0.0, %v2876
        %v2878 = vpop.f32.mrb[0].mxu0
        %v2879 = vadd.f32 0.0, %v2878
        %v2880 = vpop.f32.mrb[0].mxu0
        %v2881 = vpop.f32.mrb[0].mxu0
        %v2882 = vadd.f32 0.0, %v2881
        %2883 = vmatprep.mubr.bf16.mxu0 %v2267
        %2884 = vmatmul.mubr.bf16.gmra.mrb[0].mxu0 %v2266
        %v2885 = vpop.f32.mrb[0].mxu0
        %v2886 = vadd.f32 0.0, %v2885
        %v2887 = vpop.f32.mrb[0].mxu0
        %v2888 = vadd.f32 0.0, %v2887
        %v2889 = vpop.f32.mrb[0].mxu0
        %v2890 = vadd.f32 0.0, %v2889
        %v2891 = vpop.f32.mrb[0].mxu0
        %v2892 = vadd.f32 0.0, %v2891
        %2893 = vmatprep.mubr.bf16.mxu0 %v2270
        %2894 = vmatmul.mubr.bf16.gmra.mrb[0].mxu0 %v2269
        %v2895 = vpop.f32.mrb[0].mxu0
        %v2896 = vpop.f32.mrb[0].mxu0
        %v2897 = vadd.f32 0.0, %v2896
        %v2898 = vpop.f32.mrb[0].mxu0
        %v2899 = vadd.f32 0.0, %v2898
        %v2900 = vpop.f32.mrb[0].mxu0
        %v2901 = vadd.f32 0.0, %v2900
        %2902 = vmatprep.mubr.bf16.mxu0 %v2273
        %2903 = vmatmul.mubr.bf16.gmra.mrb[0].mxu0 %v2272
        %v2904 = vpop.f32.mrb[0].mxu0
        %v2905 = vadd.f32 0.0, %v2904
        %v2906 = vpop.f32.mrb[0].mxu0
        %v2907 = vadd.f32 0.0, %v2906
        %v2908 = vpop.f32.mrb[0].mxu0
        %v2909 = vpop.f32.mrb[0].mxu0
        %v2910 = vadd.f32 0.0, %v2909
        %2911 = vmatprep.mubr.bf16.mxu0 %v2276
        %2912 = vmatmul.mubr.bf16.gmra.mrb[0].mxu0 %v2275
        %v2913 = vpop.f32.mrb[0].mxu0
        %v2914 = vadd.f32 0.0, %v2913
        %v2915 = vpop.f32.mrb[0].mxu0
        %v2916 = vadd.f32 0.0, %v2915
        %v2917 = vpop.f32.mrb[0].mxu0
        %v2918 = vadd.f32 0.0, %v2917
        %v2919 = vpop.f32.mrb[0].mxu0
        %v2920 = vadd.f32 0.0, %v2919
        %2921 = vmatprep.mubr.bf16.mxu0 %v2279
        %2922 = vmatmul.mubr.bf16.gmra.mrb[0].mxu0 %v2278
        %v2923 = vpop.f32.mrb[0].mxu0
        %v2924 = vpop.f32.mrb[0].mxu0
        %v2925 = vadd.f32 0.0, %v2924
        %v2926 = vpop.f32.mrb[0].mxu0
        %v2927 = vadd.f32 0.0, %v2926
        %v2928 = vpop.f32.mrb[0].mxu0
        %v2929 = vadd.f32 0.0, %v2928
        %2930 = vmatprep.mubr.bf16.mxu0 %v2282
        %2931 = vmatmul.mubr.bf16.gmra.mrb[0].mxu0 %v2281
        %v2932 = vpop.f32.mrb[0].mxu0
        %v2933 = vadd.f32 0.0, %v2932
        %v2934 = vpop.f32.mrb[0].mxu0
        %v2935 = vadd.f32 0.0, %v2934
        %v2936 = vpop.f32.mrb[0].mxu0
        %v2937 = vpop.f32.mrb[0].mxu0
        %v2938 = vadd.f32 0.0, %v2937
        %2939 = vmatprep.mubr.bf16.mxu0 %v2285
        %2940 = vmatmul.mubr.bf16.gmra.mrb[0].mxu0 %v2284
        %v2941 = vpop.f32.mrb[0].mxu0
        %v2942 = vadd.f32 0.0, %v2941
        %v2943 = vpop.f32.mrb[0].mxu0
        %v2944 = vadd.f32 0.0, %v2943
        %v2945 = vpop.f32.mrb[0].mxu0
        %v2946 = vadd.f32 0.0, %v2945
        %v2947 = vpop.f32.mrb[0].mxu0
        %v2948 = vadd.f32 0.0, %v2947
        %2949 = vmatprep.mubr.bf16.mxu0 %v2288
        %2950 = vmatmul.mubr.bf16.gmra.mrb[0].mxu0 %v2287
        %v2951 = vpop.f32.mrb[0].mxu0
        %v2952 = vpop.f32.mrb[0].mxu0
        %v2953 = vadd.f32 0.0, %v2952
        %v2954 = vpop.f32.mrb[0].mxu0
        %v2955 = vadd.f32 0.0, %v2954
        %v2956 = vpop.f32.mrb[0].mxu0
        %v2957 = vadd.f32 0.0, %v2956
        %2958 = vmatprep.mubr.bf16.mxu0 %v2291
        %2959 = vmatmul.mubr.bf16.gmra.mrb[0].mxu0 %v2290
        %v2960 = vpop.f32.mrb[0].mxu0
        %v2961 = vadd.f32 0.0, %v2960
        %v2962 = vpop.f32.mrb[0].mxu0
        %v2963 = vadd.f32 0.0, %v2962
        %v2964 = vpop.f32.mrb[0].mxu0
        %v2965 = vpop.f32.mrb[0].mxu0
        %v2966 = vadd.f32 0.0, %v2965
        %2967 = vmatprep.mubr.bf16.mxu0 %v2294
        %2968 = vmatmul.mubr.bf16.gmra.mrb[0].mxu0 %v2293
        %v2969 = vpop.f32.mrb[0].mxu0
        %v2970 = vadd.f32 0.0, %v2969
        %v2971 = vpop.f32.mrb[0].mxu0
        %v2972 = vadd.f32 0.0, %v2971
        %v2973 = vpop.f32.mrb[0].mxu0
        %v2974 = vadd.f32 0.0, %v2973
        %v2975 = vpop.f32.mrb[0].mxu0
        %v2976 = vadd.f32 0.0, %v2975
        %2977 = vmatprep.mubr.bf16.mxu0 %v2297
        %2978 = vmatmul.mubr.bf16.gmra.mrb[0].mxu0 %v2296
        %v2979 = vpop.f32.mrb[0].mxu0
        %v2980 = vpop.f32.mrb[0].mxu0
        %v2981 = vadd.f32 0.0, %v2980
        %v2982 = vpop.f32.mrb[0].mxu0
        %v2983 = vadd.f32 0.0, %v2982
        %v2984 = vpop.f32.mrb[0].mxu0
        %v2985 = vadd.f32 0.0, %v2984
        %2986 = vmatprep.mubr.bf16.mxu0 %v2300
        %2987 = vmatmul.mubr.bf16.gmra.mrb[0].mxu0 %v2299
        %v2988 = vpop.f32.mrb[0].mxu0
        %v2989 = vadd.f32 0.0, %v2988
        %v2990 = vpop.f32.mrb[0].mxu0
        %v2991 = vadd.f32 0.0, %v2990
        %v2992 = vpop.f32.mrb[0].mxu0
        %v2993 = vpop.f32.mrb[0].mxu0
        %v2994 = vadd.f32 0.0, %v2993
        %2995 = vmatprep.mubr.bf16.mxu0 %v2303
        %2996 = vmatmul.mubr.bf16.gmra.mrb[0].mxu0 %v2302
        %v2997 = vpop.f32.mrb[0].mxu0
        %v2998 = vadd.f32 0.0, %v2997
        %v2999 = vpop.f32.mrb[0].mxu0
        %v3000 = vadd.f32 0.0, %v2999
        %v3001 = vpop.f32.mrb[0].mxu0
        %v3002 = vadd.f32 0.0, %v3001
        %v3003 = vpop.f32.mrb[0].mxu0
        %v3004 = vadd.f32 0.0, %v3003
        %3005 = vmatprep.mubr.bf16.mxu0 %v2306
        %3006 = vmatmul.mubr.bf16.gmra.mrb[0].mxu0 %v2305
        %v3007 = vpop.f32.mrb[0].mxu0
        %v3008 = vpop.f32.mrb[0].mxu0
        %v3009 = vadd.f32 0.0, %v3008
        %v3010 = vpop.f32.mrb[0].mxu0
        %v3011 = vadd.f32 0.0, %v3010
        %v3012 = vpop.f32.mrb[0].mxu0
        %v3013 = vadd.f32 0.0, %v3012
        %3014 = vmatprep.mubr.bf16.mxu0 %v2309
        %3015 = vmatmul.mubr.bf16.gmra.mrb[0].mxu0 %v2308
        %v3016 = vpop.f32.mrb[0].mxu0
        %v3017 = vadd.f32 0.0, %v3016
        %v3018 = vpop.f32.mrb[0].mxu0
        %v3019 = vadd.f32 0.0, %v3018
        %v3020 = vpop.f32.mrb[0].mxu0
        %v3021 = vpop.f32.mrb[0].mxu0
        %v3022 = vadd.f32 0.0, %v3021
        %3023 = vdwg.mxu0
        %3024 = vmatprep.subr.bf16.mxu0 %v2672
        %3025 = vmatpush1.bf16.msra.mxu0 %v2671
        %3026 = vmatprep.subr.bf16.mxu0 %v2675
        %3027 = vmatpush1.bf16.msra.mxu0 %v2674
        %3028 = vmatprep.subr.bf16.mxu0 %v2678
        %3029 = vmatpush1.bf16.msra.mxu0 %v2677
        %3030 = vmatprep.subr.bf16.mxu0 %v2681
        %3031 = vmatpush1.bf16.msra.mxu0 %v2680
        %3032 = vmatprep.subr.bf16.mxu0 %v2684
        %3033 = vmatpush1.bf16.msra.mxu0 %v2683
        %3034 = vmatprep.subr.bf16.mxu0 %v2687
        %3035 = vmatpush1.bf16.msra.mxu0 %v2686
        %3036 = vmatprep.subr.bf16.mxu0 %v2690
        %3037 = vmatpush1.bf16.msra.mxu0 %v2689
        %3038 = vmatprep.subr.bf16.mxu0 %v2693
        %3039 = vmatpush1.bf16.msra.mxu0 %v2692
        %3040 = vmatprep.subr.bf16.mxu0 0
        %3041 = vmatpush1.bf16.msra.mxu0 0
        %3042 = vmatprep.subr.bf16.mxu0 0
        %3043 = vmatpush1.bf16.msra.mxu0 0
        %3044 = vmatprep.subr.bf16.mxu0 0
        %3045 = vmatpush1.bf16.msra.mxu0 0
        %3046 = vmatprep.subr.bf16.mxu0 0
        %3047 = vmatpush1.bf16.msra.mxu0 0
        %3048 = vmatprep.subr.bf16.mxu0 0
        %3049 = vmatpush1.bf16.msra.mxu0 0
        %3050 = vmatprep.subr.bf16.mxu0 0
        %3051 = vmatpush1.bf16.msra.mxu0 0
        %3052 = vmatprep.subr.bf16.mxu0 0
        %3053 = vmatpush1.bf16.msra.mxu0 0
        %3054 = vmatprep.subr.bf16.mxu0 0
        %3055 = vmatpush1.bf16.msra.mxu0 0
        %3056 = vmatprep.mubr.bf16.mxu0 0
        %3057 = vmatmul.mubr.bf16.gmra.mrb[0].mxu0 %v2241
        %v3058 = vpop.f32.mrb[0].mxu0
        %v3059 = vadd.f32 %v2802, %v3058
        %v3060 = vpop.f32.mrb[0].mxu0
        %v3061 = vadd.f32 %v2804, %v3060
        %v3062 = vpop.f32.mrb[0].mxu0
        %v3063 = vadd.f32 %v2806, %v3062
        %v3064 = vpop.f32.mrb[0].mxu0
        %v3065 = vadd.f32 %v2808, %v3064
        %3066 = vmatprep.mubr.bf16.mxu0 0
        %3067 = vmatmul.mubr.bf16.gmra.mrb[0].mxu0 %v2244
        %v3068 = vpop.f32.mrb[0].mxu0
        %v3069 = vpop.f32.mrb[0].mxu0
        %v3070 = vadd.f32 %v2813, %v3069
        %v3071 = vpop.f32.mrb[0].mxu0
        %v3072 = vadd.f32 %v2815, %v3071
        %v3073 = vpop.f32.mrb[0].mxu0
        %v3074 = vadd.f32 %v2817, %v3073
        %3075 = vmatprep.mubr.bf16.mxu0 0
        %3076 = vmatmul.mubr.bf16.gmra.mrb[0].mxu0 %v2247
        %v3077 = vpop.f32.mrb[0].mxu0
        %v3078 = vadd.f32 %v2821, %v3077
        %v3079 = vpop.f32.mrb[0].mxu0
        %v3080 = vadd.f32 %v2823, %v3079
        %v3081 = vpop.f32.mrb[0].mxu0
        %v3082 = vpop.f32.mrb[0].mxu0
        %v3083 = vadd.f32 %v2826, %v3082
        %3084 = vmatprep.mubr.bf16.mxu0 0
        %3085 = vmatmul.mubr.bf16.gmra.mrb[0].mxu0 %v2250
        %v3086 = vpop.f32.mrb[0].mxu0
        %v3087 = vadd.f32 %v2830, %v3086
        %v3088 = vpop.f32.mrb[0].mxu0
        %v3089 = vadd.f32 %v2832, %v3088
        %v3090 = vpop.f32.mrb[0].mxu0
        %v3091 = vadd.f32 %v2834, %v3090
        %v3092 = vpop.f32.mrb[0].mxu0
        %v3093 = vadd.f32 %v2836, %v3092
        %3094 = vmatprep.mubr.bf16.mxu0 0
        %3095 = vmatmul.mubr.bf16.gmra.mrb[0].mxu0 %v2253
        %v3096 = vpop.f32.mrb[0].mxu0
        %v3097 = vpop.f32.mrb[0].mxu0
        %v3098 = vadd.f32 %v2841, %v3097
        %v3099 = vpop.f32.mrb[0].mxu0
        %v3100 = vadd.f32 %v2843, %v3099
        %v3101 = vpop.f32.mrb[0].mxu0
        %v3102 = vadd.f32 %v2845, %v3101
        %3103 = vmatprep.mubr.bf16.mxu0 0
        %3104 = vmatmul.mubr.bf16.gmra.mrb[0].mxu0 %v2256
        %v3105 = vpop.f32.mrb[0].mxu0
        %v3106 = vadd.f32 %v2849, %v3105
        %v3107 = vpop.f32.mrb[0].mxu0
        %v3108 = vadd.f32 %v2851, %v3107
        %v3109 = vpop.f32.mrb[0].mxu0
        %v3110 = vpop.f32.mrb[0].mxu0
        %v3111 = vadd.f32 %v2854, %v3110
        %3112 = vmatprep.mubr.bf16.mxu0 0
        %3113 = vmatmul.mubr.bf16.gmra.mrb[0].mxu0 %v2259
        %v3114 = vpop.f32.mrb[0].mxu0
        %v3115 = vadd.f32 %v2858, %v3114
        %v3116 = vpop.f32.mrb[0].mxu0
        %v3117 = vadd.f32 %v2860, %v3116
        %v3118 = vpop.f32.mrb[0].mxu0
        %v3119 = vadd.f32 %v2862, %v3118
        %v3120 = vpop.f32.mrb[0].mxu0
        %v3121 = vadd.f32 %v2864, %v3120
        %3122 = vmatprep.mubr.bf16.mxu0 0
        %3123 = vmatmul.mubr.bf16.gmra.mrb[0].mxu0 %v2262
        %v3124 = vpop.f32.mrb[0].mxu0
        %v3125 = vpop.f32.mrb[0].mxu0
        %v3126 = vadd.f32 %v2869, %v3125
        %v3127 = vpop.f32.mrb[0].mxu0
        %v3128 = vadd.f32 %v2871, %v3127
        %v3129 = vpop.f32.mrb[0].mxu0
        %v3130 = vadd.f32 %v2873, %v3129
        %3131 = vmatprep.mubr.bf16.mxu0 0
        %3132 = vmatmul.mubr.bf16.gmra.mrb[0].mxu0 %v2265
        %v3133 = vpop.f32.mrb[0].mxu0
        %v3134 = vadd.f32 %v2877, %v3133
        %v3135 = vpop.f32.mrb[0].mxu0
        %v3136 = vadd.f32 %v2879, %v3135
        %v3137 = vpop.f32.mrb[0].mxu0
        %v3138 = vpop.f32.mrb[0].mxu0
        %v3139 = vadd.f32 %v2882, %v3138
        %3140 = vmatprep.mubr.bf16.mxu0 0
        %3141 = vmatmul.mubr.bf16.gmra.mrb[0].mxu0 %v2268
        %v3142 = vpop.f32.mrb[0].mxu0
        %v3143 = vadd.f32 %v2886, %v3142
        %v3144 = vpop.f32.mrb[0].mxu0
        %v3145 = vadd.f32 %v2888, %v3144
        %v3146 = vpop.f32.mrb[0].mxu0
        %v3147 = vadd.f32 %v2890, %v3146
        %v3148 = vpop.f32.mrb[0].mxu0
        %v3149 = vadd.f32 %v2892, %v3148
        %3150 = vmatprep.mubr.bf16.mxu0 0
        %3151 = vmatmul.mubr.bf16.gmra.mrb[0].mxu0 %v2271
        %v3152 = vpop.f32.mrb[0].mxu0
        %v3153 = vpop.f32.mrb[0].mxu0
        %v3154 = vadd.f32 %v2897, %v3153
        %v3155 = vpop.f32.mrb[0].mxu0
        %v3156 = vadd.f32 %v2899, %v3155
        %v3157 = vpop.f32.mrb[0].mxu0
        %v3158 = vadd.f32 %v2901, %v3157
        %3159 = vmatprep.mubr.bf16.mxu0 0
        %3160 = vmatmul.mubr.bf16.gmra.mrb[0].mxu0 %v2274
        %v3161 = vpop.f32.mrb[0].mxu0
        %v3162 = vadd.f32 %v2905, %v3161
        %v3163 = vpop.f32.mrb[0].mxu0
        %v3164 = vadd.f32 %v2907, %v3163
        %v3165 = vpop.f32.mrb[0].mxu0
        %v3166 = vpop.f32.mrb[0].mxu0
        %v3167 = vadd.f32 %v2910, %v3166
        %3168 = vmatprep.mubr.bf16.mxu0 0
        %3169 = vmatmul.mubr.bf16.gmra.mrb[0].mxu0 %v2277
        %v3170 = vpop.f32.mrb[0].mxu0
        %v3171 = vadd.f32 %v2914, %v3170
        %v3172 = vpop.f32.mrb[0].mxu0
        %v3173 = vadd.f32 %v2916, %v3172
        %v3174 = vpop.f32.mrb[0].mxu0
        %v3175 = vadd.f32 %v2918, %v3174
        %v3176 = vpop.f32.mrb[0].mxu0
        %v3177 = vadd.f32 %v2920, %v3176
        %3178 = vmatprep.mubr.bf16.mxu0 0
        %3179 = vmatmul.mubr.bf16.gmra.mrb[0].mxu0 %v2280
        %v3180 = vpop.f32.mrb[0].mxu0
        %v3181 = vpop.f32.mrb[0].mxu0
        %v3182 = vadd.f32 %v2925, %v3181
        %v3183 = vpop.f32.mrb[0].mxu0
        %v3184 = vadd.f32 %v2927, %v3183
        %v3185 = vpop.f32.mrb[0].mxu0
        %v3186 = vadd.f32 %v2929, %v3185
        %3187 = vmatprep.mubr.bf16.mxu0 0
        %3188 = vmatmul.mubr.bf16.gmra.mrb[0].mxu0 %v2283
        %v3189 = vpop.f32.mrb[0].mxu0
        %v3190 = vadd.f32 %v2933, %v3189
        %v3191 = vpop.f32.mrb[0].mxu0
        %v3192 = vadd.f32 %v2935, %v3191
        %v3193 = vpop.f32.mrb[0].mxu0
        %v3194 = vpop.f32.mrb[0].mxu0
        %v3195 = vadd.f32 %v2938, %v3194
        %3196 = vmatprep.mubr.bf16.mxu0 0
        %3197 = vmatmul.mubr.bf16.gmra.mrb[0].mxu0 %v2286
        %v3198 = vpop.f32.mrb[0].mxu0
        %v3199 = vadd.f32 %v2942, %v3198
        %v3200 = vpop.f32.mrb[0].mxu0
        %v3201 = vadd.f32 %v2944, %v3200
        %v3202 = vpop.f32.mrb[0].mxu0
        %v3203 = vadd.f32 %v2946, %v3202
        %v3204 = vpop.f32.mrb[0].mxu0
        %v3205 = vadd.f32 %v2948, %v3204
        %3206 = vmatprep.mubr.bf16.mxu0 0
        %3207 = vmatmul.mubr.bf16.gmra.mrb[0].mxu0 %v2289
        %v3208 = vpop.f32.mrb[0].mxu0
        %v3209 = vpop.f32.mrb[0].mxu0
        %v3210 = vadd.f32 %v2953, %v3209
        %v3211 = vpop.f32.mrb[0].mxu0
        %v3212 = vadd.f32 %v2955, %v3211
        %v3213 = vpop.f32.mrb[0].mxu0
        %v3214 = vadd.f32 %v2957, %v3213
        %3215 = vmatprep.mubr.bf16.mxu0 0
        %3216 = vmatmul.mubr.bf16.gmra.mrb[0].mxu0 %v2292
        %v3217 = vpop.f32.mrb[0].mxu0
        %v3218 = vadd.f32 %v2961, %v3217
        %v3219 = vpop.f32.mrb[0].mxu0
        %v3220 = vadd.f32 %v2963, %v3219
        %v3221 = vpop.f32.mrb[0].mxu0
        %v3222 = vpop.f32.mrb[0].mxu0
        %v3223 = vadd.f32 %v2966, %v3222
        %3224 = vmatprep.mubr.bf16.mxu0 0
        %3225 = vmatmul.mubr.bf16.gmra.mrb[0].mxu0 %v2295
        %v3226 = vpop.f32.mrb[0].mxu0
        %v3227 = vadd.f32 %v2970, %v3226
        %v3228 = vpop.f32.mrb[0].mxu0
        %v3229 = vadd.f32 %v2972, %v3228
        %v3230 = vpop.f32.mrb[0].mxu0
        %v3231 = vadd.f32 %v2974, %v3230
        %v3232 = vpop.f32.mrb[0].mxu0
        %v3233 = vadd.f32 %v2976, %v3232
        %3234 = vmatprep.mubr.bf16.mxu0 0
        %3235 = vmatmul.mubr.bf16.gmra.mrb[0].mxu0 %v2298
        %v3236 = vpop.f32.mrb[0].mxu0
        %v3237 = vpop.f32.mrb[0].mxu0
        %v3238 = vadd.f32 %v2981, %v3237
        %v3239 = vpop.f32.mrb[0].mxu0
        %v3240 = vadd.f32 %v2983, %v3239
        %v3241 = vpop.f32.mrb[0].mxu0
        %v3242 = vadd.f32 %v2985, %v3241
        %3243 = vmatprep.mubr.bf16.mxu0 0
        %3244 = vmatmul.mubr.bf16.gmra.mrb[0].mxu0 %v2301
        %v3245 = vpop.f32.mrb[0].mxu0
        %v3246 = vadd.f32 %v2989, %v3245
        %v3247 = vpop.f32.mrb[0].mxu0
        %v3248 = vadd.f32 %v2991, %v3247
        %v3249 = vpop.f32.mrb[0].mxu0
        %v3250 = vpop.f32.mrb[0].mxu0
        %v3251 = vadd.f32 %v2994, %v3250
        %3252 = vmatprep.mubr.bf16.mxu0 0
        %3253 = vmatmul.mubr.bf16.gmra.mrb[0].mxu0 %v2304
        %v3254 = vpop.f32.mrb[0].mxu0
        %v3255 = vadd.f32 %v2998, %v3254
        %v3256 = vpop.f32.mrb[0].mxu0
        %v3257 = vadd.f32 %v3000, %v3256
        %v3258 = vpop.f32.mrb[0].mxu0
        %v3259 = vadd.f32 %v3002, %v3258
        %v3260 = vpop.f32.mrb[0].mxu0
        %v3261 = vadd.f32 %v3004, %v3260
        %3262 = vmatprep.mubr.bf16.mxu0 0
        %3263 = vmatmul.mubr.bf16.gmra.mrb[0].mxu0 %v2307
        %v3264 = vpop.f32.mrb[0].mxu0
        %v3265 = vpop.f32.mrb[0].mxu0
        %v3266 = vadd.f32 %v3009, %v3265
        %v3267 = vpop.f32.mrb[0].mxu0
        %v3268 = vadd.f32 %v3011, %v3267
        %v3269 = vpop.f32.mrb[0].mxu0
        %v3270 = vadd.f32 %v3013, %v3269
        %3271 = vmatprep.mubr.bf16.mxu0 0
        %3272 = vmatmul.mubr.bf16.gmra.mrb[0].mxu0 %v2310
        %v3273 = vpop.f32.mrb[0].mxu0
        %v3274 = vadd.f32 %v3017, %v3273
        %v3275 = vpop.f32.mrb[0].mxu0
        %v3276 = vadd.f32 %v3019, %v3275
        %v3277 = vpop.f32.mrb[0].mxu0
        %v3278 = vpop.f32.mrb[0].mxu0
        %v3279 = vadd.f32 %v3022, %v3278
        %3280 = vdwg.mxu0
        %3281 = vmatprep.subr.bf16.mxu0 0
        %3282 = vmatpush1.bf16.msra.mxu0 %v2625
        %3283 = vmatprep.subr.bf16.mxu0 0
        %3284 = vmatpush1.bf16.msra.mxu0 %v2628
        %3285 = vmatprep.subr.bf16.mxu0 0
        %3286 = vmatpush1.bf16.msra.mxu0 %v2631
        %3287 = vmatprep.subr.bf16.mxu0 0
        %3288 = vmatpush1.bf16.msra.mxu0 %v2634
        %3289 = vmatprep.subr.bf16.mxu0 0
        %3290 = vmatpush1.bf16.msra.mxu0 %v2637
        %3291 = vmatprep.subr.bf16.mxu0 0
        %3292 = vmatpush1.bf16.msra.mxu0 %v2640
        %3293 = vmatprep.subr.bf16.mxu0 0
        %3294 = vmatpush1.bf16.msra.mxu0 %v2643
        %3295 = vmatprep.subr.bf16.mxu0 0
        %3296 = vmatpush1.bf16.msra.mxu0 %v2646
        %3297 = vmatprep.subr.bf16.mxu0 0
        %3298 = vmatpush1.bf16.msra.mxu0 %v2649
        %3299 = vmatprep.subr.bf16.mxu0 0
        %3300 = vmatpush1.bf16.msra.mxu0 %v2652
        %3301 = vmatprep.subr.bf16.mxu0 0
        %3302 = vmatpush1.bf16.msra.mxu0 %v2655
        %3303 = vmatprep.subr.bf16.mxu0 0
        %3304 = vmatpush1.bf16.msra.mxu0 %v2658
        %3305 = vmatprep.subr.bf16.mxu0 0
        %3306 = vmatpush1.bf16.msra.mxu0 %v2661
        %3307 = vmatprep.subr.bf16.mxu0 0
        %3308 = vmatpush1.bf16.msra.mxu0 %v2664
        %3309 = vmatprep.subr.bf16.mxu0 0
        %3310 = vmatpush1.bf16.msra.mxu0 %v2667
        %3311 = vmatprep.subr.bf16.mxu0 0
        %3312 = vmatpush1.bf16.msra.mxu0 %v2670
        %3313 = vmatprep.mubr.bf16.mxu0 %v2240
        %3314 = vmatmul.mubr.bf16.gmra.mrb[0].mxu0 %v2239
        %v3315 = vpop.f32.mrb[0].mxu0
        %v3316 = vadd.f32 0.0, %v3315
        %v3317 = vpop.f32.mrb[0].mxu0
        %v3318 = vpop.f32.mrb[0].mxu0
        %v3319 = vadd.f32 0.0, %v3318
        %v3320 = vpop.f32.mrb[0].mxu0
        %3321 = vmatprep.mubr.bf16.mxu0 %v2243
        %3322 = vmatmul.mubr.bf16.gmra.mrb[0].mxu0 %v2242
        %v3323 = vpop.f32.mrb[0].mxu0
        %v3324 = vadd.f32 0.0, %v3323
        %v3325 = vpop.f32.mrb[0].mxu0
        %v3326 = vpop.f32.mrb[0].mxu0
        %v3327 = vadd.f32 0.0, %v3326
        %v3328 = vpop.f32.mrb[0].mxu0
        %3329 = vmatprep.mubr.bf16.mxu0 %v2246
        %3330 = vmatmul.mubr.bf16.gmra.mrb[0].mxu0 %v2245
        %v3331 = vpop.f32.mrb[0].mxu0
        %v3332 = vadd.f32 0.0, %v3331
        %v3333 = vpop.f32.mrb[0].mxu0
        %v3334 = vpop.f32.mrb[0].mxu0
        %v3335 = vadd.f32 0.0, %v3334
        %v3336 = vpop.f32.mrb[0].mxu0
        %3337 = vmatprep.mubr.bf16.mxu0 %v2249
        %3338 = vmatmul.mubr.bf16.gmra.mrb[0].mxu0 %v2248
        %v3339 = vpop.f32.mrb[0].mxu0
        %v3340 = vadd.f32 0.0, %v3339
        %v3341 = vpop.f32.mrb[0].mxu0
        %v3342 = vpop.f32.mrb[0].mxu0
        %v3343 = vadd.f32 0.0, %v3342
        %v3344 = vpop.f32.mrb[0].mxu0
        %3345 = vmatprep.mubr.bf16.mxu0 %v2252
        %3346 = vmatmul.mubr.bf16.gmra.mrb[0].mxu0 %v2251
        %v3347 = vpop.f32.mrb[0].mxu0
        %v3348 = vadd.f32 0.0, %v3347
        %v3349 = vpop.f32.mrb[0].mxu0
        %v3350 = vpop.f32.mrb[0].mxu0
        %v3351 = vadd.f32 0.0, %v3350
        %v3352 = vpop.f32.mrb[0].mxu0
        %3353 = vmatprep.mubr.bf16.mxu0 %v2255
        %3354 = vmatmul.mubr.bf16.gmra.mrb[0].mxu0 %v2254
        %v3355 = vpop.f32.mrb[0].mxu0
        %v3356 = vadd.f32 0.0, %v3355
        %v3357 = vpop.f32.mrb[0].mxu0
        %v3358 = vpop.f32.mrb[0].mxu0
        %v3359 = vadd.f32 0.0, %v3358
        %v3360 = vpop.f32.mrb[0].mxu0
        %3361 = vmatprep.mubr.bf16.mxu0 %v2258
        %3362 = vmatmul.mubr.bf16.gmra.mrb[0].mxu0 %v2257
        %v3363 = vpop.f32.mrb[0].mxu0
        %v3364 = vadd.f32 0.0, %v3363
        %v3365 = vpop.f32.mrb[0].mxu0
        %v3366 = vpop.f32.mrb[0].mxu0
        %v3367 = vadd.f32 0.0, %v3366
        %v3368 = vpop.f32.mrb[0].mxu0
        %3369 = vmatprep.mubr.bf16.mxu0 %v2261
        %3370 = vmatmul.mubr.bf16.gmra.mrb[0].mxu0 %v2260
        %v3371 = vpop.f32.mrb[0].mxu0
        %v3372 = vadd.f32 0.0, %v3371
        %v3373 = vpop.f32.mrb[0].mxu0
        %v3374 = vpop.f32.mrb[0].mxu0
        %v3375 = vadd.f32 0.0, %v3374
        %v3376 = vpop.f32.mrb[0].mxu0
        %3377 = vmatprep.mubr.bf16.mxu0 %v2264
        %3378 = vmatmul.mubr.bf16.gmra.mrb[0].mxu0 %v2263
        %v3379 = vpop.f32.mrb[0].mxu0
        %v3380 = vadd.f32 0.0, %v3379
        %v3381 = vpop.f32.mrb[0].mxu0
        %v3382 = vpop.f32.mrb[0].mxu0
        %v3383 = vadd.f32 0.0, %v3382
        %v3384 = vpop.f32.mrb[0].mxu0
        %3385 = vmatprep.mubr.bf16.mxu0 %v2267
        %3386 = vmatmul.mubr.bf16.gmra.mrb[0].mxu0 %v2266
        %v3387 = vpop.f32.mrb[0].mxu0
        %v3388 = vadd.f32 0.0, %v3387
        %v3389 = vpop.f32.mrb[0].mxu0
        %v3390 = vpop.f32.mrb[0].mxu0
        %v3391 = vadd.f32 0.0, %v3390
        %v3392 = vpop.f32.mrb[0].mxu0
        %3393 = vmatprep.mubr.bf16.mxu0 %v2270
        %3394 = vmatmul.mubr.bf16.gmra.mrb[0].mxu0 %v2269
        %v3395 = vpop.f32.mrb[0].mxu0
        %v3396 = vadd.f32 0.0, %v3395
        %v3397 = vpop.f32.mrb[0].mxu0
        %v3398 = vpop.f32.mrb[0].mxu0
        %v3399 = vadd.f32 0.0, %v3398
        %v3400 = vpop.f32.mrb[0].mxu0
        %3401 = vmatprep.mubr.bf16.mxu0 %v2273
        %3402 = vmatmul.mubr.bf16.gmra.mrb[0].mxu0 %v2272
        %v3403 = vpop.f32.mrb[0].mxu0
        %v3404 = vadd.f32 0.0, %v3403
        %v3405 = vpop.f32.mrb[0].mxu0
        %v3406 = vpop.f32.mrb[0].mxu0
        %v3407 = vadd.f32 0.0, %v3406
        %v3408 = vpop.f32.mrb[0].mxu0
        %3409 = vmatprep.mubr.bf16.mxu0 %v2276
        %3410 = vmatmul.mubr.bf16.gmra.mrb[0].mxu0 %v2275
        %v3411 = vpop.f32.mrb[0].mxu0
        %v3412 = vadd.f32 0.0, %v3411
        %v3413 = vpop.f32.mrb[0].mxu0
        %v3414 = vpop.f32.mrb[0].mxu0
        %v3415 = vadd.f32 0.0, %v3414
        %v3416 = vpop.f32.mrb[0].mxu0
        %3417 = vmatprep.mubr.bf16.mxu0 %v2279
        %3418 = vmatmul.mubr.bf16.gmra.mrb[0].mxu0 %v2278
        %v3419 = vpop.f32.mrb[0].mxu0
        %v3420 = vadd.f32 0.0, %v3419
        %v3421 = vpop.f32.mrb[0].mxu0
        %v3422 = vpop.f32.mrb[0].mxu0
        %v3423 = vadd.f32 0.0, %v3422
        %v3424 = vpop.f32.mrb[0].mxu0
        %3425 = vmatprep.mubr.bf16.mxu0 %v2282
        %3426 = vmatmul.mubr.bf16.gmra.mrb[0].mxu0 %v2281
        %v3427 = vpop.f32.mrb[0].mxu0
        %v3428 = vadd.f32 0.0, %v3427
        %v3429 = vpop.f32.mrb[0].mxu0
        %v3430 = vpop.f32.mrb[0].mxu0
        %v3431 = vadd.f32 0.0, %v3430
        %v3432 = vpop.f32.mrb[0].mxu0
        %3433 = vmatprep.mubr.bf16.mxu0 %v2285
        %3434 = vmatmul.mubr.bf16.gmra.mrb[0].mxu0 %v2284
        %v3435 = vpop.f32.mrb[0].mxu0
        %v3436 = vadd.f32 0.0, %v3435
        %v3437 = vpop.f32.mrb[0].mxu0
        %v3438 = vpop.f32.mrb[0].mxu0
        %v3439 = vadd.f32 0.0, %v3438
        %v3440 = vpop.f32.mrb[0].mxu0
        %3441 = vmatprep.mubr.bf16.mxu0 %v2288
        %3442 = vmatmul.mubr.bf16.gmra.mrb[0].mxu0 %v2287
        %v3443 = vpop.f32.mrb[0].mxu0
        %v3444 = vadd.f32 0.0, %v3443
        %v3445 = vpop.f32.mrb[0].mxu0
        %v3446 = vpop.f32.mrb[0].mxu0
        %v3447 = vadd.f32 0.0, %v3446
        %v3448 = vpop.f32.mrb[0].mxu0
        %3449 = vmatprep.mubr.bf16.mxu0 %v2291
        %3450 = vmatmul.mubr.bf16.gmra.mrb[0].mxu0 %v2290
        %v3451 = vpop.f32.mrb[0].mxu0
        %v3452 = vadd.f32 0.0, %v3451
        %v3453 = vpop.f32.mrb[0].mxu0
        %v3454 = vpop.f32.mrb[0].mxu0
        %v3455 = vadd.f32 0.0, %v3454
        %v3456 = vpop.f32.mrb[0].mxu0
        %3457 = vmatprep.mubr.bf16.mxu0 %v2294
        %3458 = vmatmul.mubr.bf16.gmra.mrb[0].mxu0 %v2293
        %v3459 = vpop.f32.mrb[0].mxu0
        %v3460 = vadd.f32 0.0, %v3459
        %v3461 = vpop.f32.mrb[0].mxu0
        %v3462 = vpop.f32.mrb[0].mxu0
        %v3463 = vadd.f32 0.0, %v3462
        %v3464 = vpop.f32.mrb[0].mxu0
        %3465 = vmatprep.mubr.bf16.mxu0 %v2297
        %3466 = vmatmul.mubr.bf16.gmra.mrb[0].mxu0 %v2296
        %v3467 = vpop.f32.mrb[0].mxu0
        %v3468 = vadd.f32 0.0, %v3467
        %v3469 = vpop.f32.mrb[0].mxu0
        %v3470 = vpop.f32.mrb[0].mxu0
        %v3471 = vadd.f32 0.0, %v3470
        %v3472 = vpop.f32.mrb[0].mxu0
        %3473 = vmatprep.mubr.bf16.mxu0 %v2300
        %3474 = vmatmul.mubr.bf16.gmra.mrb[0].mxu0 %v2299
        %v3475 = vpop.f32.mrb[0].mxu0
        %v3476 = vadd.f32 0.0, %v3475
        %v3477 = vpop.f32.mrb[0].mxu0
        %v3478 = vpop.f32.mrb[0].mxu0
        %v3479 = vadd.f32 0.0, %v3478
        %v3480 = vpop.f32.mrb[0].mxu0
        %3481 = vmatprep.mubr.bf16.mxu0 %v2303
        %3482 = vmatmul.mubr.bf16.gmra.mrb[0].mxu0 %v2302
        %v3483 = vpop.f32.mrb[0].mxu0
        %v3484 = vadd.f32 0.0, %v3483
        %v3485 = vpop.f32.mrb[0].mxu0
        %v3486 = vpop.f32.mrb[0].mxu0
        %v3487 = vadd.f32 0.0, %v3486
        %v3488 = vpop.f32.mrb[0].mxu0
        %3489 = vmatprep.mubr.bf16.mxu0 %v2306
        %3490 = vmatmul.mubr.bf16.gmra.mrb[0].mxu0 %v2305
        %v3491 = vpop.f32.mrb[0].mxu0
        %v3492 = vadd.f32 0.0, %v3491
        %v3493 = vpop.f32.mrb[0].mxu0
        %v3494 = vpop.f32.mrb[0].mxu0
        %v3495 = vadd.f32 0.0, %v3494
        %v3496 = vpop.f32.mrb[0].mxu0
        %3497 = vmatprep.mubr.bf16.mxu0 %v2309
        %3498 = vmatmul.mubr.bf16.gmra.mrb[0].mxu0 %v2308
        %v3499 = vpop.f32.mrb[0].mxu0
        %v3500 = vadd.f32 0.0, %v3499
        %v3501 = vpop.f32.mrb[0].mxu0
        %v3502 = vpop.f32.mrb[0].mxu0
        %v3503 = vadd.f32 0.0, %v3502
        %v3504 = vpop.f32.mrb[0].mxu0
        %3505 = vdwg.mxu0
        %3506 = vmatprep.subr.bf16.mxu0 0
        %3507 = vmatpush1.bf16.msra.mxu0 %v2673
        %3508 = vmatprep.subr.bf16.mxu0 0
        %3509 = vmatpush1.bf16.msra.mxu0 %v2676
        %3510 = vmatprep.subr.bf16.mxu0 0
        %3511 = vmatpush1.bf16.msra.mxu0 %v2679
        %3512 = vmatprep.subr.bf16.mxu0 0
        %3513 = vmatpush1.bf16.msra.mxu0 %v2682
        %3514 = vmatprep.subr.bf16.mxu0 0
        %3515 = vmatpush1.bf16.msra.mxu0 %v2685
        %3516 = vmatprep.subr.bf16.mxu0 0
        %3517 = vmatpush1.bf16.msra.mxu0 %v2688
        %3518 = vmatprep.subr.bf16.mxu0 0
        %3519 = vmatpush1.bf16.msra.mxu0 %v2691
        %3520 = vmatprep.subr.bf16.mxu0 0
        %3521 = vmatpush1.bf16.msra.mxu0 %v2694
        %3522 = vmatprep.subr.bf16.mxu0 0
        %3523 = vmatpush1.bf16.msra.mxu0 0
        %3524 = vmatprep.subr.bf16.mxu0 0
        %3525 = vmatpush1.bf16.msra.mxu0 0
        %3526 = vmatprep.subr.bf16.mxu0 0
        %3527 = vmatpush1.bf16.msra.mxu0 0
        %3528 = vmatprep.subr.bf16.mxu0 0
        %3529 = vmatpush1.bf16.msra.mxu0 0
        %3530 = vmatprep.subr.bf16.mxu0 0
        %3531 = vmatpush1.bf16.msra.mxu0 0
        %3532 = vmatprep.subr.bf16.mxu0 0
        %3533 = vmatpush1.bf16.msra.mxu0 0
        %3534 = vmatprep.subr.bf16.mxu0 0
        %3535 = vmatpush1.bf16.msra.mxu0 0
        %3536 = vmatprep.subr.bf16.mxu0 0
        %3537 = vmatpush1.bf16.msra.mxu0 0
        %3538 = vmatprep.mubr.bf16.mxu0 0
        %3539 = vmatmul.mubr.bf16.gmra.mrb[0].mxu0 %v2241
        %v3540 = vpop.f32.mrb[0].mxu0
        %v3541 = vadd.f32 %v3316, %v3540
        %v3542 = vpop.f32.mrb[0].mxu0
        %v3543 = vpop.f32.mrb[0].mxu0
        %v3544 = vadd.f32 %v3319, %v3543
        %v3545 = vpop.f32.mrb[0].mxu0
        %3546 = vmatprep.mubr.bf16.mxu0 0
        %3547 = vmatmul.mubr.bf16.gmra.mrb[0].mxu0 %v2244
        %v3548 = vpop.f32.mrb[0].mxu0
        %v3549 = vadd.f32 %v3324, %v3548
        %v3550 = vpop.f32.mrb[0].mxu0
        %v3551 = vpop.f32.mrb[0].mxu0
        %v3552 = vadd.f32 %v3327, %v3551
        %v3553 = vpop.f32.mrb[0].mxu0
        %3554 = vmatprep.mubr.bf16.mxu0 0
        %3555 = vmatmul.mubr.bf16.gmra.mrb[0].mxu0 %v2247
        %v3556 = vpop.f32.mrb[0].mxu0
        %v3557 = vadd.f32 %v3332, %v3556
        %v3558 = vpop.f32.mrb[0].mxu0
        %v3559 = vpop.f32.mrb[0].mxu0
        %v3560 = vadd.f32 %v3335, %v3559
        %v3561 = vpop.f32.mrb[0].mxu0
        %3562 = vmatprep.mubr.bf16.mxu0 0
        %3563 = vmatmul.mubr.bf16.gmra.mrb[0].mxu0 %v2250
        %v3564 = vpop.f32.mrb[0].mxu0
        %v3565 = vadd.f32 %v3340, %v3564
        %v3566 = vpop.f32.mrb[0].mxu0
        %v3567 = vpop.f32.mrb[0].mxu0
        %v3568 = vadd.f32 %v3343, %v3567
        %v3569 = vpop.f32.mrb[0].mxu0
        %3570 = vmatprep.mubr.bf16.mxu0 0
        %3571 = vmatmul.mubr.bf16.gmra.mrb[0].mxu0 %v2253
        %v3572 = vpop.f32.mrb[0].mxu0
        %v3573 = vadd.f32 %v3348, %v3572
        %v3574 = vpop.f32.mrb[0].mxu0
        %v3575 = vpop.f32.mrb[0].mxu0
        %v3576 = vadd.f32 %v3351, %v3575
        %v3577 = vpop.f32.mrb[0].mxu0
        %3578 = vmatprep.mubr.bf16.mxu0 0
        %3579 = vmatmul.mubr.bf16.gmra.mrb[0].mxu0 %v2256
        %v3580 = vpop.f32.mrb[0].mxu0
        %v3581 = vadd.f32 %v3356, %v3580
        %v3582 = vpop.f32.mrb[0].mxu0
        %v3583 = vpop.f32.mrb[0].mxu0
        %v3584 = vadd.f32 %v3359, %v3583
        %v3585 = vpop.f32.mrb[0].mxu0
        %3586 = vmatprep.mubr.bf16.mxu0 0
        %3587 = vmatmul.mubr.bf16.gmra.mrb[0].mxu0 %v2259
        %v3588 = vpop.f32.mrb[0].mxu0
        %v3589 = vadd.f32 %v3364, %v3588
        %v3590 = vpop.f32.mrb[0].mxu0
        %v3591 = vpop.f32.mrb[0].mxu0
        %v3592 = vadd.f32 %v3367, %v3591
        %v3593 = vpop.f32.mrb[0].mxu0
        %3594 = vmatprep.mubr.bf16.mxu0 0
        %3595 = vmatmul.mubr.bf16.gmra.mrb[0].mxu0 %v2262
        %v3596 = vpop.f32.mrb[0].mxu0
        %v3597 = vadd.f32 %v3372, %v3596
        %v3598 = vpop.f32.mrb[0].mxu0
        %v3599 = vpop.f32.mrb[0].mxu0
        %v3600 = vadd.f32 %v3375, %v3599
        %v3601 = vpop.f32.mrb[0].mxu0
        %3602 = vmatprep.mubr.bf16.mxu0 0
        %3603 = vmatmul.mubr.bf16.gmra.mrb[0].mxu0 %v2265
        %v3604 = vpop.f32.mrb[0].mxu0
        %v3605 = vadd.f32 %v3380, %v3604
        %v3606 = vpop.f32.mrb[0].mxu0
        %v3607 = vpop.f32.mrb[0].mxu0
        %v3608 = vadd.f32 %v3383, %v3607
        %v3609 = vpop.f32.mrb[0].mxu0
        %3610 = vmatprep.mubr.bf16.mxu0 0
        %3611 = vmatmul.mubr.bf16.gmra.mrb[0].mxu0 %v2268
        %v3612 = vpop.f32.mrb[0].mxu0
        %v3613 = vadd.f32 %v3388, %v3612
        %v3614 = vpop.f32.mrb[0].mxu0
        %v3615 = vpop.f32.mrb[0].mxu0
        %v3616 = vadd.f32 %v3391, %v3615
        %v3617 = vpop.f32.mrb[0].mxu0
        %3618 = vmatprep.mubr.bf16.mxu0 0
        %3619 = vmatmul.mubr.bf16.gmra.mrb[0].mxu0 %v2271
        %v3620 = vpop.f32.mrb[0].mxu0
        %v3621 = vadd.f32 %v3396, %v3620
        %v3622 = vpop.f32.mrb[0].mxu0
        %v3623 = vpop.f32.mrb[0].mxu0
        %v3624 = vadd.f32 %v3399, %v3623
        %v3625 = vpop.f32.mrb[0].mxu0
        %3626 = vmatprep.mubr.bf16.mxu0 0
        %3627 = vmatmul.mubr.bf16.gmra.mrb[0].mxu0 %v2274
        %v3628 = vpop.f32.mrb[0].mxu0
        %v3629 = vadd.f32 %v3404, %v3628
        %v3630 = vpop.f32.mrb[0].mxu0
        %v3631 = vpop.f32.mrb[0].mxu0
        %v3632 = vadd.f32 %v3407, %v3631
        %v3633 = vpop.f32.mrb[0].mxu0
        %3634 = vmatprep.mubr.bf16.mxu0 0
        %3635 = vmatmul.mubr.bf16.gmra.mrb[0].mxu0 %v2277
        %v3636 = vpop.f32.mrb[0].mxu0
        %v3637 = vadd.f32 %v3412, %v3636
        %v3638 = vpop.f32.mrb[0].mxu0
        %v3639 = vpop.f32.mrb[0].mxu0
        %v3640 = vadd.f32 %v3415, %v3639
        %v3641 = vpop.f32.mrb[0].mxu0
        %3642 = vmatprep.mubr.bf16.mxu0 0
        %3643 = vmatmul.mubr.bf16.gmra.mrb[0].mxu0 %v2280
        %v3644 = vpop.f32.mrb[0].mxu0
        %v3645 = vadd.f32 %v3420, %v3644
        %v3646 = vpop.f32.mrb[0].mxu0
        %v3647 = vpop.f32.mrb[0].mxu0
        %v3648 = vadd.f32 %v3423, %v3647
        %v3649 = vpop.f32.mrb[0].mxu0
        %3650 = vmatprep.mubr.bf16.mxu0 0
        %3651 = vmatmul.mubr.bf16.gmra.mrb[0].mxu0 %v2283
        %v3652 = vpop.f32.mrb[0].mxu0
        %v3653 = vadd.f32 %v3428, %v3652
        %v3654 = vpop.f32.mrb[0].mxu0
        %v3655 = vpop.f32.mrb[0].mxu0
        %v3656 = vadd.f32 %v3431, %v3655
        %v3657 = vpop.f32.mrb[0].mxu0
        %3658 = vmatprep.mubr.bf16.mxu0 0
        %3659 = vmatmul.mubr.bf16.gmra.mrb[0].mxu0 %v2286
        %v3660 = vpop.f32.mrb[0].mxu0
        %v3661 = vadd.f32 %v3436, %v3660
        %v3662 = vpop.f32.mrb[0].mxu0
        %v3663 = vpop.f32.mrb[0].mxu0
        %v3664 = vadd.f32 %v3439, %v3663
        %v3665 = vpop.f32.mrb[0].mxu0
        %3666 = vmatprep.mubr.bf16.mxu0 0
        %3667 = vmatmul.mubr.bf16.gmra.mrb[0].mxu0 %v2289
        %v3668 = vpop.f32.mrb[0].mxu0
        %v3669 = vadd.f32 %v3444, %v3668
        %v3670 = vpop.f32.mrb[0].mxu0
        %v3671 = vpop.f32.mrb[0].mxu0
        %v3672 = vadd.f32 %v3447, %v3671
        %v3673 = vpop.f32.mrb[0].mxu0
        %3674 = vmatprep.mubr.bf16.mxu0 0
        %3675 = vmatmul.mubr.bf16.gmra.mrb[0].mxu0 %v2292
        %v3676 = vpop.f32.mrb[0].mxu0
        %v3677 = vadd.f32 %v3452, %v3676
        %v3678 = vpop.f32.mrb[0].mxu0
        %v3679 = vpop.f32.mrb[0].mxu0
        %v3680 = vadd.f32 %v3455, %v3679
        %v3681 = vpop.f32.mrb[0].mxu0
        %3682 = vmatprep.mubr.bf16.mxu0 0
        %3683 = vmatmul.mubr.bf16.gmra.mrb[0].mxu0 %v2295
        %v3684 = vpop.f32.mrb[0].mxu0
        %v3685 = vadd.f32 %v3460, %v3684
        %v3686 = vpop.f32.mrb[0].mxu0
        %v3687 = vpop.f32.mrb[0].mxu0
        %v3688 = vadd.f32 %v3463, %v3687
        %v3689 = vpop.f32.mrb[0].mxu0
        %3690 = vmatprep.mubr.bf16.mxu0 0
        %3691 = vmatmul.mubr.bf16.gmra.mrb[0].mxu0 %v2298
        %v3692 = vpop.f32.mrb[0].mxu0
        %v3693 = vadd.f32 %v3468, %v3692
        %v3694 = vpop.f32.mrb[0].mxu0
        %v3695 = vpop.f32.mrb[0].mxu0
        %v3696 = vadd.f32 %v3471, %v3695
        %v3697 = vpop.f32.mrb[0].mxu0
        %3698 = vmatprep.mubr.bf16.mxu0 0
        %3699 = vmatmul.mubr.bf16.gmra.mrb[0].mxu0 %v2301
        %v3700 = vpop.f32.mrb[0].mxu0
        %v3701 = vadd.f32 %v3476, %v3700
        %v3702 = vpop.f32.mrb[0].mxu0
        %v3703 = vpop.f32.mrb[0].mxu0
        %v3704 = vadd.f32 %v3479, %v3703
        %v3705 = vpop.f32.mrb[0].mxu0
        %3706 = vmatprep.mubr.bf16.mxu0 0
        %3707 = vmatmul.mubr.bf16.gmra.mrb[0].mxu0 %v2304
        %v3708 = vpop.f32.mrb[0].mxu0
        %v3709 = vadd.f32 %v3484, %v3708
        %v3710 = vpop.f32.mrb[0].mxu0
        %v3711 = vpop.f32.mrb[0].mxu0
        %v3712 = vadd.f32 %v3487, %v3711
        %v3713 = vpop.f32.mrb[0].mxu0
        %3714 = vmatprep.mubr.bf16.mxu0 0
        %3715 = vmatmul.mubr.bf16.gmra.mrb[0].mxu0 %v2307
        %v3716 = vpop.f32.mrb[0].mxu0
        %v3717 = vadd.f32 %v3492, %v3716
        %v3718 = vpop.f32.mrb[0].mxu0
        %v3719 = vpop.f32.mrb[0].mxu0
        %v3720 = vadd.f32 %v3495, %v3719
        %v3721 = vpop.f32.mrb[0].mxu0
        %3722 = vmatprep.mubr.bf16.mxu0 0
        %3723 = vmatmul.mubr.bf16.gmra.mrb[0].mxu0 %v2310
        %v3724 = vpop.f32.mrb[0].mxu0
        %v3725 = vadd.f32 %v3500, %v3724
        %v3726 = vpop.f32.mrb[0].mxu0
        %v3727 = vpop.f32.mrb[0].mxu0
        %v3728 = vadd.f32 %v3503, %v3727
        %v3729 = vpop.f32.mrb[0].mxu0
        %3730 = vdwg.mxu0
        %vm3779 = vcmask 1046528
        %v3780 = vrot.slane %v3061, 1
        %v3781 = vrot.slane %v3065, 1
        %v3782 = vsel %vm3779, %v3780, %v3781
        %v3783 = vrot.slane %v3070, 1
        %v3784 = vsel %vm3779, %v3781, %v3783
        %v3785 = vrot.slane %v3074, 1
        %v3786 = vrot.slane %v3080, 1
        %v3787 = vsel %vm3779, %v3785, %v3786
        %v3788 = vrot.slane %v3083, 1
        %v3789 = vsel %vm3779, %v3786, %v3788
        %v3790 = vrot.slane %v3089, 1
        %v3791 = vrot.slane %v3093, 1
        %v3792 = vsel %vm3779, %v3790, %v3791
        %v3793 = vrot.slane %v3098, 1
        %v3794 = vsel %vm3779, %v3791, %v3793
        %v3795 = vrot.slane %v3102, 1
        %v3796 = vrot.slane %v3108, 1
        %v3797 = vsel %vm3779, %v3795, %v3796
        %v3798 = vrot.slane %v3111, 1
        %v3799 = vsel %vm3779, %v3796, %v3798
        %v3800 = vrot.slane %v3117, 1
        %v3801 = vrot.slane %v3121, 1
        %v3802 = vsel %vm3779, %v3800, %v3801
        %v3803 = vrot.slane %v3126, 1
        %v3804 = vsel %vm3779, %v3801, %v3803
        %v3805 = vrot.slane %v3130, 1
        %v3806 = vrot.slane %v3136, 1
        %v3807 = vsel %vm3779, %v3805, %v3806
        %v3808 = vrot.slane %v3139, 1
        %v3809 = vsel %vm3779, %v3806, %v3808
        %v3810 = vrot.slane %v3145, 1
        %v3811 = vrot.slane %v3149, 1
        %v3812 = vsel %vm3779, %v3810, %v3811
        %v3813 = vrot.slane %v3154, 1
        %v3814 = vsel %vm3779, %v3811, %v3813
        %v3815 = vrot.slane %v3158, 1
        %v3816 = vrot.slane %v3164, 1
        %v3817 = vsel %vm3779, %v3815, %v3816
        %v3818 = vrot.slane %v3167, 1
        %v3819 = vsel %vm3779, %v3816, %v3818
        %v3820 = vrot.slane %v3173, 1
        %v3821 = vrot.slane %v3177, 1
        %v3822 = vsel %vm3779, %v3820, %v3821
        %v3823 = vrot.slane %v3182, 1
        %v3824 = vsel %vm3779, %v3821, %v3823
        %v3825 = vrot.slane %v3186, 1
        %v3826 = vrot.slane %v3192, 1
        %v3827 = vsel %vm3779, %v3825, %v3826
        %v3828 = vrot.slane %v3195, 1
        %v3829 = vsel %vm3779, %v3826, %v3828
        %v3830 = vrot.slane %v3201, 1
        %v3831 = vrot.slane %v3205, 1
        %v3832 = vsel %vm3779, %v3830, %v3831
        %v3833 = vrot.slane %v3210, 1
        %v3834 = vsel %vm3779, %v3831, %v3833
        %v3835 = vrot.slane %v3214, 1
        %v3836 = vrot.slane %v3220, 1
        %v3837 = vsel %vm3779, %v3835, %v3836
        %v3838 = vrot.slane %v3223, 1
        %v3839 = vsel %vm3779, %v3836, %v3838
        %v3840 = vrot.slane %v3229, 1
        %v3841 = vrot.slane %v3233, 1
        %v3842 = vsel %vm3779, %v3840, %v3841
        %v3843 = vrot.slane %v3238, 1
        %v3844 = vsel %vm3779, %v3841, %v3843
        %v3845 = vrot.slane %v3242, 1
        %v3846 = vrot.slane %v3248, 1
        %v3847 = vsel %vm3779, %v3845, %v3846
        %v3848 = vrot.slane %v3251, 1
        %v3849 = vsel %vm3779, %v3846, %v3848
        %v3850 = vrot.slane %v3257, 1
        %v3851 = vrot.slane %v3261, 1
        %v3852 = vsel %vm3779, %v3850, %v3851
        %v3853 = vrot.slane %v3266, 1
        %v3854 = vsel %vm3779, %v3851, %v3853
        %v3855 = vrot.slane %v3270, 1
        %v3856 = vrot.slane %v3276, 1
        %v3857 = vsel %vm3779, %v3855, %v3856
        %v3858 = vrot.slane %v3279, 1
        %v3859 = vsel %vm3779, %v3856, %v3858
        %v3892 = vadd.f32 %v3059, %v3782
        %v3893 = vadd.f32 %v3063, %v3784
        %v3894 = vadd.f32 %v3072, %v3787
        %v3895 = vadd.f32 %v3078, %v3789
        %v3896 = vadd.f32 %v3087, %v3792
        %v3897 = vadd.f32 %v3091, %v3794
        %v3898 = vadd.f32 %v3100, %v3797
        %v3899 = vadd.f32 %v3106, %v3799
        %v3900 = vadd.f32 %v3115, %v3802
        %v3901 = vadd.f32 %v3119, %v3804
        %v3902 = vadd.f32 %v3128, %v3807
        %v3903 = vadd.f32 %v3134, %v3809
        %v3904 = vadd.f32 %v3143, %v3812
        %v3905 = vadd.f32 %v3147, %v3814
        %v3906 = vadd.f32 %v3156, %v3817
        %v3907 = vadd.f32 %v3162, %v3819
        %v3908 = vadd.f32 %v3171, %v3822
        %v3909 = vadd.f32 %v3175, %v3824
        %v3910 = vadd.f32 %v3184, %v3827
        %v3911 = vadd.f32 %v3190, %v3829
        %v3912 = vadd.f32 %v3199, %v3832
        %v3913 = vadd.f32 %v3203, %v3834
        %v3914 = vadd.f32 %v3212, %v3837
        %v3915 = vadd.f32 %v3218, %v3839
        %v3916 = vadd.f32 %v3227, %v3842
        %v3917 = vadd.f32 %v3231, %v3844
        %v3918 = vadd.f32 %v3240, %v3847
        %v3919 = vadd.f32 %v3246, %v3849
        %v3920 = vadd.f32 %v3255, %v3852
        %v3921 = vadd.f32 %v3259, %v3854
        %v3922 = vadd.f32 %v3268, %v3857
        %v3923 = vadd.f32 %v3274, %v3859
        %vm3972 = vcmask 1045504
        %v3973 = vrot.slane %v3541, 2
        %v3974 = vrot.slane %v3544, 2
        %v3975 = vsel %vm3972, %v3973, %v3974
        %v3976 = vrot.slane %v3549, 2
        %v3977 = vsel %vm3972, %v3974, %v3976
        %v3978 = vrot.slane %v3552, 2
        %v3979 = vrot.slane %v3557, 2
        %v3980 = vsel %vm3972, %v3978, %v3979
        %v3981 = vrot.slane %v3560, 2
        %v3982 = vsel %vm3972, %v3979, %v3981
        %v3983 = vrot.slane %v3565, 2
        %v3984 = vrot.slane %v3568, 2
        %v3985 = vsel %vm3972, %v3983, %v3984
        %v3986 = vrot.slane %v3573, 2
        %v3987 = vsel %vm3972, %v3984, %v3986
        %v3988 = vrot.slane %v3576, 2
        %v3989 = vrot.slane %v3581, 2
        %v3990 = vsel %vm3972, %v3988, %v3989
        %v3991 = vrot.slane %v3584, 2
        %v3992 = vsel %vm3972, %v3989, %v3991
        %v3993 = vrot.slane %v3589, 2
        %v3994 = vrot.slane %v3592, 2
        %v3995 = vsel %vm3972, %v3993, %v3994
        %v3996 = vrot.slane %v3597, 2
        %v3997 = vsel %vm3972, %v3994, %v3996
        %v3998 = vrot.slane %v3600, 2
        %v3999 = vrot.slane %v3605, 2
        %v4000 = vsel %vm3972, %v3998, %v3999
        %v4001 = vrot.slane %v3608, 2
        %v4002 = vsel %vm3972, %v3999, %v4001
        %v4003 = vrot.slane %v3613, 2
        %v4004 = vrot.slane %v3616, 2
        %v4005 = vsel %vm3972, %v4003, %v4004
        %v4006 = vrot.slane %v3621, 2
        %v4007 = vsel %vm3972, %v4004, %v4006
        %v4008 = vrot.slane %v3624, 2
        %v4009 = vrot.slane %v3629, 2
        %v4010 = vsel %vm3972, %v4008, %v4009
        %v4011 = vrot.slane %v3632, 2
        %v4012 = vsel %vm3972, %v4009, %v4011
        %v4013 = vrot.slane %v3637, 2
        %v4014 = vrot.slane %v3640, 2
        %v4015 = vsel %vm3972, %v4013, %v4014
        %v4016 = vrot.slane %v3645, 2
        %v4017 = vsel %vm3972, %v4014, %v4016
        %v4018 = vrot.slane %v3648, 2
        %v4019 = vrot.slane %v3653, 2
        %v4020 = vsel %vm3972, %v4018, %v4019
        %v4021 = vrot.slane %v3656, 2
        %v4022 = vsel %vm3972, %v4019, %v4021
        %v4023 = vrot.slane %v3661, 2
        %v4024 = vrot.slane %v3664, 2
        %v4025 = vsel %vm3972, %v4023, %v4024
        %v4026 = vrot.slane %v3669, 2
        %v4027 = vsel %vm3972, %v4024, %v4026
        %v4028 = vrot.slane %v3672, 2
        %v4029 = vrot.slane %v3677, 2
        %v4030 = vsel %vm3972, %v4028, %v4029
        %v4031 = vrot.slane %v3680, 2
        %v4032 = vsel %vm3972, %v4029, %v4031
        %v4033 = vrot.slane %v3685, 2
        %v4034 = vrot.slane %v3688, 2
        %v4035 = vsel %vm3972, %v4033, %v4034
        %v4036 = vrot.slane %v3693, 2
        %v4037 = vsel %vm3972, %v4034, %v4036
        %v4038 = vrot.slane %v3696, 2
        %v4039 = vrot.slane %v3701, 2
        %v4040 = vsel %vm3972, %v4038, %v4039
        %v4041 = vrot.slane %v3704, 2
        %v4042 = vsel %vm3972, %v4039, %v4041
        %v4043 = vrot.slane %v3709, 2
        %v4044 = vrot.slane %v3712, 2
        %v4045 = vsel %vm3972, %v4043, %v4044
        %v4046 = vrot.slane %v3717, 2
        %v4047 = vsel %vm3972, %v4044, %v4046
        %v4048 = vrot.slane %v3720, 2
        %v4049 = vrot.slane %v3725, 2
        %v4050 = vsel %vm3972, %v4048, %v4049
        %v4051 = vrot.slane %v3728, 2
        %v4052 = vsel %vm3972, %v4049, %v4051
        %v4085 = vadd.f32 %v3892, %v3975
        %v4086 = vadd.f32 %v3893, %v3977
        %v4087 = vadd.f32 %v3894, %v3980
        %v4088 = vadd.f32 %v3895, %v3982
        %v4089 = vadd.f32 %v3896, %v3985
        %v4090 = vadd.f32 %v3897, %v3987
        %v4091 = vadd.f32 %v3898, %v3990
        %v4092 = vadd.f32 %v3899, %v3992
        %v4093 = vadd.f32 %v3900, %v3995
        %v4094 = vadd.f32 %v3901, %v3997
        %v4095 = vadd.f32 %v3902, %v4000
        %v4096 = vadd.f32 %v3903, %v4002
        %v4097 = vadd.f32 %v3904, %v4005
        %v4098 = vadd.f32 %v3905, %v4007
        %v4099 = vadd.f32 %v3906, %v4010
        %v4100 = vadd.f32 %v3907, %v4012
        %v4101 = vadd.f32 %v3908, %v4015
        %v4102 = vadd.f32 %v3909, %v4017
        %v4103 = vadd.f32 %v3910, %v4020
        %v4104 = vadd.f32 %v3911, %v4022
        %v4105 = vadd.f32 %v3912, %v4025
        %v4106 = vadd.f32 %v3913, %v4027
        %v4107 = vadd.f32 %v3914, %v4030
        %v4108 = vadd.f32 %v3915, %v4032
        %v4109 = vadd.f32 %v3916, %v4035
        %v4110 = vadd.f32 %v3917, %v4037
        %v4111 = vadd.f32 %v3918, %v4040
        %v4112 = vadd.f32 %v3919, %v4042
        %v4113 = vadd.f32 %v3920, %v4045
        %v4114 = vadd.f32 %v3921, %v4047
        %v4115 = vadd.f32 %v3922, %v4050
        %v4116 = vadd.f32 %v3923, %v4052
        %v4117 = vld [vmem:[%s5] sm:$0x1]
        %v4119 = vlaneseq
        %v4120 = vshrl.u32 %v4119, 7
        %v4121 = vsub.s32 0, %v4120
        %v4122 = vrot.slane %v4117, %v4121
        %v4124 = vmul.f32 %v4085, %v4122
        %v4125 = vmul.f32 %v4086, %v4122
        %v4126 = vmul.f32 %v4087, %v4122
        %v4127 = vmul.f32 %v4088, %v4122
        %v4128 = vmul.f32 %v4089, %v4122
        %v4129 = vmul.f32 %v4090, %v4122
        %v4130 = vmul.f32 %v4091, %v4122
        %v4131 = vmul.f32 %v4092, %v4122
        %v4132 = vmul.f32 %v4093, %v4122
        %v4133 = vmul.f32 %v4094, %v4122
        %v4134 = vmul.f32 %v4095, %v4122
        %v4135 = vmul.f32 %v4096, %v4122
        %v4136 = vmul.f32 %v4097, %v4122
        %v4137 = vmul.f32 %v4098, %v4122
        %v4138 = vmul.f32 %v4099, %v4122
        %v4139 = vmul.f32 %v4100, %v4122
        %v4140 = vmul.f32 %v4101, %v4122
        %v4141 = vmul.f32 %v4102, %v4122
        %v4142 = vmul.f32 %v4103, %v4122
        %v4143 = vmul.f32 %v4104, %v4122
        %v4144 = vmul.f32 %v4105, %v4122
        %v4145 = vmul.f32 %v4106, %v4122
        %v4146 = vmul.f32 %v4107, %v4122
        %v4147 = vmul.f32 %v4108, %v4122
        %v4148 = vmul.f32 %v4109, %v4122
        %v4149 = vmul.f32 %v4110, %v4122
        %v4150 = vmul.f32 %v4111, %v4122
        %v4151 = vmul.f32 %v4112, %v4122
        %v4152 = vmul.f32 %v4113, %v4122
        %v4153 = vmul.f32 %v4114, %v4122
        %v4154 = vmul.f32 %v4115, %v4122
        %v4155 = vmul.f32 %v4116, %v4122
        %v4156 = vld [vmem:[%s6] sm:$0x1]
        %v4158 = vlaneseq
        %v4159 = vshrl.u32 %v4158, 7
        %v4160 = vsub.s32 0, %v4159
        %v4161 = vrot.slane %v4156, %v4160
        %v4163 = vadd.f32 %v4124, %v4161
        %v4164 = vadd.f32 %v4125, %v4161
        %v4165 = vadd.f32 %v4126, %v4161
        %v4166 = vadd.f32 %v4127, %v4161
        %v4167 = vadd.f32 %v4128, %v4161
        %v4168 = vadd.f32 %v4129, %v4161
        %v4169 = vadd.f32 %v4130, %v4161
        %v4170 = vadd.f32 %v4131, %v4161
        %v4171 = vadd.f32 %v4132, %v4161
        %v4172 = vadd.f32 %v4133, %v4161
        %v4173 = vadd.f32 %v4134, %v4161
        %v4174 = vadd.f32 %v4135, %v4161
        %v4175 = vadd.f32 %v4136, %v4161
        %v4176 = vadd.f32 %v4137, %v4161
        %v4177 = vadd.f32 %v4138, %v4161
        %v4178 = vadd.f32 %v4139, %v4161
        %v4179 = vadd.f32 %v4140, %v4161
        %v4180 = vadd.f32 %v4141, %v4161
        %v4181 = vadd.f32 %v4142, %v4161
        %v4182 = vadd.f32 %v4143, %v4161
        %v4183 = vadd.f32 %v4144, %v4161
        %v4184 = vadd.f32 %v4145, %v4161
        %v4185 = vadd.f32 %v4146, %v4161
        %v4186 = vadd.f32 %v4147, %v4161
        %v4187 = vadd.f32 %v4148, %v4161
        %v4188 = vadd.f32 %v4149, %v4161
        %v4189 = vadd.f32 %v4150, %v4161
        %v4190 = vadd.f32 %v4151, %v4161
        %v4191 = vadd.f32 %v4152, %v4161
        %v4192 = vadd.f32 %v4153, %v4161
        %v4193 = vadd.f32 %v4154, %v4161
        %v4194 = vadd.f32 %v4155, %v4161
        %v4195 = vmax.f32 %v4163, 0.0
        %v4196 = vmax.f32 %v4164, 0.0
        %v4197 = vmax.f32 %v4165, 0.0
        %v4198 = vmax.f32 %v4166, 0.0
        %v4199 = vmax.f32 %v4167, 0.0
        %v4200 = vmax.f32 %v4168, 0.0
        %v4201 = vmax.f32 %v4169, 0.0
        %v4202 = vmax.f32 %v4170, 0.0
        %v4203 = vmax.f32 %v4171, 0.0
        %v4204 = vmax.f32 %v4172, 0.0
        %v4205 = vmax.f32 %v4173, 0.0
        %v4206 = vmax.f32 %v4174, 0.0
        %v4207 = vmax.f32 %v4175, 0.0
        %v4208 = vmax.f32 %v4176, 0.0
        %v4209 = vmax.f32 %v4177, 0.0
        %v4210 = vmax.f32 %v4178, 0.0
        %v4211 = vmax.f32 %v4179, 0.0
        %v4212 = vmax.f32 %v4180, 0.0
        %v4213 = vmax.f32 %v4181, 0.0
        %v4214 = vmax.f32 %v4182, 0.0
        %v4215 = vmax.f32 %v4183, 0.0
        %v4216 = vmax.f32 %v4184, 0.0
        %v4217 = vmax.f32 %v4185, 0.0
        %v4218 = vmax.f32 %v4186, 0.0
        %v4219 = vmax.f32 %v4187, 0.0
        %v4220 = vmax.f32 %v4188, 0.0
        %v4221 = vmax.f32 %v4189, 0.0
        %v4222 = vmax.f32 %v4190, 0.0
        %v4223 = vmax.f32 %v4191, 0.0
        %v4224 = vmax.f32 %v4192, 0.0
        %v4225 = vmax.f32 %v4193, 0.0
        %v4226 = vmax.f32 %v4194, 0.0
        %v4227 = vpack.c.bf16 %v4196, %v4195
        %v4228 = vpack.c.bf16 %v4198, %v4197
        %v4229 = vpack.c.bf16 %v4200, %v4199
        %v4230 = vpack.c.bf16 %v4202, %v4201
        %v4231 = vpack.c.bf16 %v4204, %v4203
        %v4232 = vpack.c.bf16 %v4206, %v4205
        %v4233 = vpack.c.bf16 %v4208, %v4207
        %v4234 = vpack.c.bf16 %v4210, %v4209
        %v4235 = vpack.c.bf16 %v4212, %v4211
        %v4236 = vpack.c.bf16 %v4214, %v4213
        %v4237 = vpack.c.bf16 %v4216, %v4215
        %v4238 = vpack.c.bf16 %v4218, %v4217
        %v4239 = vpack.c.bf16 %v4220, %v4219
        %v4240 = vpack.c.bf16 %v4222, %v4221
        %v4241 = vpack.c.bf16 %v4224, %v4223
        %v4242 = vpack.c.bf16 %v4226, %v4225
        %v4259 = vunpack.c.l.b16 %v4227
        %v4260 = vunpack.c.h.b16 %v4227
        %v4261 = vunpack.c.l.b16 %v4228
        %v4262 = vunpack.c.h.b16 %v4228
        %v4263 = vunpack.c.l.b16 %v4229
        %v4264 = vunpack.c.h.b16 %v4229
        %v4265 = vunpack.c.l.b16 %v4230
        %v4266 = vunpack.c.h.b16 %v4230
        %v4267 = vunpack.c.l.b16 %v4231
        %v4268 = vunpack.c.h.b16 %v4231
        %v4269 = vunpack.c.l.b16 %v4232
        %v4270 = vunpack.c.h.b16 %v4232
        %v4271 = vunpack.c.l.b16 %v4233
        %v4272 = vunpack.c.h.b16 %v4233
        %v4273 = vunpack.c.l.b16 %v4234
        %v4274 = vunpack.c.h.b16 %v4234
        %v4275 = vunpack.c.l.b16 %v4235
        %v4276 = vunpack.c.h.b16 %v4235
        %v4277 = vunpack.c.l.b16 %v4236
        %v4278 = vunpack.c.h.b16 %v4236
        %v4279 = vunpack.c.l.b16 %v4237
        %v4280 = vunpack.c.h.b16 %v4237
        %v4281 = vunpack.c.l.b16 %v4238
        %v4282 = vunpack.c.h.b16 %v4238
        %v4283 = vunpack.c.l.b16 %v4239
        %v4284 = vunpack.c.h.b16 %v4239
        %v4285 = vunpack.c.l.b16 %v4240
        %v4286 = vunpack.c.h.b16 %v4240
        %v4287 = vunpack.c.l.b16 %v4241
        %v4288 = vunpack.c.h.b16 %v4241
        %v4289 = vunpack.c.l.b16 %v4242
        %v4290 = vunpack.c.h.b16 %v4242
        %v4291 = vpack.c.b16 %v4259, %v4259
        %v4292 = vpack.c.b16 %v4260, %v4260
        %v4293 = vpack.c.b16 %v4261, %v4261
        %v4294 = vpack.c.b16 %v4262, %v4262
        %v4295 = vpack.c.b16 %v4263, %v4263
        %v4296 = vpack.c.b16 %v4264, %v4264
        %v4297 = vpack.c.b16 %v4265, %v4265
        %v4298 = vpack.c.b16 %v4266, %v4266
        %v4299 = vpack.c.b16 %v4267, %v4267
        %v4300 = vpack.c.b16 %v4268, %v4268
        %v4301 = vpack.c.b16 %v4269, %v4269
        %v4302 = vpack.c.b16 %v4270, %v4270
        %v4303 = vpack.c.b16 %v4271, %v4271
        %v4304 = vpack.c.b16 %v4272, %v4272
        %v4305 = vpack.c.b16 %v4273, %v4273
        %v4306 = vpack.c.b16 %v4274, %v4274
        %v4307 = vpack.c.b16 %v4275, %v4275
        %v4308 = vpack.c.b16 %v4276, %v4276
        %v4309 = vpack.c.b16 %v4277, %v4277
        %v4310 = vpack.c.b16 %v4278, %v4278
        %v4311 = vpack.c.b16 %v4279, %v4279
        %v4312 = vpack.c.b16 %v4280, %v4280
        %v4313 = vpack.c.b16 %v4281, %v4281
        %v4314 = vpack.c.b16 %v4282, %v4282
        %v4315 = vpack.c.b16 %v4283, %v4283
        %v4316 = vpack.c.b16 %v4284, %v4284
        %v4317 = vpack.c.b16 %v4285, %v4285
        %v4318 = vpack.c.b16 %v4286, %v4286
        %v4319 = vpack.c.b16 %v4287, %v4287
        %v4320 = vpack.c.b16 %v4288, %v4288
        %v4321 = vpack.c.b16 %v4289, %v4289
        %v4322 = vpack.c.b16 %v4290, %v4290
        %4355 = vst [vmem:[%s344] sm:$0xf] %v4291
        %4356 = vst [vmem:[%s344 + $0x4] sm:$0xf] %v4292
        %4357 = vst [vmem:[%s344 + $0x8] sm:$0xf] %v4293
        %4358 = vst [vmem:[%s344 + $0xc] sm:$0xf] %v4294
        %4359 = vst [vmem:[%s344 + $0x10] sm:$0xf] %v4295
        %4360 = vst [vmem:[%s344 + $0x14] sm:$0xf] %v4296
        %4361 = vst [vmem:[%s344 + $0x18] sm:$0xf] %v4297
        %4362 = vst [vmem:[%s344 + $0x1c] sm:$0xf] %v4298
        %4363 = vst [vmem:[%s344 + $0x20] sm:$0xf] %v4299
        %4364 = vst [vmem:[%s344 + $0x24] sm:$0xf] %v4300
        %4365 = vst [vmem:[%s344 + $0x28] sm:$0xf] %v4301
        %4366 = vst [vmem:[%s344 + $0x2c] sm:$0xf] %v4302
        %4367 = vst [vmem:[%s344 + $0x30] sm:$0xf] %v4303
        %4368 = vst [vmem:[%s344 + $0x34] sm:$0xf] %v4304
        %4369 = vst [vmem:[%s344 + $0x38] sm:$0xf] %v4305
        %4370 = vst [vmem:[%s344 + $0x3c] sm:$0xf] %v4306
        %4371 = vst [vmem:[%s344 + $0x40] sm:$0xf] %v4307
        %4372 = vst [vmem:[%s344 + $0x44] sm:$0xf] %v4308
        %4373 = vst [vmem:[%s344 + $0x48] sm:$0xf] %v4309
        %4374 = vst [vmem:[%s344 + $0x4c] sm:$0xf] %v4310
        %4375 = vst [vmem:[%s344 + $0x50] sm:$0xf] %v4311
        %4376 = vst [vmem:[%s344 + $0x54] sm:$0xf] %v4312
        %4377 = vst [vmem:[%s344 + $0x58] sm:$0xf] %v4313
        %4378 = vst [vmem:[%s344 + $0x5c] sm:$0xf] %v4314
        %4379 = vst [vmem:[%s344 + $0x60] sm:$0xf] %v4315
        %4380 = vst [vmem:[%s344 + $0x64] sm:$0xf] %v4316
        %4381 = vst [vmem:[%s344 + $0x68] sm:$0xf] %v4317
        %4382 = vst [vmem:[%s344 + $0x6c] sm:$0xf] %v4318
        %4383 = vst [vmem:[%s344 + $0x70] sm:$0xf] %v4319
        %4384 = vst [vmem:[%s344 + $0x74] sm:$0xf] %v4320
        %4385 = vst [vmem:[%s344 + $0x78] sm:$0xf] %v4321
        %4386 = vst [vmem:[%s344 + $0x7c] sm:$0xf] %v4322
        %s4387 = sand.u32 %s201, 1
        %s4388 = scalar_lea.sflag [#allocation5], %s4387
        %s4389 = sand.u32 %s201, 1
        %s4390 = smul.addr %s4389, 128
        %s4391 = scalar_lea.vmem [#allocation9], %s4390
        // Predicated region
        $region69: #{tpu_custom_call.1} parent=47 // pred_check
          %p4392 = pneg %p211
        $region70: #{tpu_custom_call.1} parent=47 // pred_check_branch
          %4394 = sbr.rel (%p4392) target = $region72
        $region71: #{tpu_custom_call.1} parent=47 // pred_region
          #allocation11 [shape = 'u32[6]{0}', space=smem, size = 0x18, scoped, tag = 'DMA stride descriptor']
          %s4395 = smul.u32 2, %s29
          %s4396 = smul.u32 8, %s30
          %s4398 = ssub.s32 2048, 2048
          %4399 = vsyncadd %s4388, %s4398
          %s4400 = smul.addr %s4396, 2
          %s4401 = smul.addr %s4395, 32
          %s4402 = sadd.s32 %s4400, %s4401
          %s4403 = smul.addr %s4402, 64
          %s4404 = scalar_lea.hbm %s7, %s4403
          %s4406 = sshll.u32 1, 14
          %s4407 = sxor.u32 4294967295, %s4406
          %s4410 = sshll.u32 7, 18
          %s4411 = sxor.u32 4294967295, %s4410
          %s4412 = sand.u32 0, %s4411
          %s4414 = sor.u32 %s4412, 0
          %s4416 = sshll.u32 3, 24
          %s4417 = sxor.u32 4294967295, %s4416
          %s4418 = sand.u32 %s4414, %s4417
          %s4420 = sor.u32 %s4418, 0
          %s4421 = sshll.u32 %s4391, 4
          %s4422 = int_to_ptr.vmem [resolvable:$true] %s4421
          %4428 = sst [smem:[#allocation11]] 1024
          %s4429 = scalar_lea.smem [#allocation11], 1
          %4430 = sst [smem:[%s4429]] 2048
          %s4431 = scalar_lea.smem [#allocation11], 2
          %4432 = sst [smem:[%s4431]] 16
          %s4433 = scalar_lea.smem [#allocation11], 3
          %4434 = sst [smem:[%s4433]] 64
          %s4435 = scalar_lea.smem [#allocation11], 4
          %4436 = sst [smem:[%s4435]] 64
          %s4437 = scalar_lea.smem [#allocation11], 5
          %4438 = sst [smem:[%s4437]] 4
          %4440 = dma.general %s4422, 2048, %s4404, %s4388, [#allocation10], [#allocation11], %s4420, 0
        $region72: #{tpu_custom_call.1} parent=47 // pred_fallthru
          _
      $region48: #{tpu_custom_call.1} parent=5 // pred_fallthru
        _
      %p4441 = scmp.le.s32.totalorder 2, %s20
      // Predicated region
      $region73: #{tpu_custom_call.1} parent=5 // pred_check
        %p4442 = pneg %p4441
      $region74: #{tpu_custom_call.1} parent=5 // pred_check_branch
        %4444 = sbr.rel (%p4442) target = $region76
      $region75: #{tpu_custom_call.1} parent=5 // pred_region
        %s4445 = ssub.s32 %s20, 2
        // Predicated region
        $region77: #{tpu_custom_call.1} parent=75 // pred_check
          %p4446 = pneg %p217
        $region78: #{tpu_custom_call.1} parent=75 // pred_check_branch
          %4448 = sbr.rel (%p4446) target = $region80
        $region79: #{tpu_custom_call.1} parent=75 // pred_region
          %s4449 = sand.u32 %s202, 1
          %s4450 = scalar_lea.sflag [#allocation5], %s4449
          %s4451 = sand.u32 %s202, 1
          %s4452 = smul.addr %s4451, 128
          %s4453 = scalar_lea.vmem [#allocation9], %s4452
          %4454 = dma.done %s4450, 2048
        $region80: #{tpu_custom_call.1} parent=75 // pred_fallthru
          _
      $region76: #{tpu_custom_call.1} parent=5 // pred_fallthru
        _
    $region6: #{tpu_custom_call.1} parent=1 // loop_footer
      %s24 = sadd.s32 1, %s20
    $region7: #{tpu_custom_call.1} parent=1 // loop_footer_branch
      %19 = sbr.rel target = $region3
    $region8: #{tpu_custom_call.1} parent=1 // loop_exit
      _
    %4455 = vsyncpa [#allocation4], 1
    %s4456 = scalar_lea.sflag [#allocation4], 1
    %4457 = vsyncpa %s4456, 1
    %4458 = vsyncpa [#allocation7], 1
    %4459 = vsyncpa [#allocation5], 1
    %s4460 = scalar_lea.sflag [#allocation5], 1
    %4461 = vsyncpa %s4460, 1

</llo_original>
